<compile_context>
chip_gen: v5e
topology: v5e:2x2
jax: 0.10.0
libtpu: 0.0.40
codegen_flags: <defaults>
</compile_context>

<pallas_src>
import functools
import math

import jax
import jax.numpy as jnp
from jax import lax
from jax.experimental import pallas as pl
from jax.experimental.pallas import tpu as pltpu

DIN_PAD = 128  # in-kernel zero-extension width for the input features


# ----------------------------- kernel -----------------------------------------

def _layer_norm(x, gamma, beta, eps=1e-6):
    mean = jnp.mean(x, axis=-1, keepdims=True)
    var = jnp.mean(jnp.square(x - mean), axis=-1, keepdims=True)
    return (x - mean) * lax.rsqrt(var + eps) * gamma + beta


def _fused_kernel(x_ref, pe_ref, win_ref,
                  wqkv_ref, bqkv_ref, wo_ref, bo_ref,
                  ln1w_ref, ln1b_ref, ln2w_ref, ln2b_ref,
                  w1_ref, b1_ref, w2_ref, b2_ref,
                  wout_ref, bout_ref,
                  o_ref, h_ref,
                  *, num_heads, b_blk, seq_len, din):
    """One transformer layer for B_blk samples; grid=(batch_block, layer)."""
    l = pl.program_id(1)
    D = pe_ref.shape[-1]
    S = seq_len
    BS = b_blk * S
    hd = D // num_heads

    # ---- layer 0: input projection + positional encoding (dropout = id) ----
    @pl.when(l == 0)
    def _():
        x = x_ref[...].reshape(BS, din)                       # (BS, din) f32
        pad = jnp.zeros((BS, DIN_PAD - din), jnp.float32)
        xp = jnp.concatenate([x, pad], axis=-1)               # zero-extend in VMEM
        h0 = jnp.dot(xp.astype(jnp.bfloat16), win_ref[...],
                     preferred_element_type=jnp.float32)      # (BS, D)
        # pe_ref already contains pe + input_projection.bias (host-folded)
        h0 = (h0.reshape(b_blk, S, D) + pe_ref[...]).reshape(BS, D)
        h_ref[...] = h0

    h = h_ref[...]                                            # (BS, D) f32

    # ---- multi-head self-attention (nn.MultiheadAttention semantics) -------
    qkv = jnp.dot(h.astype(jnp.bfloat16), wqkv_ref[0],
                  preferred_element_type=jnp.float32) + bqkv_ref[0]   # (BS, 3D)
    # q already scaled by 1/sqrt(hd) (folded into weights on host)
    q = qkv[:, 0 * D:1 * D].reshape(b_blk, S, D)
    k = qkv[:, 1 * D:2 * D].reshape(b_blk, S, D)
    v = qkv[:, 2 * D:3 * D].reshape(b_blk, S, D)

    dn_scores = (((2,), (2,)), ((0,), (0,)))   # 'bqd,bkd->bqk'
    dn_ctx = (((2,), (1,)), ((0,), (0,)))      # 'bqk,bkd->bqd'
    heads = []
    for hh in range(num_heads):
        sl = slice(hh * hd, (hh + 1) * hd)
        s = lax.dot_general(q[:, :, sl], k[:, :, sl], dn_scores,
                            preferred_element_type=jnp.float32)       # (b,S,S)
        s = s - jnp.max(s, axis=-1, keepdims=True)
        e = jnp.exp(s)
        p = e * pl.reciprocal(jnp.sum(e, axis=-1, keepdims=True),
                              approx=True)                            # softmax
        ctx = lax.dot_general(p, v[:, :, sl], dn_ctx,
                              preferred_element_type=jnp.float32)     # (b,S,hd)
        heads.append(ctx.reshape(BS, hd))
    attn = jnp.concatenate(heads, axis=-1)                            # (BS, D)
    attn = jnp.dot(attn.astype(jnp.bfloat16), wo_ref[0],
                   preferred_element_type=jnp.float32) + bo_ref[0]

    # ---- residual + norm1, feed-forward, residual + norm2 ------------------
    h1 = _layer_norm(h + attn, ln1w_ref[0], ln1b_ref[0])
    f = jnp.dot(h1.astype(jnp.bfloat16), w1_ref[0],
                preferred_element_type=jnp.float32) + b1_ref[0]
    f = jnp.maximum(f, 0.0)
    f = jnp.dot(f.astype(jnp.bfloat16), w2_ref[0],
                preferred_element_type=jnp.float32) + b2_ref[0]
    h_new = _layer_norm(h1 + f, ln2w_ref[0], ln2b_ref[0])
    h_ref[...] = h_new

    # ---- last layer: x.transpose(1,2)[:, :, -1] -> Linear(D, 1) ------------
    @pl.when(l == pl.num_programs(1) - 1)
    def _():
        x_last = h_new.reshape(b_blk, S, D)[:, S - 1, :]      # (b_blk, D)
        y = jnp.sum(x_last * wout_ref[...], axis=-1, keepdims=True) + bout_ref[...]
        o_ref[...] = y.astype(o_ref.dtype)                    # (b_blk, 1)


# ----------------------------- wrapper -----------------------------------------

def forward(kp, x, *, num_heads, num_layers, b_blk=None):
    """x: (B, S, input_dim) -> (B,) per-sample scalar prediction."""
    B, S, Din = x.shape
    D = kp["pe_bias"].shape[-1]
    Dff = kp["w1_t"].shape[-1]
    L = num_layers

    # batch block: fill the MXU M dimension (128/256 rows) at realistic batch
    # sizes; fall back to B for tiny batches.
    if b_blk is None:
        if B >= 64:
            b_blk = 32
        elif B >= 16:
            b_blk = 16
        elif B >= 8:
            b_blk = 8
        else:
            b_blk = B
    nblk = (B + b_blk - 1) // b_blk
    b_pad = nblk * b_blk
    if b_pad != B:
        x = jnp.concatenate([x, jnp.zeros((b_pad - B, S, Din), x.dtype)], axis=0)
    pe = kp["pe_bias"][:S]                                   # (S, D), has in_b folded

    def const_spec(shape):
        n = len(shape)
        return pl.BlockSpec(shape, lambda b, l, _n=n: (0,) * _n)

    def layer_spec(shape):  # stacked (L, ...) -> one layer per grid step
        n = len(shape)
        return pl.BlockSpec((1,) + tuple(shape[1:]),
                            lambda b, l, _n=n: (l,) + (0,) * (_n - 1))

    kernel = functools.partial(_fused_kernel, num_heads=num_heads,
                               b_blk=b_blk, seq_len=S, din=Din)
    out = pl.pallas_call(
        kernel,
        out_shape=jax.ShapeDtypeStruct((b_pad, 1), jnp.float32),
        grid=(nblk, L),
        in_specs=[
            pl.BlockSpec((b_blk, S, Din), lambda b, l: (b, 0, 0)),   # x
            const_spec((S, D)),                                      # pe + in_b
            const_spec((DIN_PAD, D)),                                # input proj (bf16)
            layer_spec((L, D, 3 * D)), layer_spec((L, 1, 3 * D)),    # qkv proj
            layer_spec((L, D, D)), layer_spec((L, 1, D)),            # out proj
            layer_spec((L, 1, D)), layer_spec((L, 1, D)),            # ln1
            layer_spec((L, 1, D)), layer_spec((L, 1, D)),            # ln2
            layer_spec((L, D, Dff)), layer_spec((L, 1, Dff)),        # ff linear1
            layer_spec((L, Dff, D)), layer_spec((L, 1, D)),          # ff linear2
            const_spec((1, D)), const_spec((1, 1)),                  # output head
        ],
        out_specs=pl.BlockSpec((b_blk, 1), lambda b, l: (b, 0)),
        scratch_shapes=[pltpu.VMEM((b_blk * S, D), jnp.float32)],    # carried h
        compiler_params=pltpu.CompilerParams(
            dimension_semantics=("parallel", "arbitrary")),
    )(x, pe, kp["win_t"],
      kp["wqkv_t"], kp["bqkv"], kp["wo_t"], kp["bo"],
      kp["ln1w"], kp["ln1b"], kp["ln2w"], kp["ln2b"],
      kp["w1_t"], kp["b1"], kp["w2_t"], kp["b2"],
      kp["wout"], kp["bout"])
    return out[:B, 0]


# ----------------------------- params ------------------------------------------

def make_positional_encoding(max_seq_length, d_model):
    pos = jnp.arange(max_seq_length, dtype=jnp.float32)[:, None]
    div = jnp.exp(jnp.arange(0, d_model, 2, dtype=jnp.float32)
                  * (-math.log(10000.0) / d_model))
    pe = jnp.zeros((max_seq_length, d_model), jnp.float32)
    pe = pe.at[:, 0::2].set(jnp.sin(pos * div))
    pe = pe.at[:, 1::2].set(jnp.cos(pos * div))
    return pe


def init_params(key, *, input_dim, d_model, d_ff, num_layers, max_seq_length):
    """Parameters in PyTorch convention: W is (out_features, in_features)."""
    def dense(k, out_f, in_f, scale=0.05):
        kw, kb = jax.random.split(k)
        return (scale * jax.random.normal(kw, (out_f, in_f), jnp.float32),
                scale * jax.random.normal(kb, (out_f,), jnp.float32))

    keys = jax.random.split(key, 2 + num_layers)
    in_w, in_b = dense(keys[0], d_model, input_dim)
    out_w, out_b = dense(keys[1], 1, d_model)
    layers = []
    for l in range(num_layers):
        lk = jax.random.split(keys[2 + l], 4)
        wqkv, bqkv = dense(lk[0], 3 * d_model, d_model)
        wo, bo = dense(lk[1], d_model, d_model)
        w1, b1 = dense(lk[2], d_ff, d_model)
        w2, b2 = dense(lk[3], d_model, d_ff)
        layers.append(dict(
            wqkv=wqkv, bqkv=bqkv, wo=wo, bo=bo,
            ln1w=jnp.ones((d_model,), jnp.float32),
            ln1b=jnp.zeros((d_model,), jnp.float32),
            ln2w=jnp.ones((d_model,), jnp.float32),
            ln2b=jnp.zeros((d_model,), jnp.float32),
            w1=w1, b1=b1, w2=w2, b2=b2,
        ))
    pe = make_positional_encoding(max_seq_length, d_model)
    return dict(in_w=in_w, in_b=in_b, out_w=out_w, out_b=out_b,
                pe=pe, layers=layers)


def prepare_kernel_params(params, *, num_heads, din_pad=DIN_PAD):
    """Host-side one-time prep: transpose to (in, out), stack layers along a
    leading L axis, cast big matrices to bf16, fold 1/sqrt(hd) into the q
    projection and the input bias into the positional encoding."""
    d_model = params["in_w"].shape[0]
    input_dim = params["in_w"].shape[1]
    hd = d_model // num_heads
    scale = 1.0 / math.sqrt(hd)

    win_t = jnp.zeros((din_pad, d_model), jnp.float32)
    win_t = win_t.at[:input_dim].set(params["in_w"].T)

    L = params["layers"]

    def rows(name):
        return jnp.stack([lp[name].reshape(1, -1) for lp in L]).astype(jnp.float32)

    wqkv_t, bqkv = [], []
    for lp in L:
        w = lp["wqkv"].T                          # (D, 3D) columns = [q | k | v]
        w = w.at[:, :d_model].multiply(scale)     # fold q-scaling
        b = lp["bqkv"].at[:d_model].multiply(scale)
        wqkv_t.append(w)
        bqkv.append(b.reshape(1, -1))

    return dict(
        pe_bias=params["pe"] + params["in_b"][None, :],       # pe + input bias
        win_t=win_t.astype(jnp.bfloat16),
        wqkv_t=jnp.stack(wqkv_t).astype(jnp.bfloat16),
        bqkv=jnp.stack(bqkv).astype(jnp.float32),
        wo_t=jnp.stack([lp["wo"].T for lp in L]).astype(jnp.bfloat16),
        bo=rows("bo"),
        ln1w=rows("ln1w"), ln1b=rows("ln1b"),
        ln2w=rows("ln2w"), ln2b=rows("ln2b"),
        w1_t=jnp.stack([lp["w1"].T for lp in L]).astype(jnp.bfloat16),
        b1=rows("b1"),
        w2_t=jnp.stack([lp["w2"].T for lp in L]).astype(jnp.bfloat16),
        b2=rows("b2"),
        wout=params["out_w"].reshape(1, -1),
        bout=params["out_b"].reshape(1, 1),
    )


# ----------------------------- reference (pure JAX, f32) ------------------------

def reference_forward(params, x, *, num_heads):
    D = params["in_w"].shape[0]
    hd = D // num_heads
    B, S, _ = x.shape
    h = x @ params["in_w"].T + params["in_b"] + params["pe"][:S]
    for lp in params["layers"]:
        qkv = h @ lp["wqkv"].T + lp["bqkv"]
        q, k, v = jnp.split(qkv, 3, axis=-1)
        q = q / math.sqrt(hd)
        qh = q.reshape(B, S, num_heads, hd).transpose(0, 2, 1, 3)
        kh = k.reshape(B, S, num_heads, hd).transpose(0, 2, 1, 3)
        vh = v.reshape(B, S, num_heads, hd).transpose(0, 2, 1, 3)
        s = jnp.einsum('bhsd,bhtd->bhst', qh, kh)
        p = jax.nn.softmax(s, axis=-1)
        ctx = jnp.einsum('bhst,bhtd->bhsd', p, vh)
        attn = ctx.transpose(0, 2, 1, 3).reshape(B, S, D)
        attn = attn @ lp["wo"].T + lp["bo"]
        h1 = _layer_norm(h + attn, lp["ln1w"], lp["ln1b"])
        f = jnp.maximum(h1 @ lp["w1"].T + lp["b1"], 0.0)
        f = f @ lp["w2"].T + lp["b2"]
        h = _layer_norm(h1 + f, lp["ln2w"], lp["ln2b"])
    x_last = h[:, -1, :]
    return (x_last @ params["out_w"].T + params["out_b"])[:, 0]


# ----------------------------- main --------------------------------------------

if __name__ == "__main__":
    B, S, input_dim = 2, 8, 4
    d_model, num_heads, d_ff, num_layers, max_seq = 128, 8, 256, 2, 20

    root = jax.random.PRNGKey(0)
    k_params, k_x = jax.random.split(root)
    params = init_params(k_params, input_dim=input_dim, d_model=d_model,
                         d_ff=d_ff, num_layers=num_layers,
                         max_seq_length=max_seq)
    kparams = prepare_kernel_params(params, num_heads=num_heads)
    x = jax.random.normal(k_x, (B, S, input_dim), jnp.float32)

    out = forward(kparams, x, num_heads=num_heads, num_layers=num_layers)
    out = jax.block_until_ready(out)
    assert out.shape == (B,) and out.dtype == jnp.float32

    ref = reference_forward(params, x, num_heads=num_heads)
    # bf16 weights + approximate softmax reciprocal vs the f32 reference.
    assert jnp.allclose(out, ref, atol=3e-2, rtol=3e-2), (out, ref)
    print("KERNEL_OK")
</pallas_src>

<mosaic_0001>
module attributes {stable_mosaic.version = 11 : i64} {
  func.func @_fused_kernel(%arg0: i32, %arg1: i32, %arg2: memref<2x8x4xf32, #tpu.memory_space<vmem>>, %arg3: memref<8x128xf32, #tpu.memory_space<vmem>>, %arg4: memref<128x128xbf16, #tpu.memory_space<vmem>>, %arg5: memref<1x128x384xbf16, #tpu.memory_space<vmem>>, %arg6: memref<1x1x384xf32, #tpu.memory_space<vmem>>, %arg7: memref<1x128x128xbf16, #tpu.memory_space<vmem>>, %arg8: memref<1x1x128xf32, #tpu.memory_space<vmem>>, %arg9: memref<1x1x128xf32, #tpu.memory_space<vmem>>, %arg10: memref<1x1x128xf32, #tpu.memory_space<vmem>>, %arg11: memref<1x1x128xf32, #tpu.memory_space<vmem>>, %arg12: memref<1x1x128xf32, #tpu.memory_space<vmem>>, %arg13: memref<1x128x256xbf16, #tpu.memory_space<vmem>>, %arg14: memref<1x1x256xf32, #tpu.memory_space<vmem>>, %arg15: memref<1x256x128xbf16, #tpu.memory_space<vmem>>, %arg16: memref<1x1x128xf32, #tpu.memory_space<vmem>>, %arg17: memref<1x128xf32, #tpu.memory_space<vmem>>, %arg18: memref<1x1xf32, #tpu.memory_space<vmem>>, %arg19: memref<2x1xf32, #tpu.memory_space<vmem>>, %arg20: memref<16x128xf32, #tpu.memory_space<vmem>>) attributes {dimension_semantics = [#tpu.dimension_semantics<parallel>, #tpu.dimension_semantics<arbitrary>], iteration_bounds = array<i64: 1, 2>, scalar_prefetch = 0 : i64, scratch_operands = 1 : i64, tpu.core_type = #tpu.core_type<tc>, window_params = [{transform_indices = @transform_0, window_bounds = array<i64: 2, 8, 4>}, {pipeline_mode = #tpu.pipeline_mode<synchronous>, transform_indices = @transform_1, window_bounds = array<i64: 8, 128>}, {pipeline_mode = #tpu.pipeline_mode<synchronous>, transform_indices = @transform_2, window_bounds = array<i64: 128, 128>}, {transform_indices = @transform_3, window_bounds = array<i64: 1, 128, 384>}, {transform_indices = @transform_4, window_bounds = array<i64: 1, 1, 384>}, {transform_indices = @transform_5, window_bounds = array<i64: 1, 128, 128>}, {transform_indices = @transform_6, window_bounds = array<i64: 1, 1, 128>}, {transform_indices = @transform_7, window_bounds = array<i64: 1, 1, 128>}, {transform_indices = @transform_8, window_bounds = array<i64: 1, 1, 128>}, {transform_indices = @transform_9, window_bounds = array<i64: 1, 1, 128>}, {transform_indices = @transform_10, window_bounds = array<i64: 1, 1, 128>}, {transform_indices = @transform_11, window_bounds = array<i64: 1, 128, 256>}, {transform_indices = @transform_12, window_bounds = array<i64: 1, 1, 256>}, {transform_indices = @transform_13, window_bounds = array<i64: 1, 256, 128>}, {transform_indices = @transform_14, window_bounds = array<i64: 1, 1, 128>}, {pipeline_mode = #tpu.pipeline_mode<synchronous>, transform_indices = @transform_15, window_bounds = array<i64: 1, 128>}, {pipeline_mode = #tpu.pipeline_mode<synchronous>, transform_indices = @transform_16, window_bounds = array<i64: 1, 1>}, {transform_indices = @transform_17, window_bounds = array<i64: 2, 1>}]} {
    %c0_i32 = arith.constant 0 : i32
    %0 = arith.cmpi eq, %arg1, %c0_i32 : i32
    %1 = arith.extui %0 : i1 to i32
    %c0_i32_0 = arith.constant 0 : i32
    %2 = arith.cmpi ne, %1, %c0_i32_0 : i32
    scf.if %2 {
      %c0_87 = arith.constant 0 : index
      %c0_88 = arith.constant 0 : index
      %c0_89 = arith.constant 0 : index
      %231 = vector.load %arg2[%c0_87, %c0_88, %c0_89] : memref<2x8x4xf32, #tpu.memory_space<vmem>>, vector<2x8x4xf32>
      %232 = vector.shape_cast %231 : vector<2x8x4xf32> to vector<16x4xf32>
      %cst_90 = arith.constant 0.000000e+00 : f32
      %233 = vector.broadcast %cst_90 : f32 to vector<16x124xf32>
      %234 = tpu.concatenate %232, %233 in 1 : vector<16x4xf32>, vector<16x124xf32> -> vector<16x128xf32>
      %235 = arith.truncf %234 : vector<16x128xf32> to vector<16x128xbf16>
      %c0_91 = arith.constant 0 : index
      %c0_92 = arith.constant 0 : index
      %236 = vector.load %arg4[%c0_91, %c0_92] : memref<128x128xbf16, #tpu.memory_space<vmem>>, vector<128x128xbf16>
      %cst_93 = arith.constant dense<0.000000e+00> : vector<16x128xf32>
      %237 = tpu.matmul %235, %236, %cst_93 {dimension_numbers = #tpu.dot_dimension_numbers<[1], [0], [0], [1], [0, 0, 1, 1], [], []>} : vector<16x128xbf16>, vector<128x128xbf16>, vector<16x128xf32> -> vector<16x128xf32>
      %238 = vector.shape_cast %237 : vector<16x128xf32> to vector<2x8x128xf32>
      %c0_94 = arith.constant 0 : index
      %c0_95 = arith.constant 0 : index
      %239 = vector.load %arg3[%c0_94, %c0_95] : memref<8x128xf32, #tpu.memory_space<vmem>>, vector<8x128xf32>
      %240 = vector.shape_cast %239 : vector<8x128xf32> to vector<1x8x128xf32>
      %241 = vector.broadcast %240 : vector<1x8x128xf32> to vector<2x8x128xf32>
      %242 = arith.addf %238, %241 : vector<2x8x128xf32>
      %243 = vector.shape_cast %242 : vector<2x8x128xf32> to vector<16x128xf32>
      %c0_96 = arith.constant 0 : index
      %c0_97 = arith.constant 0 : index
      %244 = vector.load %arg20[%c0_96, %c0_97] : memref<16x128xf32, #tpu.memory_space<vmem>>, vector<16x128xf32>
      tpu.vector_store %arg20[%c0_96, %c0_97], %243 {strides = array<i32>} : memref<16x128xf32, #tpu.memory_space<vmem>>, vector<16x128xf32>,
    } else {
    }
    %c0 = arith.constant 0 : index
    %c0_1 = arith.constant 0 : index
    %3 = vector.load %arg20[%c0, %c0_1] : memref<16x128xf32, #tpu.memory_space<vmem>>, vector<16x128xf32>
    %4 = arith.truncf %3 : vector<16x128xf32> to vector<16x128xbf16>
    %c0_2 = arith.constant 0 : index
    %c0_3 = arith.constant 0 : index
    %c0_4 = arith.constant 0 : index
    %5 = vector.load %arg5[%c0_2, %c0_3, %c0_4] : memref<1x128x384xbf16, #tpu.memory_space<vmem>>, vector<1x128x384xbf16>
    %6 = vector.shape_cast %5 : vector<1x128x384xbf16> to vector<128x384xbf16>
    %cst = arith.constant dense<0.000000e+00> : vector<16x384xf32>
    %7 = tpu.matmul %4, %6, %cst {dimension_numbers = #tpu.dot_dimension_numbers<[1], [0], [0], [1], [0, 0, 1, 1], [], []>} : vector<16x128xbf16>, vector<128x384xbf16>, vector<16x384xf32> -> vector<16x384xf32>
    %c0_5 = arith.constant 0 : index
    %c0_6 = arith.constant 0 : index
    %c0_7 = arith.constant 0 : index
    %8 = vector.load %arg6[%c0_5, %c0_6, %c0_7] : memref<1x1x384xf32, #tpu.memory_space<vmem>>, vector<1x1x384xf32>
    %9 = vector.shape_cast %8 : vector<1x1x384xf32> to vector<1x384xf32>
    %10 = vector.broadcast %9 : vector<1x384xf32> to vector<16x384xf32>
    %11 = arith.addf %7, %10 : vector<16x384xf32>
    %12 = vector.extract_strided_slice %11 {offsets = [0, 0], sizes = [16, 128], strides = [1, 1]} : vector<16x384xf32> to vector<16x128xf32>
    %13 = vector.shape_cast %12 : vector<16x128xf32> to vector<2x8x128xf32>
    %14 = vector.extract_strided_slice %11 {offsets = [0, 128], sizes = [16, 128], strides = [1, 1]} : vector<16x384xf32> to vector<16x128xf32>
    %15 = vector.shape_cast %14 : vector<16x128xf32> to vector<2x8x128xf32>
    %16 = vector.extract_strided_slice %11 {offsets = [0, 256], sizes = [16, 128], strides = [1, 1]} : vector<16x384xf32> to vector<16x128xf32>
    %17 = vector.shape_cast %16 : vector<16x128xf32> to vector<2x8x128xf32>
    %18 = vector.extract_strided_slice %13 {offsets = [0, 0, 0], sizes = [2, 8, 16], strides = [1, 1, 1]} : vector<2x8x128xf32> to vector<2x8x16xf32>
    %19 = vector.extract_strided_slice %15 {offsets = [0, 0, 0], sizes = [2, 8, 16], strides = [1, 1, 1]} : vector<2x8x128xf32> to vector<2x8x16xf32>
    %cst_8 = arith.constant dense<0.000000e+00> : vector<2x8x8xf32>
    %20 = tpu.matmul %18, %19, %cst_8 {dimension_numbers = #tpu.dot_dimension_numbers<[2], [2], [1], [1], [0, 0, 0, 1, 1, 1], [0], [0]>} : vector<2x8x16xf32>, vector<2x8x16xf32>, vector<2x8x8xf32> -> vector<2x8x8xf32>
    %cst_9 = arith.constant dense<0xFF800000> : vector<2x8xf32>
    %21 = vector.multi_reduction <maximumf>, %20, %cst_9 [2] : vector<2x8x8xf32> to vector<2x8xf32>
    %22 = vector.shape_cast %21 : vector<2x8xf32> to vector<2x8x1xf32>
    %23 = vector.broadcast %22 : vector<2x8x1xf32> to vector<2x8x8xf32>
    %24 = arith.subf %20, %23 : vector<2x8x8xf32>
    %25 = math.exp %24 : vector<2x8x8xf32>
    %cst_10 = arith.constant dense<0.000000e+00> : vector<2x8xf32>
    %26 = vector.multi_reduction <add>, %25, %cst_10 [2] : vector<2x8x8xf32> to vector<2x8xf32>
    %27 = vector.shape_cast %26 : vector<2x8xf32> to vector<2x8x1xf32>
    %28 = tpu.reciprocal %27 {approx = true} : vector<2x8x1xf32> -> vector<2x8x1xf32>
    %29 = vector.broadcast %28 : vector<2x8x1xf32> to vector<2x8x8xf32>
    %30 = arith.mulf %25, %29 : vector<2x8x8xf32>
    %31 = vector.extract_strided_slice %17 {offsets = [0, 0, 0], sizes = [2, 8, 16], strides = [1, 1, 1]} : vector<2x8x128xf32> to vector<2x8x16xf32>
    %cst_11 = arith.constant dense<0.000000e+00> : vector<2x8x16xf32>
    %32 = tpu.matmul %30, %31, %cst_11 {dimension_numbers = #tpu.dot_dimension_numbers<[2], [1], [1], [2], [0, 0, 0, 1, 1, 2], [0], [0]>} : vector<2x8x8xf32>, vector<2x8x16xf32>, vector<2x8x16xf32> -> vector<2x8x16xf32>
    %33 = vector.shape_cast %32 : vector<2x8x16xf32> to vector<16x16xf32>
    %34 = vector.extract_strided_slice %13 {offsets = [0, 0, 16], sizes = [2, 8, 16], strides = [1, 1, 1]} : vector<2x8x128xf32> to vector<2x8x16xf32>
    %35 = vector.extract_strided_slice %15 {offsets = [0, 0, 16], sizes = [2, 8, 16], strides = [1, 1, 1]} : vector<2x8x128xf32> to vector<2x8x16xf32>
    %cst_12 = arith.constant dense<0.000000e+00> : vector<2x8x8xf32>
    %36 = tpu.matmul %34, %35, %cst_12 {dimension_numbers = #tpu.dot_dimension_numbers<[2], [2], [1], [1], [0, 0, 0, 1, 1, 1], [0], [0]>} : vector<2x8x16xf32>, vector<2x8x16xf32>, vector<2x8x8xf32> -> vector<2x8x8xf32>
    %cst_13 = arith.constant dense<0xFF800000> : vector<2x8xf32>
    %37 = vector.multi_reduction <maximumf>, %36, %cst_13 [2] : vector<2x8x8xf32> to vector<2x8xf32>
    %38 = vector.shape_cast %37 : vector<2x8xf32> to vector<2x8x1xf32>
    %39 = vector.broadcast %38 : vector<2x8x1xf32> to vector<2x8x8xf32>
    %40 = arith.subf %36, %39 : vector<2x8x8xf32>
    %41 = math.exp %40 : vector<2x8x8xf32>
    %cst_14 = arith.constant dense<0.000000e+00> : vector<2x8xf32>
    %42 = vector.multi_reduction <add>, %41, %cst_14 [2] : vector<2x8x8xf32> to vector<2x8xf32>
    %43 = vector.shape_cast %42 : vector<2x8xf32> to vector<2x8x1xf32>
    %44 = tpu.reciprocal %43 {approx = true} : vector<2x8x1xf32> -> vector<2x8x1xf32>
    %45 = vector.broadcast %44 : vector<2x8x1xf32> to vector<2x8x8xf32>
    %46 = arith.mulf %41, %45 : vector<2x8x8xf32>
    %47 = vector.extract_strided_slice %17 {offsets = [0, 0, 16], sizes = [2, 8, 16], strides = [1, 1, 1]} : vector<2x8x128xf32> to vector<2x8x16xf32>
    %cst_15 = arith.constant dense<0.000000e+00> : vector<2x8x16xf32>
    %48 = tpu.matmul %46, %47, %cst_15 {dimension_numbers = #tpu.dot_dimension_numbers<[2], [1], [1], [2], [0, 0, 0, 1, 1, 2], [0], [0]>} : vector<2x8x8xf32>, vector<2x8x16xf32>, vector<2x8x16xf32> -> vector<2x8x16xf32>
    %49 = vector.shape_cast %48 : vector<2x8x16xf32> to vector<16x16xf32>
    %50 = vector.extract_strided_slice %13 {offsets = [0, 0, 32], sizes = [2, 8, 16], strides = [1, 1, 1]} : vector<2x8x128xf32> to vector<2x8x16xf32>
    %51 = vector.extract_strided_slice %15 {offsets = [0, 0, 32], sizes = [2, 8, 16], strides = [1, 1, 1]} : vector<2x8x128xf32> to vector<2x8x16xf32>
    %cst_16 = arith.constant dense<0.000000e+00> : vector<2x8x8xf32>
    %52 = tpu.matmul %50, %51, %cst_16 {dimension_numbers = #tpu.dot_dimension_numbers<[2], [2], [1], [1], [0, 0, 0, 1, 1, 1], [0], [0]>} : vector<2x8x16xf32>, vector<2x8x16xf32>, vector<2x8x8xf32> -> vector<2x8x8xf32>
    %cst_17 = arith.constant dense<0xFF800000> : vector<2x8xf32>
    %53 = vector.multi_reduction <maximumf>, %52, %cst_17 [2] : vector<2x8x8xf32> to vector<2x8xf32>
    %54 = vector.shape_cast %53 : vector<2x8xf32> to vector<2x8x1xf32>
    %55 = vector.broadcast %54 : vector<2x8x1xf32> to vector<2x8x8xf32>
    %56 = arith.subf %52, %55 : vector<2x8x8xf32>
    %57 = math.exp %56 : vector<2x8x8xf32>
    %cst_18 = arith.constant dense<0.000000e+00> : vector<2x8xf32>
    %58 = vector.multi_reduction <add>, %57, %cst_18 [2] : vector<2x8x8xf32> to vector<2x8xf32>
    %59 = vector.shape_cast %58 : vector<2x8xf32> to vector<2x8x1xf32>
    %60 = tpu.reciprocal %59 {approx = true} : vector<2x8x1xf32> -> vector<2x8x1xf32>
    %61 = vector.broadcast %60 : vector<2x8x1xf32> to vector<2x8x8xf32>
    %62 = arith.mulf %57, %61 : vector<2x8x8xf32>
    %63 = vector.extract_strided_slice %17 {offsets = [0, 0, 32], sizes = [2, 8, 16], strides = [1, 1, 1]} : vector<2x8x128xf32> to vector<2x8x16xf32>
    %cst_19 = arith.constant dense<0.000000e+00> : vector<2x8x16xf32>
    %64 = tpu.matmul %62, %63, %cst_19 {dimension_numbers = #tpu.dot_dimension_numbers<[2], [1], [1], [2], [0, 0, 0, 1, 1, 2], [0], [0]>} : vector<2x8x8xf32>, vector<2x8x16xf32>, vector<2x8x16xf32> -> vector<2x8x16xf32>
    %65 = vector.shape_cast %64 : vector<2x8x16xf32> to vector<16x16xf32>
    %66 = vector.extract_strided_slice %13 {offsets = [0, 0, 48], sizes = [2, 8, 16], strides = [1, 1, 1]} : vector<2x8x128xf32> to vector<2x8x16xf32>
    %67 = vector.extract_strided_slice %15 {offsets = [0, 0, 48], sizes = [2, 8, 16], strides = [1, 1, 1]} : vector<2x8x128xf32> to vector<2x8x16xf32>
    %cst_20 = arith.constant dense<0.000000e+00> : vector<2x8x8xf32>
    %68 = tpu.matmul %66, %67, %cst_20 {dimension_numbers = #tpu.dot_dimension_numbers<[2], [2], [1], [1], [0, 0, 0, 1, 1, 1], [0], [0]>} : vector<2x8x16xf32>, vector<2x8x16xf32>, vector<2x8x8xf32> -> vector<2x8x8xf32>
    %cst_21 = arith.constant dense<0xFF800000> : vector<2x8xf32>
    %69 = vector.multi_reduction <maximumf>, %68, %cst_21 [2] : vector<2x8x8xf32> to vector<2x8xf32>
    %70 = vector.shape_cast %69 : vector<2x8xf32> to vector<2x8x1xf32>
    %71 = vector.broadcast %70 : vector<2x8x1xf32> to vector<2x8x8xf32>
    %72 = arith.subf %68, %71 : vector<2x8x8xf32>
    %73 = math.exp %72 : vector<2x8x8xf32>
    %cst_22 = arith.constant dense<0.000000e+00> : vector<2x8xf32>
    %74 = vector.multi_reduction <add>, %73, %cst_22 [2] : vector<2x8x8xf32> to vector<2x8xf32>
    %75 = vector.shape_cast %74 : vector<2x8xf32> to vector<2x8x1xf32>
    %76 = tpu.reciprocal %75 {approx = true} : vector<2x8x1xf32> -> vector<2x8x1xf32>
    %77 = vector.broadcast %76 : vector<2x8x1xf32> to vector<2x8x8xf32>
    %78 = arith.mulf %73, %77 : vector<2x8x8xf32>
    %79 = vector.extract_strided_slice %17 {offsets = [0, 0, 48], sizes = [2, 8, 16], strides = [1, 1, 1]} : vector<2x8x128xf32> to vector<2x8x16xf32>
    %cst_23 = arith.constant dense<0.000000e+00> : vector<2x8x16xf32>
    %80 = tpu.matmul %78, %79, %cst_23 {dimension_numbers = #tpu.dot_dimension_numbers<[2], [1], [1], [2], [0, 0, 0, 1, 1, 2], [0], [0]>} : vector<2x8x8xf32>, vector<2x8x16xf32>, vector<2x8x16xf32> -> vector<2x8x16xf32>
    %81 = vector.shape_cast %80 : vector<2x8x16xf32> to vector<16x16xf32>
    %82 = vector.extract_strided_slice %13 {offsets = [0, 0, 64], sizes = [2, 8, 16], strides = [1, 1, 1]} : vector<2x8x128xf32> to vector<2x8x16xf32>
    %83 = vector.extract_strided_slice %15 {offsets = [0, 0, 64], sizes = [2, 8, 16], strides = [1, 1, 1]} : vector<2x8x128xf32> to vector<2x8x16xf32>
    %cst_24 = arith.constant dense<0.000000e+00> : vector<2x8x8xf32>
    %84 = tpu.matmul %82, %83, %cst_24 {dimension_numbers = #tpu.dot_dimension_numbers<[2], [2], [1], [1], [0, 0, 0, 1, 1, 1], [0], [0]>} : vector<2x8x16xf32>, vector<2x8x16xf32>, vector<2x8x8xf32> -> vector<2x8x8xf32>
    %cst_25 = arith.constant dense<0xFF800000> : vector<2x8xf32>
    %85 = vector.multi_reduction <maximumf>, %84, %cst_25 [2] : vector<2x8x8xf32> to vector<2x8xf32>
    %86 = vector.shape_cast %85 : vector<2x8xf32> to vector<2x8x1xf32>
    %87 = vector.broadcast %86 : vector<2x8x1xf32> to vector<2x8x8xf32>
    %88 = arith.subf %84, %87 : vector<2x8x8xf32>
    %89 = math.exp %88 : vector<2x8x8xf32>
    %cst_26 = arith.constant dense<0.000000e+00> : vector<2x8xf32>
    %90 = vector.multi_reduction <add>, %89, %cst_26 [2] : vector<2x8x8xf32> to vector<2x8xf32>
    %91 = vector.shape_cast %90 : vector<2x8xf32> to vector<2x8x1xf32>
    %92 = tpu.reciprocal %91 {approx = true} : vector<2x8x1xf32> -> vector<2x8x1xf32>
    %93 = vector.broadcast %92 : vector<2x8x1xf32> to vector<2x8x8xf32>
    %94 = arith.mulf %89, %93 : vector<2x8x8xf32>
    %95 = vector.extract_strided_slice %17 {offsets = [0, 0, 64], sizes = [2, 8, 16], strides = [1, 1, 1]} : vector<2x8x128xf32> to vector<2x8x16xf32>
    %cst_27 = arith.constant dense<0.000000e+00> : vector<2x8x16xf32>
    %96 = tpu.matmul %94, %95, %cst_27 {dimension_numbers = #tpu.dot_dimension_numbers<[2], [1], [1], [2], [0, 0, 0, 1, 1, 2], [0], [0]>} : vector<2x8x8xf32>, vector<2x8x16xf32>, vector<2x8x16xf32> -> vector<2x8x16xf32>
    %97 = vector.shape_cast %96 : vector<2x8x16xf32> to vector<16x16xf32>
    %98 = vector.extract_strided_slice %13 {offsets = [0, 0, 80], sizes = [2, 8, 16], strides = [1, 1, 1]} : vector<2x8x128xf32> to vector<2x8x16xf32>
    %99 = vector.extract_strided_slice %15 {offsets = [0, 0, 80], sizes = [2, 8, 16], strides = [1, 1, 1]} : vector<2x8x128xf32> to vector<2x8x16xf32>
    %cst_28 = arith.constant dense<0.000000e+00> : vector<2x8x8xf32>
    %100 = tpu.matmul %98, %99, %cst_28 {dimension_numbers = #tpu.dot_dimension_numbers<[2], [2], [1], [1], [0, 0, 0, 1, 1, 1], [0], [0]>} : vector<2x8x16xf32>, vector<2x8x16xf32>, vector<2x8x8xf32> -> vector<2x8x8xf32>
    %cst_29 = arith.constant dense<0xFF800000> : vector<2x8xf32>
    %101 = vector.multi_reduction <maximumf>, %100, %cst_29 [2] : vector<2x8x8xf32> to vector<2x8xf32>
    %102 = vector.shape_cast %101 : vector<2x8xf32> to vector<2x8x1xf32>
    %103 = vector.broadcast %102 : vector<2x8x1xf32> to vector<2x8x8xf32>
    %104 = arith.subf %100, %103 : vector<2x8x8xf32>
    %105 = math.exp %104 : vector<2x8x8xf32>
    %cst_30 = arith.constant dense<0.000000e+00> : vector<2x8xf32>
    %106 = vector.multi_reduction <add>, %105, %cst_30 [2] : vector<2x8x8xf32> to vector<2x8xf32>
    %107 = vector.shape_cast %106 : vector<2x8xf32> to vector<2x8x1xf32>
    %108 = tpu.reciprocal %107 {approx = true} : vector<2x8x1xf32> -> vector<2x8x1xf32>
    %109 = vector.broadcast %108 : vector<2x8x1xf32> to vector<2x8x8xf32>
    %110 = arith.mulf %105, %109 : vector<2x8x8xf32>
    %111 = vector.extract_strided_slice %17 {offsets = [0, 0, 80], sizes = [2, 8, 16], strides = [1, 1, 1]} : vector<2x8x128xf32> to vector<2x8x16xf32>
    %cst_31 = arith.constant dense<0.000000e+00> : vector<2x8x16xf32>
    %112 = tpu.matmul %110, %111, %cst_31 {dimension_numbers = #tpu.dot_dimension_numbers<[2], [1], [1], [2], [0, 0, 0, 1, 1, 2], [0], [0]>} : vector<2x8x8xf32>, vector<2x8x16xf32>, vector<2x8x16xf32> -> vector<2x8x16xf32>
    %113 = vector.shape_cast %112 : vector<2x8x16xf32> to vector<16x16xf32>
    %114 = vector.extract_strided_slice %13 {offsets = [0, 0, 96], sizes = [2, 8, 16], strides = [1, 1, 1]} : vector<2x8x128xf32> to vector<2x8x16xf32>
    %115 = vector.extract_strided_slice %15 {offsets = [0, 0, 96], sizes = [2, 8, 16], strides = [1, 1, 1]} : vector<2x8x128xf32> to vector<2x8x16xf32>
    %cst_32 = arith.constant dense<0.000000e+00> : vector<2x8x8xf32>
    %116 = tpu.matmul %114, %115, %cst_32 {dimension_numbers = #tpu.dot_dimension_numbers<[2], [2], [1], [1], [0, 0, 0, 1, 1, 1], [0], [0]>} : vector<2x8x16xf32>, vector<2x8x16xf32>, vector<2x8x8xf32> -> vector<2x8x8xf32>
    %cst_33 = arith.constant dense<0xFF800000> : vector<2x8xf32>
    %117 = vector.multi_reduction <maximumf>, %116, %cst_33 [2] : vector<2x8x8xf32> to vector<2x8xf32>
    %118 = vector.shape_cast %117 : vector<2x8xf32> to vector<2x8x1xf32>
    %119 = vector.broadcast %118 : vector<2x8x1xf32> to vector<2x8x8xf32>
    %120 = arith.subf %116, %119 : vector<2x8x8xf32>
    %121 = math.exp %120 : vector<2x8x8xf32>
    %cst_34 = arith.constant dense<0.000000e+00> : vector<2x8xf32>
    %122 = vector.multi_reduction <add>, %121, %cst_34 [2] : vector<2x8x8xf32> to vector<2x8xf32>
    %123 = vector.shape_cast %122 : vector<2x8xf32> to vector<2x8x1xf32>
    %124 = tpu.reciprocal %123 {approx = true} : vector<2x8x1xf32> -> vector<2x8x1xf32>
    %125 = vector.broadcast %124 : vector<2x8x1xf32> to vector<2x8x8xf32>
    %126 = arith.mulf %121, %125 : vector<2x8x8xf32>
    %127 = vector.extract_strided_slice %17 {offsets = [0, 0, 96], sizes = [2, 8, 16], strides = [1, 1, 1]} : vector<2x8x128xf32> to vector<2x8x16xf32>
    %cst_35 = arith.constant dense<0.000000e+00> : vector<2x8x16xf32>
    %128 = tpu.matmul %126, %127, %cst_35 {dimension_numbers = #tpu.dot_dimension_numbers<[2], [1], [1], [2], [0, 0, 0, 1, 1, 2], [0], [0]>} : vector<2x8x8xf32>, vector<2x8x16xf32>, vector<2x8x16xf32> -> vector<2x8x16xf32>
    %129 = vector.shape_cast %128 : vector<2x8x16xf32> to vector<16x16xf32>
    %130 = vector.extract_strided_slice %13 {offsets = [0, 0, 112], sizes = [2, 8, 16], strides = [1, 1, 1]} : vector<2x8x128xf32> to vector<2x8x16xf32>
    %131 = vector.extract_strided_slice %15 {offsets = [0, 0, 112], sizes = [2, 8, 16], strides = [1, 1, 1]} : vector<2x8x128xf32> to vector<2x8x16xf32>
    %cst_36 = arith.constant dense<0.000000e+00> : vector<2x8x8xf32>
    %132 = tpu.matmul %130, %131, %cst_36 {dimension_numbers = #tpu.dot_dimension_numbers<[2], [2], [1], [1], [0, 0, 0, 1, 1, 1], [0], [0]>} : vector<2x8x16xf32>, vector<2x8x16xf32>, vector<2x8x8xf32> -> vector<2x8x8xf32>
    %cst_37 = arith.constant dense<0xFF800000> : vector<2x8xf32>
    %133 = vector.multi_reduction <maximumf>, %132, %cst_37 [2] : vector<2x8x8xf32> to vector<2x8xf32>
    %134 = vector.shape_cast %133 : vector<2x8xf32> to vector<2x8x1xf32>
    %135 = vector.broadcast %134 : vector<2x8x1xf32> to vector<2x8x8xf32>
    %136 = arith.subf %132, %135 : vector<2x8x8xf32>
    %137 = math.exp %136 : vector<2x8x8xf32>
    %cst_38 = arith.constant dense<0.000000e+00> : vector<2x8xf32>
    %138 = vector.multi_reduction <add>, %137, %cst_38 [2] : vector<2x8x8xf32> to vector<2x8xf32>
    %139 = vector.shape_cast %138 : vector<2x8xf32> to vector<2x8x1xf32>
    %140 = tpu.reciprocal %139 {approx = true} : vector<2x8x1xf32> -> vector<2x8x1xf32>
    %141 = vector.broadcast %140 : vector<2x8x1xf32> to vector<2x8x8xf32>
    %142 = arith.mulf %137, %141 : vector<2x8x8xf32>
    %143 = vector.extract_strided_slice %17 {offsets = [0, 0, 112], sizes = [2, 8, 16], strides = [1, 1, 1]} : vector<2x8x128xf32> to vector<2x8x16xf32>
    %cst_39 = arith.constant dense<0.000000e+00> : vector<2x8x16xf32>
    %144 = tpu.matmul %142, %143, %cst_39 {dimension_numbers = #tpu.dot_dimension_numbers<[2], [1], [1], [2], [0, 0, 0, 1, 1, 2], [0], [0]>} : vector<2x8x8xf32>, vector<2x8x16xf32>, vector<2x8x16xf32> -> vector<2x8x16xf32>
    %145 = vector.shape_cast %144 : vector<2x8x16xf32> to vector<16x16xf32>
    %146 = tpu.concatenate %33, %49, %65, %81, %97, %113, %129, %145 in 1 : vector<16x16xf32>, vector<16x16xf32>, vector<16x16xf32>, vector<16x16xf32>, vector<16x16xf32>, vector<16x16xf32>, vector<16x16xf32>, vector<16x16xf32> -> vector<16x128xf32>
    %147 = arith.truncf %146 : vector<16x128xf32> to vector<16x128xbf16>
    %c0_40 = arith.constant 0 : index
    %c0_41 = arith.constant 0 : index
    %c0_42 = arith.constant 0 : index
    %148 = vector.load %arg7[%c0_40, %c0_41, %c0_42] : memref<1x128x128xbf16, #tpu.memory_space<vmem>>, vector<1x128x128xbf16>
    %149 = vector.shape_cast %148 : vector<1x128x128xbf16> to vector<128x128xbf16>
    %cst_43 = arith.constant dense<0.000000e+00> : vector<16x128xf32>
    %150 = tpu.matmul %147, %149, %cst_43 {dimension_numbers = #tpu.dot_dimension_numbers<[1], [0], [0], [1], [0, 0, 1, 1], [], []>} : vector<16x128xbf16>, vector<128x128xbf16>, vector<16x128xf32> -> vector<16x128xf32>
    %c0_44 = arith.constant 0 : index
    %c0_45 = arith.constant 0 : index
    %c0_46 = arith.constant 0 : index
    %151 = vector.load %arg8[%c0_44, %c0_45, %c0_46] : memref<1x1x128xf32, #tpu.memory_space<vmem>>, vector<1x1x128xf32>
    %152 = vector.shape_cast %151 : vector<1x1x128xf32> to vector<1x128xf32>
    %153 = vector.broadcast %152 : vector<1x128xf32> to vector<16x128xf32>
    %154 = arith.addf %150, %153 : vector<16x128xf32>
    %155 = arith.addf %3, %154 : vector<16x128xf32>
    %c0_47 = arith.constant 0 : index
    %c0_48 = arith.constant 0 : index
    %c0_49 = arith.constant 0 : index
    %156 = vector.load %arg9[%c0_47, %c0_48, %c0_49] : memref<1x1x128xf32, #tpu.memory_space<vmem>>, vector<1x1x128xf32>
    %157 = vector.shape_cast %156 : vector<1x1x128xf32> to vector<1x128xf32>
    %c0_50 = arith.constant 0 : index
    %c0_51 = arith.constant 0 : index
    %c0_52 = arith.constant 0 : index
    %158 = vector.load %arg10[%c0_50, %c0_51, %c0_52] : memref<1x1x128xf32, #tpu.memory_space<vmem>>, vector<1x1x128xf32>
    %159 = vector.shape_cast %158 : vector<1x1x128xf32> to vector<1x128xf32>
    %cst_53 = arith.constant dense<0.000000e+00> : vector<16xf32>
    %160 = vector.multi_reduction <add>, %155, %cst_53 [1] : vector<16x128xf32> to vector<16xf32>
    %161 = vector.shape_cast %160 : vector<16xf32> to vector<16x1xf32>
    %cst_54 = arith.constant 1.280000e+02 : f32
    %162 = vector.broadcast %cst_54 : f32 to vector<16x1xf32>
    %163 = arith.divf %161, %162 : vector<16x1xf32>
    %164 = vector.broadcast %163 : vector<16x1xf32> to vector<16x128xf32>
    %165 = arith.subf %155, %164 : vector<16x128xf32>
    %166 = arith.mulf %165, %165 : vector<16x128xf32>
    %cst_55 = arith.constant dense<0.000000e+00> : vector<16xf32>
    %167 = vector.multi_reduction <add>, %166, %cst_55 [1] : vector<16x128xf32> to vector<16xf32>
    %168 = vector.shape_cast %167 : vector<16xf32> to vector<16x1xf32>
    %cst_56 = arith.constant 1.280000e+02 : f32
    %169 = vector.broadcast %cst_56 : f32 to vector<16x1xf32>
    %170 = arith.divf %168, %169 : vector<16x1xf32>
    %171 = vector.broadcast %163 : vector<16x1xf32> to vector<16x128xf32>
    %172 = arith.subf %155, %171 : vector<16x128xf32>
    %cst_57 = arith.constant 9.99999997E-7 : f32
    %173 = vector.broadcast %cst_57 : f32 to vector<16x1xf32>
    %174 = arith.addf %170, %173 : vector<16x1xf32>
    %175 = math.rsqrt %174 : vector<16x1xf32>
    %176 = vector.broadcast %175 : vector<16x1xf32> to vector<16x128xf32>
    %177 = arith.mulf %172, %176 : vector<16x128xf32>
    %178 = vector.broadcast %157 : vector<1x128xf32> to vector<16x128xf32>
    %179 = arith.mulf %177, %178 : vector<16x128xf32>
    %180 = vector.broadcast %159 : vector<1x128xf32> to vector<16x128xf32>
    %181 = arith.addf %179, %180 : vector<16x128xf32>
    %182 = arith.truncf %181 : vector<16x128xf32> to vector<16x128xbf16>
    %c0_58 = arith.constant 0 : index
    %c0_59 = arith.constant 0 : index
    %c0_60 = arith.constant 0 : index
    %183 = vector.load %arg13[%c0_58, %c0_59, %c0_60] : memref<1x128x256xbf16, #tpu.memory_space<vmem>>, vector<1x128x256xbf16>
    %184 = vector.shape_cast %183 : vector<1x128x256xbf16> to vector<128x256xbf16>
    %cst_61 = arith.constant dense<0.000000e+00> : vector<16x256xf32>
    %185 = tpu.matmul %182, %184, %cst_61 {dimension_numbers = #tpu.dot_dimension_numbers<[1], [0], [0], [1], [0, 0, 1, 1], [], []>} : vector<16x128xbf16>, vector<128x256xbf16>, vector<16x256xf32> -> vector<16x256xf32>
    %c0_62 = arith.constant 0 : index
    %c0_63 = arith.constant 0 : index
    %c0_64 = arith.constant 0 : index
    %186 = vector.load %arg14[%c0_62, %c0_63, %c0_64] : memref<1x1x256xf32, #tpu.memory_space<vmem>>, vector<1x1x256xf32>
    %187 = vector.shape_cast %186 : vector<1x1x256xf32> to vector<1x256xf32>
    %188 = vector.broadcast %187 : vector<1x256xf32> to vector<16x256xf32>
    %189 = arith.addf %185, %188 : vector<16x256xf32>
    %cst_65 = arith.constant 0.000000e+00 : f32
    %190 = vector.broadcast %cst_65 : f32 to vector<16x256xf32>
    %191 = arith.maximumf %189, %190 : vector<16x256xf32>
    %192 = arith.truncf %191 : vector<16x256xf32> to vector<16x256xbf16>
    %c0_66 = arith.constant 0 : index
    %c0_67 = arith.constant 0 : index
    %c0_68 = arith.constant 0 : index
    %193 = vector.load %arg15[%c0_66, %c0_67, %c0_68] : memref<1x256x128xbf16, #tpu.memory_space<vmem>>, vector<1x256x128xbf16>
    %194 = vector.shape_cast %193 : vector<1x256x128xbf16> to vector<256x128xbf16>
    %cst_69 = arith.constant dense<0.000000e+00> : vector<16x128xf32>
    %195 = tpu.matmul %192, %194, %cst_69 {dimension_numbers = #tpu.dot_dimension_numbers<[1], [0], [0], [1], [0, 0, 1, 1], [], []>} : vector<16x256xbf16>, vector<256x128xbf16>, vector<16x128xf32> -> vector<16x128xf32>
    %c0_70 = arith.constant 0 : index
    %c0_71 = arith.constant 0 : index
    %c0_72 = arith.constant 0 : index
    %196 = vector.load %arg16[%c0_70, %c0_71, %c0_72] : memref<1x1x128xf32, #tpu.memory_space<vmem>>, vector<1x1x128xf32>
    %197 = vector.shape_cast %196 : vector<1x1x128xf32> to vector<1x128xf32>
    %198 = vector.broadcast %197 : vector<1x128xf32> to vector<16x128xf32>
    %199 = arith.addf %195, %198 : vector<16x128xf32>
    %200 = arith.addf %181, %199 : vector<16x128xf32>
    %c0_73 = arith.constant 0 : index
    %c0_74 = arith.constant 0 : index
    %c0_75 = arith.constant 0 : index
    %201 = vector.load %arg11[%c0_73, %c0_74, %c0_75] : memref<1x1x128xf32, #tpu.memory_space<vmem>>, vector<1x1x128xf32>
    %202 = vector.shape_cast %201 : vector<1x1x128xf32> to vector<1x128xf32>
    %c0_76 = arith.constant 0 : index
    %c0_77 = arith.constant 0 : index
    %c0_78 = arith.constant 0 : index
    %203 = vector.load %arg12[%c0_76, %c0_77, %c0_78] : memref<1x1x128xf32, #tpu.memory_space<vmem>>, vector<1x1x128xf32>
    %204 = vector.shape_cast %203 : vector<1x1x128xf32> to vector<1x128xf32>
    %cst_79 = arith.constant dense<0.000000e+00> : vector<16xf32>
    %205 = vector.multi_reduction <add>, %200, %cst_79 [1] : vector<16x128xf32> to vector<16xf32>
    %206 = vector.shape_cast %205 : vector<16xf32> to vector<16x1xf32>
    %cst_80 = arith.constant 1.280000e+02 : f32
    %207 = vector.broadcast %cst_80 : f32 to vector<16x1xf32>
    %208 = arith.divf %206, %207 : vector<16x1xf32>
    %209 = vector.broadcast %208 : vector<16x1xf32> to vector<16x128xf32>
    %210 = arith.subf %200, %209 : vector<16x128xf32>
    %211 = arith.mulf %210, %210 : vector<16x128xf32>
    %cst_81 = arith.constant dense<0.000000e+00> : vector<16xf32>
    %212 = vector.multi_reduction <add>, %211, %cst_81 [1] : vector<16x128xf32> to vector<16xf32>
    %213 = vector.shape_cast %212 : vector<16xf32> to vector<16x1xf32>
    %cst_82 = arith.constant 1.280000e+02 : f32
    %214 = vector.broadcast %cst_82 : f32 to vector<16x1xf32>
    %215 = arith.divf %213, %214 : vector<16x1xf32>
    %216 = vector.broadcast %208 : vector<16x1xf32> to vector<16x128xf32>
    %217 = arith.subf %200, %216 : vector<16x128xf32>
    %cst_83 = arith.constant 9.99999997E-7 : f32
    %218 = vector.broadcast %cst_83 : f32 to vector<16x1xf32>
    %219 = arith.addf %215, %218 : vector<16x1xf32>
    %220 = math.rsqrt %219 : vector<16x1xf32>
    %221 = vector.broadcast %220 : vector<16x1xf32> to vector<16x128xf32>
    %222 = arith.mulf %217, %221 : vector<16x128xf32>
    %223 = vector.broadcast %202 : vector<1x128xf32> to vector<16x128xf32>
    %224 = arith.mulf %222, %223 : vector<16x128xf32>
    %225 = vector.broadcast %204 : vector<1x128xf32> to vector<16x128xf32>
    %226 = arith.addf %224, %225 : vector<16x128xf32>
    %c0_84 = arith.constant 0 : index
    %c0_85 = arith.constant 0 : index
    %227 = vector.load %arg20[%c0_84, %c0_85] : memref<16x128xf32, #tpu.memory_space<vmem>>, vector<16x128xf32>
    tpu.vector_store %arg20[%c0_84, %c0_85], %226 {strides = array<i32>} : memref<16x128xf32, #tpu.memory_space<vmem>>, vector<16x128xf32>,
    %c1_i32 = arith.constant 1 : i32
    %228 = arith.cmpi eq, %arg1, %c1_i32 : i32
    %229 = arith.extui %228 : i1 to i32
    %c0_i32_86 = arith.constant 0 : i32
    %230 = arith.cmpi ne, %229, %c0_i32_86 : i32
    scf.if %230 {
      %231 = vector.shape_cast %226 : vector<16x128xf32> to vector<2x8x128xf32>
      %232 = vector.extract_strided_slice %231 {offsets = [0, 7, 0], sizes = [2, 1, 128], strides = [1, 1, 1]} : vector<2x8x128xf32> to vector<2x1x128xf32>
      %233 = vector.shape_cast %232 : vector<2x1x128xf32> to vector<2x128xf32>
      %c0_87 = arith.constant 0 : index
      %c0_88 = arith.constant 0 : index
      %234 = vector.load %arg17[%c0_87, %c0_88] : memref<1x128xf32, #tpu.memory_space<vmem>>, vector<1x128xf32>
      %235 = vector.broadcast %234 : vector<1x128xf32> to vector<2x128xf32>
      %236 = arith.mulf %233, %235 : vector<2x128xf32>
      %cst_89 = arith.constant dense<0.000000e+00> : vector<2xf32>
      %237 = vector.multi_reduction <add>, %236, %cst_89 [1] : vector<2x128xf32> to vector<2xf32>
      %238 = vector.shape_cast %237 : vector<2xf32> to vector<2x1xf32>
      %c0_90 = arith.constant 0 : index
      %c0_91 = arith.constant 0 : index
      %239 = vector.load %arg18[%c0_90, %c0_91] : memref<1x1xf32, #tpu.memory_space<vmem>>, vector<1x1xf32>
      %240 = vector.broadcast %239 : vector<1x1xf32> to vector<2x1xf32>
      %241 = arith.addf %238, %240 : vector<2x1xf32>
      %c0_92 = arith.constant 0 : index
      %c0_93 = arith.constant 0 : index
      %242 = vector.load %arg19[%c0_92, %c0_93] : memref<2x1xf32, #tpu.memory_space<vmem>>, vector<2x1xf32>
      tpu.vector_store %arg19[%c0_92, %c0_93], %241 {strides = array<i32>} : memref<2x1xf32, #tpu.memory_space<vmem>>, vector<2x1xf32>,
    } else {
    }
    return
  }
  func.func @transform_0(%arg0: i32, %arg1: i32) -> (i32, i32, i32) {
    %c0_i32 = arith.constant 0 : i32
    %c0_i32_0 = arith.constant 0 : i32
    %c0_i32_1 = arith.constant 0 : i32
    return %arg0, %c0_i32, %c0_i32_0 : i32, i32, i32
  }
  func.func @transform_1(%arg0: i32, %arg1: i32) -> (i32, i32) {
    %c0_i32 = arith.constant 0 : i32
    %c0_i32_0 = arith.constant 0 : i32
    %c0_i32_1 = arith.constant 0 : i32
    return %c0_i32, %c0_i32_0 : i32, i32
  }
  func.func @transform_2(%arg0: i32, %arg1: i32) -> (i32, i32) {
    %c0_i32 = arith.constant 0 : i32
    %c0_i32_0 = arith.constant 0 : i32
    %c0_i32_1 = arith.constant 0 : i32
    return %c0_i32, %c0_i32_0 : i32, i32
  }
  func.func @transform_3(%arg0: i32, %arg1: i32) -> (i32, i32, i32) {
    %c0_i32 = arith.constant 0 : i32
    %c0_i32_0 = arith.constant 0 : i32
    %c0_i32_1 = arith.constant 0 : i32
    return %arg1, %c0_i32, %c0_i32_0 : i32, i32, i32
  }
  func.func @transform_4(%arg0: i32, %arg1: i32) -> (i32, i32, i32) {
    %c0_i32 = arith.constant 0 : i32
    %c0_i32_0 = arith.constant 0 : i32
    %c0_i32_1 = arith.constant 0 : i32
    return %arg1, %c0_i32, %c0_i32_0 : i32, i32, i32
  }
  func.func @transform_5(%arg0: i32, %arg1: i32) -> (i32, i32, i32) {
    %c0_i32 = arith.constant 0 : i32
    %c0_i32_0 = arith.constant 0 : i32
    %c0_i32_1 = arith.constant 0 : i32
    return %arg1, %c0_i32, %c0_i32_0 : i32, i32, i32
  }
  func.func @transform_6(%arg0: i32, %arg1: i32) -> (i32, i32, i32) {
    %c0_i32 = arith.constant 0 : i32
    %c0_i32_0 = arith.constant 0 : i32
    %c0_i32_1 = arith.constant 0 : i32
    return %arg1, %c0_i32, %c0_i32_0 : i32, i32, i32
  }
  func.func @transform_7(%arg0: i32, %arg1: i32) -> (i32, i32, i32) {
    %c0_i32 = arith.constant 0 : i32
    %c0_i32_0 = arith.constant 0 : i32
    %c0_i32_1 = arith.constant 0 : i32
    return %arg1, %c0_i32, %c0_i32_0 : i32, i32, i32
  }
  func.func @transform_8(%arg0: i32, %arg1: i32) -> (i32, i32, i32) {
    %c0_i32 = arith.constant 0 : i32
    %c0_i32_0 = arith.constant 0 : i32
    %c0_i32_1 = arith.constant 0 : i32
    return %arg1, %c0_i32, %c0_i32_0 : i32, i32, i32
  }
  func.func @transform_9(%arg0: i32, %arg1: i32) -> (i32, i32, i32) {
    %c0_i32 = arith.constant 0 : i32
    %c0_i32_0 = arith.constant 0 : i32
    %c0_i32_1 = arith.constant 0 : i32
    return %arg1, %c0_i32, %c0_i32_0 : i32, i32, i32
  }
  func.func @transform_10(%arg0: i32, %arg1: i32) -> (i32, i32, i32) {
    %c0_i32 = arith.constant 0 : i32
    %c0_i32_0 = arith.constant 0 : i32
    %c0_i32_1 = arith.constant 0 : i32
    return %arg1, %c0_i32, %c0_i32_0 : i32, i32, i32
  }
  func.func @transform_11(%arg0: i32, %arg1: i32) -> (i32, i32, i32) {
    %c0_i32 = arith.constant 0 : i32
    %c0_i32_0 = arith.constant 0 : i32
    %c0_i32_1 = arith.constant 0 : i32
    return %arg1, %c0_i32, %c0_i32_0 : i32, i32, i32
  }
  func.func @transform_12(%arg0: i32, %arg1: i32) -> (i32, i32, i32) {
    %c0_i32 = arith.constant 0 : i32
    %c0_i32_0 = arith.constant 0 : i32
    %c0_i32_1 = arith.constant 0 : i32
    return %arg1, %c0_i32, %c0_i32_0 : i32, i32, i32
  }
  func.func @transform_13(%arg0: i32, %arg1: i32) -> (i32, i32, i32) {
    %c0_i32 = arith.constant 0 : i32
    %c0_i32_0 = arith.constant 0 : i32
    %c0_i32_1 = arith.constant 0 : i32
    return %arg1, %c0_i32, %c0_i32_0 : i32, i32, i32
  }
  func.func @transform_14(%arg0: i32, %arg1: i32) -> (i32, i32, i32) {
    %c0_i32 = arith.constant 0 : i32
    %c0_i32_0 = arith.constant 0 : i32
    %c0_i32_1 = arith.constant 0 : i32
    return %arg1, %c0_i32, %c0_i32_0 : i32, i32, i32
  }
  func.func @transform_15(%arg0: i32, %arg1: i32) -> (i32, i32) {
    %c0_i32 = arith.constant 0 : i32
    %c0_i32_0 = arith.constant 0 : i32
    %c0_i32_1 = arith.constant 0 : i32
    return %c0_i32, %c0_i32_0 : i32, i32
  }
  func.func @transform_16(%arg0: i32, %arg1: i32) -> (i32, i32) {
    %c0_i32 = arith.constant 0 : i32
    %c0_i32_0 = arith.constant 0 : i32
    %c0_i32_1 = arith.constant 0 : i32
    return %c0_i32, %c0_i32_0 : i32, i32
  }
  func.func @transform_17(%arg0: i32, %arg1: i32) -> (i32, i32) {
    %c0_i32 = arith.constant 0 : i32
    %c0_i32_0 = arith.constant 0 : i32
    return %arg0, %c0_i32 : i32, i32
  }
}

</mosaic_0001>

<llo_original>
// kernel: tpu_custom_call.1
$region0: #{tpu_custom_call.1}
  #allocation0 [shape = 'u32[]', space=smem, size = 0x4, offset = 0x4, fixed_abs, tag = 'smem constant byte address 0x4 - core index']
  #allocation1 [shape = 'u32[72,128]{1,0:T(1,128)}', space=vmem, size = 0x9000, scoped, tag = 'internal scratch']
  #allocation2 [shape = 'f32[16,128]{1,0:T(8,128)}', space=vmem, size = 0x2000, scoped, tag = 'scratch operand']
  #allocation3 [shape = 'f32[1,1]{1,0:T(1,128)S(1)}', space=vmem, size = 0x200, scoped, tag = 'scoped memory for tpu_custom_call.1']
  %s0 = inlined_call_operand.vmem [shape: f32[2,8,4], index: 0, kind: input, shape index: {}]
  %s1 = inlined_call_operand.vmem [shape: f32[8,128], index: 1, kind: input, shape index: {}]
  %s2 = inlined_call_operand.hbm [shape: bf16[128,128], index: 2, kind: input, shape index: {}]
  %s3 = inlined_call_operand.hbm [shape: bf16[2,128,384], index: 3, kind: input, shape index: {}]
  %s4 = inlined_call_operand.vmem [shape: f32[2,1,384], index: 4, kind: input, shape index: {}]
  %s5 = inlined_call_operand.hbm [shape: bf16[2,128,128], index: 5, kind: input, shape index: {}]
  %s6 = inlined_call_operand.vmem [shape: f32[2,1,128], index: 6, kind: input, shape index: {}]
  %s7 = inlined_call_operand.vmem [shape: f32[2,1,128], index: 7, kind: input, shape index: {}]
  %s8 = inlined_call_operand.vmem [shape: f32[2,1,128], index: 8, kind: input, shape index: {}]
  %s9 = inlined_call_operand.vmem [shape: f32[2,1,128], index: 9, kind: input, shape index: {}]
  %s10 = inlined_call_operand.vmem [shape: f32[2,1,128], index: 10, kind: input, shape index: {}]
  %s11 = inlined_call_operand.hbm [shape: bf16[2,128,256], index: 11, kind: input, shape index: {}]
  %s12 = inlined_call_operand.vmem [shape: f32[2,1,256], index: 12, kind: input, shape index: {}]
  %s13 = inlined_call_operand.hbm [shape: bf16[2,256,128], index: 13, kind: input, shape index: {}]
  %s14 = inlined_call_operand.vmem [shape: f32[2,1,128], index: 14, kind: input, shape index: {}]
  %s15 = inlined_call_operand.vmem [shape: f32[1,128], index: 15, kind: input, shape index: {}]
  %s16 = inlined_call_operand.<no memory space> [shape: f32[1,1], index: 16, kind: input, shape index: {}]
  %s17 = inlined_call_operand.vmem [shape: f32[2,1], index: 17, kind: output, shape index: {}]
  %s18 = sld [smem:[#allocation0]]
  $region129: #{tpu_custom_call.1} parent=0
    _
  %s20 = ssub.s32 1, %s18
  %s21 = scalar_select 0, %s20, %s18
  %v22 = vstv %s16
  %23 = vst [vmem:[#allocation3] sm:$0x1] %v22
  $region1: #{tpu_custom_call.1} parent=0
    #allocation4 [shape = 'u8[32768]{0}', space=vmem, size = 0x8000, scoped, tag = 'input window, operand 2, single buffered']
    #allocation5 [shape = 's32[2]{0}', space=sflag, size = 0x8, scoped, tag = 'scoped memory for tpu_custom_call.1']
    #allocation6 [shape = 'u8[196608]{0}', space=vmem, size = 0x30000, scoped, tag = 'input window, operand 3']
    #allocation7 [shape = 's32[2]{0}', space=sflag, size = 0x8, scoped, tag = 'scoped memory for tpu_custom_call.1']
    #allocation8 [shape = 'u8[65536]{0}', space=vmem, size = 0x10000, scoped, tag = 'input window, operand 5']
    #allocation9 [shape = 'u8[131072]{0}', space=vmem, size = 0x20000, scoped, tag = 'input window, operand 11']
    #allocation10 [shape = 's32[2]{0}', space=sflag, size = 0x8, scoped, tag = 'scoped memory for tpu_custom_call.1']
    #allocation11 [shape = 'u8[131072]{0}', space=vmem, size = 0x20000, scoped, tag = 'input window, operand 13']
    %24 = vsyncpa [#allocation5], 0
    %25 = vsyncpa [#allocation7], 0
    %s26 = scalar_lea.sflag [#allocation7], 1
    %27 = vsyncpa %s26, 0
    %28 = vsyncpa [#allocation10], 0
    %s29 = scalar_lea.sflag [#allocation10], 1
    %30 = vsyncpa %s29, 0
    loop: start=0, step=1, limit=4
    $region2: #{tpu_custom_call.1} parent=1 // loop_pre_header
      _
    $region3: #{tpu_custom_call.1} parent=1 // loop_header
      %s32 = sphi 0, %s36
      %p33 = scmp.ge.s32.totalorder %s32, 4
      %s39 = sphi 0, %s51
      %s40 = sphi 0, %s47
      %s41 = sphi 0, %s39
      %s42 = sphi 0, %s40
      %s43 = sphi 0, %s41
      %s44 = sphi 0, %s42
      %s54 = sphi 0, %s56
      %s57 = sphi 0, %s54
      %s58 = sphi 0, %s57
      %s74 = sphi 0, %s58
      %s78 = sphi 0, %s78
      %s80 = sphi 0, %s78
      %s81 = sphi 0, %s80
      %s95 = sphi 0, %s81
      %s99 = sphi 0, %s99
      %s101 = sphi 0, %s99
      %s102 = sphi 0, %s101
      %s116 = sphi 0, %s102
      %s122 = sphi 0, %s124
      %s125 = sphi 0, %s122
      %s126 = sphi 0, %s125
      %s142 = sphi 0, %s126
      %s148 = sphi 0, %s150
      %s151 = sphi 0, %s148
      %s152 = sphi 0, %s151
      %s168 = sphi 0, %s152
      %s174 = sphi 0, %s176
      %s177 = sphi 0, %s174
      %s178 = sphi 0, %s177
      %s194 = sphi 0, %s178
      %s200 = sphi 0, %s202
      %s203 = sphi 0, %s200
      %s204 = sphi 0, %s203
      %s220 = sphi 0, %s204
      %s226 = sphi 0, %s228
      %s229 = sphi 0, %s226
      %s230 = sphi 0, %s229
      %s246 = sphi 0, %s230
      %s252 = sphi 0, %s254
      %s255 = sphi 0, %s252
      %s256 = sphi 0, %s255
      %s272 = sphi 0, %s256
      %s278 = sphi 0, %s280
      %s281 = sphi 0, %s278
      %s282 = sphi 0, %s281
      %s298 = sphi 0, %s282
      %s304 = sphi 0, %s306
      %s307 = sphi 0, %s304
      %s308 = sphi 0, %s307
      %s324 = sphi 0, %s308
      %s330 = sphi 0, %s332
      %s333 = sphi 0, %s330
      %s334 = sphi 0, %s333
      %s350 = sphi 0, %s334
      %s356 = sphi 0, %s358
      %s359 = sphi 0, %s356
      %s360 = sphi 0, %s359
      %s376 = sphi 0, %s360
      %s382 = sphi 0, %s384
      %s385 = sphi 0, %s382
      %s386 = sphi 0, %s385
      %s402 = sphi 0, %s386
      %s408 = sphi 0, %s410
      %s411 = sphi 0, %s408
      %s412 = sphi 0, %s411
      %s428 = sphi 0, %s412
      %s432 = sphi 0, %s432
      %s434 = sphi 0, %s432
      %s435 = sphi 0, %s434
      %s449 = sphi 0, %s435
      %s453 = sphi 0, %s453
      %s455 = sphi 0, %s453
      %s456 = sphi 0, %s455
      %s470 = sphi 0, %s456
      %s476 = sphi 0, %s478
      %s479 = sphi 0, %s476
      %s480 = sphi 0, %s479
      %s496 = sphi 0, %s480
    $region4: #{tpu_custom_call.1} parent=1 // loop_header_branch
      %35 = sbr.rel (%p33) target = $region8
    $region5: #{tpu_custom_call.1} parent=1 // loop_body
      %s37 = ssub.s32 %s32, 1
      %s38 = ssub.s32 %s32, 2
      %s45 = sadd.s32 1, %s40
      %p46 = scmp.ge.s32.totalorder %s45, 2
      %s47 = scalar_select %p46, 0, %s45
      %s48 = sadd.s32 1, %s39
      %s49 = scalar_select %p46, %s48, %s39
      %p50 = scmp.ge.s32.totalorder %s49, 1
      %s51 = scalar_select %p50, 0, %s49
      %s52 = ssub.s32 %s39, %s51
      %p53 = scmp.eq.s32.totalorder %s52, 0
      %s55 = sadd.s32 %s54, 1
      %s56 = scalar_select %p53, %s54, %s55
      %p59 = pneg %p53
      %p60 = scmp.eq.s32.totalorder %s32, 1
      %p61 = por %p59, %p60
      %p62 = scmp.ne.s32.totalorder %s54, %s57
      %p63 = scmp.eq.s32.totalorder %s32, 0
      %p64 = por %p62, %p63
      %p65 = scmp.ne.s32.totalorder %s54, %s57
      %p66 = scmp.eq.s32.totalorder %s37, 1
      %p67 = por %p65, %p66
      %p68 = scmp.ne.s32.totalorder %s57, %s58
      %p69 = scmp.eq.s32.totalorder %s37, 0
      %p70 = por %p68, %p69
      %p71 = scmp.ne.s32.totalorder %s57, %s58
      %p72 = scmp.eq.s32.totalorder %s38, 1
      %p73 = por %p71, %p72
      %p75 = scmp.ne.s32.totalorder %s58, %s74
      %p76 = scmp.eq.s32.totalorder %s38, 0
      %p77 = por %p75, %p76
      %s79 = sadd.s32 %s78, 1
      %p82 = scmp.eq.s32.totalorder %s32, 1
      %p83 = scmp.ne.s32.totalorder %s78, %s80
      %p84 = scmp.eq.s32.totalorder %s32, 0
      %p85 = por %p83, %p84
      %p86 = scmp.ne.s32.totalorder %s78, %s80
      %p87 = scmp.eq.s32.totalorder %s37, 1
      %p88 = por %p86, %p87
      %p89 = scmp.ne.s32.totalorder %s80, %s81
      %p90 = scmp.eq.s32.totalorder %s37, 0
      %p91 = por %p89, %p90
      %p92 = scmp.ne.s32.totalorder %s80, %s81
      %p93 = scmp.eq.s32.totalorder %s38, 1
      %p94 = por %p92, %p93
      %p96 = scmp.ne.s32.totalorder %s81, %s95
      %p97 = scmp.eq.s32.totalorder %s38, 0
      %p98 = por %p96, %p97
      %s100 = sadd.s32 %s99, 1
      %p103 = scmp.eq.s32.totalorder %s32, 1
      %p104 = scmp.ne.s32.totalorder %s99, %s101
      %p105 = scmp.eq.s32.totalorder %s32, 0
      %p106 = por %p104, %p105
      %p107 = scmp.ne.s32.totalorder %s99, %s101
      %p108 = scmp.eq.s32.totalorder %s37, 1
      %p109 = por %p107, %p108
      %p110 = scmp.ne.s32.totalorder %s101, %s102
      %p111 = scmp.eq.s32.totalorder %s37, 0
      %p112 = por %p110, %p111
      %p113 = scmp.ne.s32.totalorder %s101, %s102
      %p114 = scmp.eq.s32.totalorder %s38, 1
      %p115 = por %p113, %p114
      %p117 = scmp.ne.s32.totalorder %s102, %s116
      %p118 = scmp.eq.s32.totalorder %s38, 0
      %p119 = por %p117, %p118
      %s120 = ssub.s32 %s40, %s47
      %p121 = scmp.eq.s32.totalorder %s120, 0
      %s123 = sadd.s32 %s122, 1
      %s124 = scalar_select %p121, %s122, %s123
      %p127 = pneg %p121
      %p128 = scmp.eq.s32.totalorder %s32, 1
      %p129 = por %p127, %p128
      %p130 = scmp.ne.s32.totalorder %s122, %s125
      %p131 = scmp.eq.s32.totalorder %s32, 0
      %p132 = por %p130, %p131
      %p133 = scmp.ne.s32.totalorder %s122, %s125
      %p134 = scmp.eq.s32.totalorder %s37, 1
      %p135 = por %p133, %p134
      %p136 = scmp.ne.s32.totalorder %s125, %s126
      %p137 = scmp.eq.s32.totalorder %s37, 0
      %p138 = por %p136, %p137
      %p139 = scmp.ne.s32.totalorder %s125, %s126
      %p140 = scmp.eq.s32.totalorder %s38, 1
      %p141 = por %p139, %p140
      %p143 = scmp.ne.s32.totalorder %s126, %s142
      %p144 = scmp.eq.s32.totalorder %s38, 0
      %p145 = por %p143, %p144
      %s146 = ssub.s32 %s40, %s47
      %p147 = scmp.eq.s32.totalorder %s146, 0
      %s149 = sadd.s32 %s148, 1
      %s150 = scalar_select %p147, %s148, %s149
      %p153 = pneg %p147
      %p154 = scmp.eq.s32.totalorder %s32, 1
      %p155 = por %p153, %p154
      %p156 = scmp.ne.s32.totalorder %s148, %s151
      %p157 = scmp.eq.s32.totalorder %s32, 0
      %p158 = por %p156, %p157
      %p159 = scmp.ne.s32.totalorder %s148, %s151
      %p160 = scmp.eq.s32.totalorder %s37, 1
      %p161 = por %p159, %p160
      %p162 = scmp.ne.s32.totalorder %s151, %s152
      %p163 = scmp.eq.s32.totalorder %s37, 0
      %p164 = por %p162, %p163
      %p165 = scmp.ne.s32.totalorder %s151, %s152
      %p166 = scmp.eq.s32.totalorder %s38, 1
      %p167 = por %p165, %p166
      %p169 = scmp.ne.s32.totalorder %s152, %s168
      %p170 = scmp.eq.s32.totalorder %s38, 0
      %p171 = por %p169, %p170
      %s172 = ssub.s32 %s40, %s47
      %p173 = scmp.eq.s32.totalorder %s172, 0
      %s175 = sadd.s32 %s174, 1
      %s176 = scalar_select %p173, %s174, %s175
      %p179 = pneg %p173
      %p180 = scmp.eq.s32.totalorder %s32, 1
      %p181 = por %p179, %p180
      %p182 = scmp.ne.s32.totalorder %s174, %s177
      %p183 = scmp.eq.s32.totalorder %s32, 0
      %p184 = por %p182, %p183
      %p185 = scmp.ne.s32.totalorder %s174, %s177
      %p186 = scmp.eq.s32.totalorder %s37, 1
      %p187 = por %p185, %p186
      %p188 = scmp.ne.s32.totalorder %s177, %s178
      %p189 = scmp.eq.s32.totalorder %s37, 0
      %p190 = por %p188, %p189
      %p191 = scmp.ne.s32.totalorder %s177, %s178
      %p192 = scmp.eq.s32.totalorder %s38, 1
      %p193 = por %p191, %p192
      %p195 = scmp.ne.s32.totalorder %s178, %s194
      %p196 = scmp.eq.s32.totalorder %s38, 0
      %p197 = por %p195, %p196
      %s198 = ssub.s32 %s40, %s47
      %p199 = scmp.eq.s32.totalorder %s198, 0
      %s201 = sadd.s32 %s200, 1
      %s202 = scalar_select %p199, %s200, %s201
      %p205 = pneg %p199
      %p206 = scmp.eq.s32.totalorder %s32, 1
      %p207 = por %p205, %p206
      %p208 = scmp.ne.s32.totalorder %s200, %s203
      %p209 = scmp.eq.s32.totalorder %s32, 0
      %p210 = por %p208, %p209
      %p211 = scmp.ne.s32.totalorder %s200, %s203
      %p212 = scmp.eq.s32.totalorder %s37, 1
      %p213 = por %p211, %p212
      %p214 = scmp.ne.s32.totalorder %s203, %s204
      %p215 = scmp.eq.s32.totalorder %s37, 0
      %p216 = por %p214, %p215
      %p217 = scmp.ne.s32.totalorder %s203, %s204
      %p218 = scmp.eq.s32.totalorder %s38, 1
      %p219 = por %p217, %p218
      %p221 = scmp.ne.s32.totalorder %s204, %s220
      %p222 = scmp.eq.s32.totalorder %s38, 0
      %p223 = por %p221, %p222
      %s224 = ssub.s32 %s40, %s47
      %p225 = scmp.eq.s32.totalorder %s224, 0
      %s227 = sadd.s32 %s226, 1
      %s228 = scalar_select %p225, %s226, %s227
      %p231 = pneg %p225
      %p232 = scmp.eq.s32.totalorder %s32, 1
      %p233 = por %p231, %p232
      %p234 = scmp.ne.s32.totalorder %s226, %s229
      %p235 = scmp.eq.s32.totalorder %s32, 0
      %p236 = por %p234, %p235
      %p237 = scmp.ne.s32.totalorder %s226, %s229
      %p238 = scmp.eq.s32.totalorder %s37, 1
      %p239 = por %p237, %p238
      %p240 = scmp.ne.s32.totalorder %s229, %s230
      %p241 = scmp.eq.s32.totalorder %s37, 0
      %p242 = por %p240, %p241
      %p243 = scmp.ne.s32.totalorder %s229, %s230
      %p244 = scmp.eq.s32.totalorder %s38, 1
      %p245 = por %p243, %p244
      %p247 = scmp.ne.s32.totalorder %s230, %s246
      %p248 = scmp.eq.s32.totalorder %s38, 0
      %p249 = por %p247, %p248
      %s250 = ssub.s32 %s40, %s47
      %p251 = scmp.eq.s32.totalorder %s250, 0
      %s253 = sadd.s32 %s252, 1
      %s254 = scalar_select %p251, %s252, %s253
      %p257 = pneg %p251
      %p258 = scmp.eq.s32.totalorder %s32, 1
      %p259 = por %p257, %p258
      %p260 = scmp.ne.s32.totalorder %s252, %s255
      %p261 = scmp.eq.s32.totalorder %s32, 0
      %p262 = por %p260, %p261
      %p263 = scmp.ne.s32.totalorder %s252, %s255
      %p264 = scmp.eq.s32.totalorder %s37, 1
      %p265 = por %p263, %p264
      %p266 = scmp.ne.s32.totalorder %s255, %s256
      %p267 = scmp.eq.s32.totalorder %s37, 0
      %p268 = por %p266, %p267
      %p269 = scmp.ne.s32.totalorder %s255, %s256
      %p270 = scmp.eq.s32.totalorder %s38, 1
      %p271 = por %p269, %p270
      %p273 = scmp.ne.s32.totalorder %s256, %s272
      %p274 = scmp.eq.s32.totalorder %s38, 0
      %p275 = por %p273, %p274
      %s276 = ssub.s32 %s40, %s47
      %p277 = scmp.eq.s32.totalorder %s276, 0
      %s279 = sadd.s32 %s278, 1
      %s280 = scalar_select %p277, %s278, %s279
      %p283 = pneg %p277
      %p284 = scmp.eq.s32.totalorder %s32, 1
      %p285 = por %p283, %p284
      %p286 = scmp.ne.s32.totalorder %s278, %s281
      %p287 = scmp.eq.s32.totalorder %s32, 0
      %p288 = por %p286, %p287
      %p289 = scmp.ne.s32.totalorder %s278, %s281
      %p290 = scmp.eq.s32.totalorder %s37, 1
      %p291 = por %p289, %p290
      %p292 = scmp.ne.s32.totalorder %s281, %s282
      %p293 = scmp.eq.s32.totalorder %s37, 0
      %p294 = por %p292, %p293
      %p295 = scmp.ne.s32.totalorder %s281, %s282
      %p296 = scmp.eq.s32.totalorder %s38, 1
      %p297 = por %p295, %p296
      %p299 = scmp.ne.s32.totalorder %s282, %s298
      %p300 = scmp.eq.s32.totalorder %s38, 0
      %p301 = por %p299, %p300
      %s302 = ssub.s32 %s40, %s47
      %p303 = scmp.eq.s32.totalorder %s302, 0
      %s305 = sadd.s32 %s304, 1
      %s306 = scalar_select %p303, %s304, %s305
      %p309 = pneg %p303
      %p310 = scmp.eq.s32.totalorder %s32, 1
      %p311 = por %p309, %p310
      %p312 = scmp.ne.s32.totalorder %s304, %s307
      %p313 = scmp.eq.s32.totalorder %s32, 0
      %p314 = por %p312, %p313
      %p315 = scmp.ne.s32.totalorder %s304, %s307
      %p316 = scmp.eq.s32.totalorder %s37, 1
      %p317 = por %p315, %p316
      %p318 = scmp.ne.s32.totalorder %s307, %s308
      %p319 = scmp.eq.s32.totalorder %s37, 0
      %p320 = por %p318, %p319
      %p321 = scmp.ne.s32.totalorder %s307, %s308
      %p322 = scmp.eq.s32.totalorder %s38, 1
      %p323 = por %p321, %p322
      %p325 = scmp.ne.s32.totalorder %s308, %s324
      %p326 = scmp.eq.s32.totalorder %s38, 0
      %p327 = por %p325, %p326
      %s328 = ssub.s32 %s40, %s47
      %p329 = scmp.eq.s32.totalorder %s328, 0
      %s331 = sadd.s32 %s330, 1
      %s332 = scalar_select %p329, %s330, %s331
      %p335 = pneg %p329
      %p336 = scmp.eq.s32.totalorder %s32, 1
      %p337 = por %p335, %p336
      %p338 = scmp.ne.s32.totalorder %s330, %s333
      %p339 = scmp.eq.s32.totalorder %s32, 0
      %p340 = por %p338, %p339
      %p341 = scmp.ne.s32.totalorder %s330, %s333
      %p342 = scmp.eq.s32.totalorder %s37, 1
      %p343 = por %p341, %p342
      %p344 = scmp.ne.s32.totalorder %s333, %s334
      %p345 = scmp.eq.s32.totalorder %s37, 0
      %p346 = por %p344, %p345
      %p347 = scmp.ne.s32.totalorder %s333, %s334
      %p348 = scmp.eq.s32.totalorder %s38, 1
      %p349 = por %p347, %p348
      %p351 = scmp.ne.s32.totalorder %s334, %s350
      %p352 = scmp.eq.s32.totalorder %s38, 0
      %p353 = por %p351, %p352
      %s354 = ssub.s32 %s40, %s47
      %p355 = scmp.eq.s32.totalorder %s354, 0
      %s357 = sadd.s32 %s356, 1
      %s358 = scalar_select %p355, %s356, %s357
      %p361 = pneg %p355
      %p362 = scmp.eq.s32.totalorder %s32, 1
      %p363 = por %p361, %p362
      %p364 = scmp.ne.s32.totalorder %s356, %s359
      %p365 = scmp.eq.s32.totalorder %s32, 0
      %p366 = por %p364, %p365
      %p367 = scmp.ne.s32.totalorder %s356, %s359
      %p368 = scmp.eq.s32.totalorder %s37, 1
      %p369 = por %p367, %p368
      %p370 = scmp.ne.s32.totalorder %s359, %s360
      %p371 = scmp.eq.s32.totalorder %s37, 0
      %p372 = por %p370, %p371
      %p373 = scmp.ne.s32.totalorder %s359, %s360
      %p374 = scmp.eq.s32.totalorder %s38, 1
      %p375 = por %p373, %p374
      %p377 = scmp.ne.s32.totalorder %s360, %s376
      %p378 = scmp.eq.s32.totalorder %s38, 0
      %p379 = por %p377, %p378
      %s380 = ssub.s32 %s40, %s47
      %p381 = scmp.eq.s32.totalorder %s380, 0
      %s383 = sadd.s32 %s382, 1
      %s384 = scalar_select %p381, %s382, %s383
      %p387 = pneg %p381
      %p388 = scmp.eq.s32.totalorder %s32, 1
      %p389 = por %p387, %p388
      %p390 = scmp.ne.s32.totalorder %s382, %s385
      %p391 = scmp.eq.s32.totalorder %s32, 0
      %p392 = por %p390, %p391
      %p393 = scmp.ne.s32.totalorder %s382, %s385
      %p394 = scmp.eq.s32.totalorder %s37, 1
      %p395 = por %p393, %p394
      %p396 = scmp.ne.s32.totalorder %s385, %s386
      %p397 = scmp.eq.s32.totalorder %s37, 0
      %p398 = por %p396, %p397
      %p399 = scmp.ne.s32.totalorder %s385, %s386
      %p400 = scmp.eq.s32.totalorder %s38, 1
      %p401 = por %p399, %p400
      %p403 = scmp.ne.s32.totalorder %s386, %s402
      %p404 = scmp.eq.s32.totalorder %s38, 0
      %p405 = por %p403, %p404
      %s406 = ssub.s32 %s40, %s47
      %p407 = scmp.eq.s32.totalorder %s406, 0
      %s409 = sadd.s32 %s408, 1
      %s410 = scalar_select %p407, %s408, %s409
      %p413 = pneg %p407
      %p414 = scmp.eq.s32.totalorder %s32, 1
      %p415 = por %p413, %p414
      %p416 = scmp.ne.s32.totalorder %s408, %s411
      %p417 = scmp.eq.s32.totalorder %s32, 0
      %p418 = por %p416, %p417
      %p419 = scmp.ne.s32.totalorder %s408, %s411
      %p420 = scmp.eq.s32.totalorder %s37, 1
      %p421 = por %p419, %p420
      %p422 = scmp.ne.s32.totalorder %s411, %s412
      %p423 = scmp.eq.s32.totalorder %s37, 0
      %p424 = por %p422, %p423
      %p425 = scmp.ne.s32.totalorder %s411, %s412
      %p426 = scmp.eq.s32.totalorder %s38, 1
      %p427 = por %p425, %p426
      %p429 = scmp.ne.s32.totalorder %s412, %s428
      %p430 = scmp.eq.s32.totalorder %s38, 0
      %p431 = por %p429, %p430
      %s433 = sadd.s32 %s432, 1
      %p436 = scmp.eq.s32.totalorder %s32, 1
      %p437 = scmp.ne.s32.totalorder %s432, %s434
      %p438 = scmp.eq.s32.totalorder %s32, 0
      %p439 = por %p437, %p438
      %p440 = scmp.ne.s32.totalorder %s432, %s434
      %p441 = scmp.eq.s32.totalorder %s37, 1
      %p442 = por %p440, %p441
      %p443 = scmp.ne.s32.totalorder %s434, %s435
      %p444 = scmp.eq.s32.totalorder %s37, 0
      %p445 = por %p443, %p444
      %p446 = scmp.ne.s32.totalorder %s434, %s435
      %p447 = scmp.eq.s32.totalorder %s38, 1
      %p448 = por %p446, %p447
      %p450 = scmp.ne.s32.totalorder %s435, %s449
      %p451 = scmp.eq.s32.totalorder %s38, 0
      %p452 = por %p450, %p451
      %s454 = sadd.s32 %s453, 1
      %p457 = scmp.eq.s32.totalorder %s32, 1
      %p458 = scmp.ne.s32.totalorder %s453, %s455
      %p459 = scmp.eq.s32.totalorder %s32, 0
      %p460 = por %p458, %p459
      %p461 = scmp.ne.s32.totalorder %s453, %s455
      %p462 = scmp.eq.s32.totalorder %s37, 1
      %p463 = por %p461, %p462
      %p464 = scmp.ne.s32.totalorder %s455, %s456
      %p465 = scmp.eq.s32.totalorder %s37, 0
      %p466 = por %p464, %p465
      %p467 = scmp.ne.s32.totalorder %s455, %s456
      %p468 = scmp.eq.s32.totalorder %s38, 1
      %p469 = por %p467, %p468
      %p471 = scmp.ne.s32.totalorder %s456, %s470
      %p472 = scmp.eq.s32.totalorder %s38, 0
      %p473 = por %p471, %p472
      %s474 = ssub.s32 %s39, %s51
      %p475 = scmp.eq.s32.totalorder %s474, 0
      %s477 = sadd.s32 %s476, 1
      %s478 = scalar_select %p475, %s476, %s477
      %p481 = pneg %p475
      %p482 = scmp.eq.s32.totalorder %s32, 1
      %p483 = por %p481, %p482
      %p484 = scmp.ne.s32.totalorder %s476, %s479
      %p485 = scmp.eq.s32.totalorder %s32, 0
      %p486 = por %p484, %p485
      %p487 = scmp.ne.s32.totalorder %s476, %s479
      %p488 = scmp.eq.s32.totalorder %s37, 1
      %p489 = por %p487, %p488
      %p490 = scmp.ne.s32.totalorder %s479, %s480
      %p491 = scmp.eq.s32.totalorder %s37, 0
      %p492 = por %p490, %p491
      %p493 = scmp.ne.s32.totalorder %s479, %s480
      %p494 = scmp.eq.s32.totalorder %s38, 1
      %p495 = por %p493, %p494
      %p497 = scmp.ne.s32.totalorder %s480, %s496
      %p498 = scmp.eq.s32.totalorder %s38, 0
      %p499 = por %p497, %p498
      %p500 = scmp.le.s32.totalorder 1, %s32
      %p501 = scmp.lt.s32.totalorder %s32, 3
      %p502 = pnand %p500, %p501
      %p503 = pneg %p502
      // Predicated region
      $region9: #{tpu_custom_call.1} parent=5 // pred_check
        _
      $region10: #{tpu_custom_call.1} parent=5 // pred_check_branch
        %505 = sbr.rel (%p502) target = $region12
      $region11: #{tpu_custom_call.1} parent=5 // pred_region
        %s506 = ssub.s32 %s32, 1
        // Predicated region
        $region13: #{tpu_custom_call.1} parent=11 // pred_check
          %p507 = pneg %p70
        $region14: #{tpu_custom_call.1} parent=11 // pred_check_branch
          %509 = sbr.rel (%p507) target = $region16
        $region15: #{tpu_custom_call.1} parent=11 // pred_region
          %s510 = smul.u32 2, %s41
          %p511 = scmp.lt.s32.totalorder %s510, 1
          %s512 = scalar_select %p511, %s510, 1
          %s513 = smul.addr %s512, 8
          %s514 = scalar_lea.vmem %s0, %s513
          %s515 = smul.u32 2, %s41
        $region16: #{tpu_custom_call.1} parent=11 // pred_fallthru
          _
        // Predicated region
        $region17: #{tpu_custom_call.1} parent=11 // pred_check
          %p516 = pneg %p91
        $region18: #{tpu_custom_call.1} parent=11 // pred_check_branch
          %518 = sbr.rel (%p516) target = $region20
        $region19: #{tpu_custom_call.1} parent=11 // pred_region
          _
        $region20: #{tpu_custom_call.1} parent=11 // pred_fallthru
          _
        // Predicated region
        $region21: #{tpu_custom_call.1} parent=11 // pred_check
          %p519 = pneg %p112
        $region22: #{tpu_custom_call.1} parent=11 // pred_check_branch
          %521 = sbr.rel (%p519) target = $region24
        $region23: #{tpu_custom_call.1} parent=11 // pred_region
          %523 = vsyncadd [#allocation5], 0
          %s524 = sshll.u32 %s2, 4
          %s525 = int_to_ptr.hbm [resolvable:$true] %s524
          %s526 = sshll.u32 [#allocation4], 4
          %s527 = int_to_ptr.vmem [resolvable:$true] %s526
          %532 = dma.hbm_to_vmem [thread:$0]  %s525, 1024, %s527, [#allocation5], 64, 64, 4
        $region24: #{tpu_custom_call.1} parent=11 // pred_fallthru
          _
        // Predicated region
        $region25: #{tpu_custom_call.1} parent=11 // pred_check
          %p533 = pneg %p445
        $region26: #{tpu_custom_call.1} parent=11 // pred_check_branch
          %535 = sbr.rel (%p533) target = $region28
        $region27: #{tpu_custom_call.1} parent=11 // pred_region
          _
        $region28: #{tpu_custom_call.1} parent=11 // pred_fallthru
          _
        // Predicated region
        $region29: #{tpu_custom_call.1} parent=11 // pred_check
          %p536 = pneg %p466
        $region30: #{tpu_custom_call.1} parent=11 // pred_check_branch
          %538 = sbr.rel (%p536) target = $region32
        $region31: #{tpu_custom_call.1} parent=11 // pred_region
          _
        $region32: #{tpu_custom_call.1} parent=11 // pred_fallthru
          _
      $region12: #{tpu_custom_call.1} parent=5 // pred_fallthru
        _
      %p539 = scmp.lt.s32.totalorder %s32, 2
      // Predicated region
      $region33: #{tpu_custom_call.1} parent=5 // pred_check
        %p540 = pneg %p539
      $region34: #{tpu_custom_call.1} parent=5 // pred_check_branch
        %542 = sbr.rel (%p540) target = $region36
      $region35: #{tpu_custom_call.1} parent=5 // pred_region
        // Predicated region
        $region37: #{tpu_custom_call.1} parent=35 // pred_check
          %p543 = pneg %p132
        $region38: #{tpu_custom_call.1} parent=35 // pred_check_branch
          %545 = sbr.rel (%p543) target = $region40
        $region39: #{tpu_custom_call.1} parent=35 // pred_region
          %s546 = sand.u32 %s32, 1
          %s547 = scalar_lea.sflag [#allocation7], %s546
          %s548 = sand.u32 %s122, 1
          %s549 = smul.addr %s548, 192
          %s550 = scalar_lea.vmem [#allocation6], %s549
          %552 = vsyncadd %s547, 0
          %s553 = smul.addr %s40, 48
          %s554 = smul.addr %s553, 4
          %s555 = scalar_lea.hbm %s3, %s554
          %s556 = sshll.u32 %s555, 4
          %s557 = int_to_ptr.hbm [resolvable:$true] %s556
          %s558 = sshll.u32 %s550, 4
          %s559 = int_to_ptr.vmem [resolvable:$true] %s558
          %564 = dma.hbm_to_vmem [thread:$0]  %s557, 3072, %s559, %s547, 192, 192, 12
        $region40: #{tpu_custom_call.1} parent=35 // pred_fallthru
          _
        // Predicated region
        $region41: #{tpu_custom_call.1} parent=35 // pred_check
          %p565 = pneg %p158
        $region42: #{tpu_custom_call.1} parent=35 // pred_check_branch
          %567 = sbr.rel (%p565) target = $region44
        $region43: #{tpu_custom_call.1} parent=35 // pred_region
          %p568 = scmp.lt.s32.totalorder %s40, 1
          %s569 = scalar_select %p568, %s40, 1
          %s570 = smul.addr %s569, 3
          %s571 = scalar_lea.vmem %s4, %s570
        $region44: #{tpu_custom_call.1} parent=35 // pred_fallthru
          _
        // Predicated region
        $region45: #{tpu_custom_call.1} parent=35 // pred_check
          %p572 = pneg %p184
        $region46: #{tpu_custom_call.1} parent=35 // pred_check_branch
          %574 = sbr.rel (%p572) target = $region48
        $region47: #{tpu_custom_call.1} parent=35 // pred_region
          %s575 = sand.u32 %s32, 1
          %s576 = scalar_lea.sflag [#allocation7], %s575
          %s577 = sand.u32 %s174, 1
          %s578 = smul.addr %s577, 64
          %s579 = scalar_lea.vmem [#allocation8], %s578
          %581 = vsyncadd %s576, 0
          %s582 = smul.addr %s40, 16
          %s583 = smul.addr %s582, 4
          %s584 = scalar_lea.hbm %s5, %s583
          %s585 = sshll.u32 %s584, 4
          %s586 = int_to_ptr.hbm [resolvable:$true] %s585
          %s587 = sshll.u32 %s579, 4
          %s588 = int_to_ptr.vmem [resolvable:$true] %s587
          %593 = dma.hbm_to_vmem [thread:$0]  %s586, 1024, %s588, %s576, 64, 64, 4
        $region48: #{tpu_custom_call.1} parent=35 // pred_fallthru
          _
        // Predicated region
        $region49: #{tpu_custom_call.1} parent=35 // pred_check
          %p594 = pneg %p210
        $region50: #{tpu_custom_call.1} parent=35 // pred_check_branch
          %596 = sbr.rel (%p594) target = $region52
        $region51: #{tpu_custom_call.1} parent=35 // pred_region
          %p597 = scmp.lt.s32.totalorder %s40, 1
          %s598 = scalar_select %p597, %s40, 1
          %s599 = scalar_lea.vmem %s6, %s598
        $region52: #{tpu_custom_call.1} parent=35 // pred_fallthru
          _
        // Predicated region
        $region53: #{tpu_custom_call.1} parent=35 // pred_check
          %p600 = pneg %p236
        $region54: #{tpu_custom_call.1} parent=35 // pred_check_branch
          %602 = sbr.rel (%p600) target = $region56
        $region55: #{tpu_custom_call.1} parent=35 // pred_region
          %p603 = scmp.lt.s32.totalorder %s40, 1
          %s604 = scalar_select %p603, %s40, 1
          %s605 = scalar_lea.vmem %s7, %s604
        $region56: #{tpu_custom_call.1} parent=35 // pred_fallthru
          _
        // Predicated region
        $region57: #{tpu_custom_call.1} parent=35 // pred_check
          %p606 = pneg %p262
        $region58: #{tpu_custom_call.1} parent=35 // pred_check_branch
          %608 = sbr.rel (%p606) target = $region60
        $region59: #{tpu_custom_call.1} parent=35 // pred_region
          %p609 = scmp.lt.s32.totalorder %s40, 1
          %s610 = scalar_select %p609, %s40, 1
          %s611 = scalar_lea.vmem %s8, %s610
        $region60: #{tpu_custom_call.1} parent=35 // pred_fallthru
          _
        // Predicated region
        $region61: #{tpu_custom_call.1} parent=35 // pred_check
          %p612 = pneg %p288
        $region62: #{tpu_custom_call.1} parent=35 // pred_check_branch
          %614 = sbr.rel (%p612) target = $region64
        $region63: #{tpu_custom_call.1} parent=35 // pred_region
          %p615 = scmp.lt.s32.totalorder %s40, 1
          %s616 = scalar_select %p615, %s40, 1
          %s617 = scalar_lea.vmem %s9, %s616
        $region64: #{tpu_custom_call.1} parent=35 // pred_fallthru
          _
        // Predicated region
        $region65: #{tpu_custom_call.1} parent=35 // pred_check
          %p618 = pneg %p314
        $region66: #{tpu_custom_call.1} parent=35 // pred_check_branch
          %620 = sbr.rel (%p618) target = $region68
        $region67: #{tpu_custom_call.1} parent=35 // pred_region
          %p621 = scmp.lt.s32.totalorder %s40, 1
          %s622 = scalar_select %p621, %s40, 1
          %s623 = scalar_lea.vmem %s10, %s622
        $region68: #{tpu_custom_call.1} parent=35 // pred_fallthru
          _
        // Predicated region
        $region69: #{tpu_custom_call.1} parent=35 // pred_check
          %p624 = pneg %p340
        $region70: #{tpu_custom_call.1} parent=35 // pred_check_branch
          %626 = sbr.rel (%p624) target = $region72
        $region71: #{tpu_custom_call.1} parent=35 // pred_region
          %s627 = sand.u32 %s32, 1
          %s628 = scalar_lea.sflag [#allocation10], %s627
          %s629 = sand.u32 %s330, 1
          %s630 = smul.addr %s629, 128
          %s631 = scalar_lea.vmem [#allocation9], %s630
          %633 = vsyncadd %s628, 0
          %s634 = smul.addr %s40, 32
          %s635 = smul.addr %s634, 4
          %s636 = scalar_lea.hbm %s11, %s635
          %s637 = sshll.u32 %s636, 4
          %s638 = int_to_ptr.hbm [resolvable:$true] %s637
          %s639 = sshll.u32 %s631, 4
          %s640 = int_to_ptr.vmem [resolvable:$true] %s639
          %645 = dma.hbm_to_vmem [thread:$0]  %s638, 2048, %s640, %s628, 128, 128, 8
        $region72: #{tpu_custom_call.1} parent=35 // pred_fallthru
          _
        // Predicated region
        $region73: #{tpu_custom_call.1} parent=35 // pred_check
          %p646 = pneg %p366
        $region74: #{tpu_custom_call.1} parent=35 // pred_check_branch
          %648 = sbr.rel (%p646) target = $region76
        $region75: #{tpu_custom_call.1} parent=35 // pred_region
          %p649 = scmp.lt.s32.totalorder %s40, 1
          %s650 = scalar_select %p649, %s40, 1
          %s651 = smul.addr %s650, 2
          %s652 = scalar_lea.vmem %s12, %s651
        $region76: #{tpu_custom_call.1} parent=35 // pred_fallthru
          _
        // Predicated region
        $region77: #{tpu_custom_call.1} parent=35 // pred_check
          %p653 = pneg %p392
        $region78: #{tpu_custom_call.1} parent=35 // pred_check_branch
          %655 = sbr.rel (%p653) target = $region80
        $region79: #{tpu_custom_call.1} parent=35 // pred_region
          %s656 = sand.u32 %s32, 1
          %s657 = scalar_lea.sflag [#allocation10], %s656
          %s658 = sand.u32 %s382, 1
          %s659 = smul.addr %s658, 128
          %s660 = scalar_lea.vmem [#allocation11], %s659
          %662 = vsyncadd %s657, 0
          %s663 = smul.addr %s40, 32
          %s664 = smul.addr %s663, 4
          %s665 = scalar_lea.hbm %s13, %s664
          %s666 = sshll.u32 %s665, 4
          %s667 = int_to_ptr.hbm [resolvable:$true] %s666
          %s668 = sshll.u32 %s660, 4
          %s669 = int_to_ptr.vmem [resolvable:$true] %s668
          %674 = dma.hbm_to_vmem [thread:$0]  %s667, 2048, %s669, %s657, 64, 64, 4
        $region80: #{tpu_custom_call.1} parent=35 // pred_fallthru
          _
        // Predicated region
        $region81: #{tpu_custom_call.1} parent=35 // pred_check
          %p675 = pneg %p418
        $region82: #{tpu_custom_call.1} parent=35 // pred_check_branch
          %677 = sbr.rel (%p675) target = $region84
        $region83: #{tpu_custom_call.1} parent=35 // pred_region
          %p678 = scmp.lt.s32.totalorder %s40, 1
          %s679 = scalar_select %p678, %s40, 1
          %s680 = scalar_lea.vmem %s14, %s679
        $region84: #{tpu_custom_call.1} parent=35 // pred_fallthru
          _
      $region36: #{tpu_custom_call.1} parent=5 // pred_fallthru
        _
      %p681 = scmp.le.s32.totalorder 1, %s32
      %p682 = scmp.lt.s32.totalorder %s32, 3
      %p683 = pnand %p681, %p682
      %p684 = pneg %p683
      // Predicated region
      $region85: #{tpu_custom_call.1} parent=5 // pred_check
        _
      $region86: #{tpu_custom_call.1} parent=5 // pred_check_branch
        %686 = sbr.rel (%p683) target = $region88
      $region87: #{tpu_custom_call.1} parent=5 // pred_region
        %s687 = ssub.s32 %s32, 1
        // Predicated region
        $region89: #{tpu_custom_call.1} parent=87 // pred_check
          %p688 = pneg %p112
        $region90: #{tpu_custom_call.1} parent=87 // pred_check_branch
          %690 = sbr.rel (%p688) target = $region92
        $region91: #{tpu_custom_call.1} parent=87 // pred_region
          %692 = dma.done [#allocation5], 1024
        $region92: #{tpu_custom_call.1} parent=87 // pred_fallthru
          _
        %s693 = sand.u32 %s37, 1
        %s694 = scalar_lea.sflag [#allocation7], %s693
        %s695 = sand.u32 %s125, 1
        %s696 = smul.addr %s695, 192
        %s697 = scalar_lea.vmem [#allocation6], %s696
        // Predicated region
        $region93: #{tpu_custom_call.1} parent=87 // pred_check
          %p698 = pneg %p138
        $region94: #{tpu_custom_call.1} parent=87 // pred_check_branch
          %700 = sbr.rel (%p698) target = $region96
        $region95: #{tpu_custom_call.1} parent=87 // pred_region
          %702 = dma.done %s694, 3072
        $region96: #{tpu_custom_call.1} parent=87 // pred_fallthru
          _
        %s703 = sand.u32 %s37, 1
        %s704 = scalar_lea.sflag [#allocation7], %s703
        %s705 = sand.u32 %s177, 1
        %s706 = smul.addr %s705, 64
        %s707 = scalar_lea.vmem [#allocation8], %s706
        // Predicated region
        $region97: #{tpu_custom_call.1} parent=87 // pred_check
          %p708 = pneg %p190
        $region98: #{tpu_custom_call.1} parent=87 // pred_check_branch
          %710 = sbr.rel (%p708) target = $region100
        $region99: #{tpu_custom_call.1} parent=87 // pred_region
          %712 = dma.done %s704, 1024
        $region100: #{tpu_custom_call.1} parent=87 // pred_fallthru
          _
        %s713 = sand.u32 %s37, 1
        %s714 = scalar_lea.sflag [#allocation10], %s713
        %s715 = sand.u32 %s333, 1
        %s716 = smul.addr %s715, 128
        %s717 = scalar_lea.vmem [#allocation9], %s716
        // Predicated region
        $region101: #{tpu_custom_call.1} parent=87 // pred_check
          %p718 = pneg %p346
        $region102: #{tpu_custom_call.1} parent=87 // pred_check_branch
          %720 = sbr.rel (%p718) target = $region104
        $region103: #{tpu_custom_call.1} parent=87 // pred_region
          %722 = dma.done %s714, 2048
        $region104: #{tpu_custom_call.1} parent=87 // pred_fallthru
          _
        %s723 = sand.u32 %s37, 1
        %s724 = scalar_lea.sflag [#allocation10], %s723
        %s725 = sand.u32 %s385, 1
        %s726 = smul.addr %s725, 128
        %s727 = scalar_lea.vmem [#allocation11], %s726
        // Predicated region
        $region105: #{tpu_custom_call.1} parent=87 // pred_check
          %p728 = pneg %p398
        $region106: #{tpu_custom_call.1} parent=87 // pred_check_branch
          %730 = sbr.rel (%p728) target = $region108
        $region107: #{tpu_custom_call.1} parent=87 // pred_region
          %732 = dma.done %s724, 2048
        $region108: #{tpu_custom_call.1} parent=87 // pred_fallthru
          _
        %s733 = smul.u32 2, %s41
        %p734 = scmp.lt.s32.totalorder %s733, 1
        %s735 = scalar_select %p734, %s733, 1
        %s736 = smul.addr %s735, 8
        %s737 = scalar_lea.vmem %s0, %s736
        %p738 = pneg %p70
        %p739 = pneg %p67
        %p740 = pneg %p91
        %p741 = pneg %p88
        %p742 = pneg %p112
        %p743 = pneg %p109
        %s744 = sand.u32 %s37, 1
        %s745 = scalar_lea.sflag [#allocation7], %s744
        %s746 = sand.u32 %s125, 1
        %s747 = smul.addr %s746, 192
        %s748 = scalar_lea.vmem [#allocation6], %s747
        %p749 = pneg %p138
        %p750 = pneg %p135
        %p751 = scmp.lt.s32.totalorder %s42, 1
        %s752 = scalar_select %p751, %s42, 1
        %s753 = smul.addr %s752, 3
        %s754 = scalar_lea.vmem %s4, %s753
        %p755 = pneg %p164
        %p756 = pneg %p161
        %s757 = sand.u32 %s37, 1
        %s758 = scalar_lea.sflag [#allocation7], %s757
        %s759 = sand.u32 %s177, 1
        %s760 = smul.addr %s759, 64
        %s761 = scalar_lea.vmem [#allocation8], %s760
        %p762 = pneg %p190
        %p763 = pneg %p187
        %p764 = scmp.lt.s32.totalorder %s42, 1
        %s765 = scalar_select %p764, %s42, 1
        %s766 = scalar_lea.vmem %s6, %s765
        %p767 = pneg %p216
        %p768 = pneg %p213
        %p769 = scmp.lt.s32.totalorder %s42, 1
        %s770 = scalar_select %p769, %s42, 1
        %s771 = scalar_lea.vmem %s7, %s770
        %p772 = pneg %p242
        %p773 = pneg %p239
        %p774 = scmp.lt.s32.totalorder %s42, 1
        %s775 = scalar_select %p774, %s42, 1
        %s776 = scalar_lea.vmem %s8, %s775
        %p777 = pneg %p268
        %p778 = pneg %p265
        %p779 = scmp.lt.s32.totalorder %s42, 1
        %s780 = scalar_select %p779, %s42, 1
        %s781 = scalar_lea.vmem %s9, %s780
        %p782 = pneg %p294
        %p783 = pneg %p291
        %p784 = scmp.lt.s32.totalorder %s42, 1
        %s785 = scalar_select %p784, %s42, 1
        %s786 = scalar_lea.vmem %s10, %s785
        %p787 = pneg %p320
        %p788 = pneg %p317
        %s789 = sand.u32 %s37, 1
        %s790 = scalar_lea.sflag [#allocation10], %s789
        %s791 = sand.u32 %s333, 1
        %s792 = smul.addr %s791, 128
        %s793 = scalar_lea.vmem [#allocation9], %s792
        %p794 = pneg %p346
        %p795 = pneg %p343
        %p796 = scmp.lt.s32.totalorder %s42, 1
        %s797 = scalar_select %p796, %s42, 1
        %s798 = smul.addr %s797, 2
        %s799 = scalar_lea.vmem %s12, %s798
        %p800 = pneg %p372
        %p801 = pneg %p369
        %s802 = sand.u32 %s37, 1
        %s803 = scalar_lea.sflag [#allocation10], %s802
        %s804 = sand.u32 %s385, 1
        %s805 = smul.addr %s804, 128
        %s806 = scalar_lea.vmem [#allocation11], %s805
        %p807 = pneg %p398
        %p808 = pneg %p395
        %p809 = scmp.lt.s32.totalorder %s42, 1
        %s810 = scalar_select %p809, %s42, 1
        %s811 = scalar_lea.vmem %s14, %s810
        %p812 = pneg %p424
        %p813 = pneg %p421
        %p814 = pneg %p445
        %p815 = pneg %p442
        %p816 = pneg %p466
        %p817 = pneg %p463
        %p818 = pneg %p492
        %p819 = pneg %p489
        %p820 = scmp.lt.s32.totalorder %s41, 0
        %s821 = scalar_select %p820, %s41, 0
        %s822 = smul.addr %s821, 2
        %s823 = scalar_lea.vmem %s17, %s822
        %s824 = smul.u32 2, %s41
        %p825 = scmp.lt.s32.totalorder %s824, 1
        %s826 = scalar_select %p825, %s824, 1
        %s827 = smul.addr %s826, 8
        %s828 = scalar_lea.vmem %s0, %s827
        %s829 = smul.u32 2, %s41
        %p830 = scmp.lt.s32.totalorder %s42, 1
        %s831 = scalar_select %p830, %s42, 1
        %s832 = smul.addr %s831, 3
        %s833 = scalar_lea.vmem %s4, %s832
        %p834 = scmp.lt.s32.totalorder %s42, 1
        %s835 = scalar_select %p834, %s42, 1
        %s836 = scalar_lea.vmem %s6, %s835
        %p837 = scmp.lt.s32.totalorder %s42, 1
        %s838 = scalar_select %p837, %s42, 1
        %s839 = scalar_lea.vmem %s7, %s838
        %p840 = scmp.lt.s32.totalorder %s42, 1
        %s841 = scalar_select %p840, %s42, 1
        %s842 = scalar_lea.vmem %s8, %s841
        %p843 = scmp.lt.s32.totalorder %s42, 1
        %s844 = scalar_select %p843, %s42, 1
        %s845 = scalar_lea.vmem %s9, %s844
        %p846 = scmp.lt.s32.totalorder %s42, 1
        %s847 = scalar_select %p846, %s42, 1
        %s848 = scalar_lea.vmem %s10, %s847
        %p849 = scmp.lt.s32.totalorder %s42, 1
        %s850 = scalar_select %p849, %s42, 1
        %s851 = smul.addr %s850, 2
        %s852 = scalar_lea.vmem %s12, %s851
        %p853 = scmp.lt.s32.totalorder %s42, 1
        %s854 = scalar_select %p853, %s42, 1
        %s855 = scalar_lea.vmem %s14, %s854
        %p856 = scmp.lt.s32.totalorder %s41, 0
        %s857 = scalar_select %p856, %s41, 0
        %s858 = smul.addr %s857, 2
        %s859 = scalar_lea.vmem %s17, %s858
        %p860 = scmp.eq.s32.totalorder %s42, 0
        // Predicated region
        $region109: #{tpu_custom_call.1} parent=87 // pred_check
          %p861 = pneg %p860
        $region110: #{tpu_custom_call.1} parent=87 // pred_check_branch
          %863 = sbr.rel (%p861) target = $region112
        $region111: #{tpu_custom_call.1} parent=87 // pred_region
          %v864 = vld [vmem:[%s828] sm:$0xff]
          %v865 = vld [vmem:[%s828 + $0x8] sm:$0xff]
          %vm866 = vcmask 31744
          %v867 = vsel %vm866, %v864, 0.0
          %v868 = vsel %vm866, %v865, 0.0
          %v869 = vpack.c.bf16 %v868, %v867
          %v870 = vld [vmem:[#allocation4] sm:$0xf]
          %v871 = vld [vmem:[#allocation4 + $0x4] sm:$0xf]
          %v872 = vld [vmem:[#allocation4 + $0x8] sm:$0xf]
          %v873 = vld [vmem:[#allocation4 + $0xc] sm:$0xf]
          %v874 = vld [vmem:[#allocation4 + $0x10] sm:$0xf]
          %v875 = vld [vmem:[#allocation4 + $0x14] sm:$0xf]
          %v876 = vld [vmem:[#allocation4 + $0x18] sm:$0xf]
          %v877 = vld [vmem:[#allocation4 + $0x1c] sm:$0xf]
          %v878 = vld [vmem:[#allocation4 + $0x20] sm:$0xf]
          %v879 = vld [vmem:[#allocation4 + $0x24] sm:$0xf]
          %v880 = vld [vmem:[#allocation4 + $0x28] sm:$0xf]
          %v881 = vld [vmem:[#allocation4 + $0x2c] sm:$0xf]
          %v882 = vld [vmem:[#allocation4 + $0x30] sm:$0xf]
          %v883 = vld [vmem:[#allocation4 + $0x34] sm:$0xf]
          %v884 = vld [vmem:[#allocation4 + $0x38] sm:$0xf]
          %v885 = vld [vmem:[#allocation4 + $0x3c] sm:$0xf]
          %v902 = vunpack.c.l.b16 %v870
          %v903 = vunpack.c.l.b16 %v871
          %v904 = vunpack.c.l.b16 %v872
          %v905 = vunpack.c.l.b16 %v873
          %v906 = vunpack.c.l.b16 %v874
          %v907 = vunpack.c.l.b16 %v875
          %v908 = vunpack.c.l.b16 %v876
          %v909 = vunpack.c.l.b16 %v877
          %v910 = vunpack.c.l.b16 %v878
          %v911 = vunpack.c.l.b16 %v879
          %v912 = vunpack.c.l.b16 %v880
          %v913 = vunpack.c.l.b16 %v881
          %v914 = vunpack.c.l.b16 %v882
          %v915 = vunpack.c.l.b16 %v883
          %v916 = vunpack.c.l.b16 %v884
          %v917 = vunpack.c.l.b16 %v885
          %v918 = vpack.c.b16 %v903, %v902
          %v919 = vpack.c.b16 %v905, %v904
          %v920 = vpack.c.b16 %v907, %v906
          %v921 = vpack.c.b16 %v909, %v908
          %v922 = vpack.c.b16 %v911, %v910
          %v923 = vpack.c.b16 %v913, %v912
          %v924 = vpack.c.b16 %v915, %v914
          %v925 = vpack.c.b16 %v917, %v916
          %934 = vmatpush.bf16.msra.mxu0 %v925
          %935 = vmatpush.bf16.msra.mxu0 %v924
          %936 = vmatpush.bf16.msra.mxu0 %v923
          %937 = vmatpush.bf16.msra.mxu0 %v922
          %938 = vmatpush.bf16.msra.mxu0 %v921
          %939 = vmatpush.bf16.msra.mxu0 %v920
          %940 = vmatpush.bf16.msra.mxu0 %v919
          %941 = vmatpush.bf16.msra.mxu0 %v918
          %942 = vmatmul.bf16.gmra.mxu0 %v869
          %v943 = vpop.f32.mrf.mxu0
          %v944 = vadd.f32 0.0, %v943
          %v945 = vpop.f32.mrf.mxu0
          %v946 = vadd.f32 0.0, %v945
          %947 = vdwg.mxu0
          %v948 = vld [vmem:[%s1] sm:$0xff]
          %v949 = vadd.f32 %v944, %v948
          %v950 = vadd.f32 %v946, %v948
          %951 = vst [vmem:[#allocation2] sm:$0xff] %v949
          %952 = vst [vmem:[#allocation2 + $0x8] sm:$0xff] %v950
        $region112: #{tpu_custom_call.1} parent=87 // pred_fallthru
          _
        %v953 = vld [vmem:[#allocation2] sm:$0xff]
        %v954 = vld [vmem:[#allocation2 + $0x8] sm:$0xff]
        %v955 = vpack.c.bf16 %v954, %v953
        %v956 = vld [vmem:[%s697] sm:$0xff]
        %v957 = vld [vmem:[%s697 + $0x8] sm:$0xf]
        %v958 = vld [vmem:[%s697 + $0xc] sm:$0xff]
        %v959 = vld [vmem:[%s697 + $0x14] sm:$0xf]
        %v960 = vld [vmem:[%s697 + $0x18] sm:$0xff]
        %v961 = vld [vmem:[%s697 + $0x20] sm:$0xf]
        %v962 = vld [vmem:[%s697 + $0x24] sm:$0xff]
        %v963 = vld [vmem:[%s697 + $0x2c] sm:$0xf]
        %v964 = vld [vmem:[%s697 + $0x30] sm:$0xff]
        %v965 = vld [vmem:[%s697 + $0x38] sm:$0xf]
        %v966 = vld [vmem:[%s697 + $0x3c] sm:$0xff]
        %v967 = vld [vmem:[%s697 + $0x44] sm:$0xf]
        %v968 = vld [vmem:[%s697 + $0x48] sm:$0xff]
        %v969 = vld [vmem:[%s697 + $0x50] sm:$0xf]
        %v970 = vld [vmem:[%s697 + $0x54] sm:$0xff]
        %v971 = vld [vmem:[%s697 + $0x5c] sm:$0xf]
        %v972 = vld [vmem:[%s697 + $0x60] sm:$0xff]
        %v973 = vld [vmem:[%s697 + $0x68] sm:$0xf]
        %v974 = vld [vmem:[%s697 + $0x6c] sm:$0xff]
        %v975 = vld [vmem:[%s697 + $0x74] sm:$0xf]
        %v976 = vld [vmem:[%s697 + $0x78] sm:$0xff]
        %v977 = vld [vmem:[%s697 + $0x80] sm:$0xf]
        %v978 = vld [vmem:[%s697 + $0x84] sm:$0xff]
        %v979 = vld [vmem:[%s697 + $0x8c] sm:$0xf]
        %v980 = vld [vmem:[%s697 + $0x90] sm:$0xff]
        %v981 = vld [vmem:[%s697 + $0x98] sm:$0xf]
        %v982 = vld [vmem:[%s697 + $0x9c] sm:$0xff]
        %v983 = vld [vmem:[%s697 + $0xa4] sm:$0xf]
        %v984 = vld [vmem:[%s697 + $0xa8] sm:$0xff]
        %v985 = vld [vmem:[%s697 + $0xb0] sm:$0xf]
        %v986 = vld [vmem:[%s697 + $0xb4] sm:$0xff]
        %v987 = vld [vmem:[%s697 + $0xbc] sm:$0xf]
        %v988 = vld [vmem:[%s833] sm:$0x7]
        %v990 = vperm.slane %v988, 0
        %v991 = vperm.slane %v988, 1
        %v992 = vperm.slane %v988, 2
        %v1028 = vunpack.c.l.b16 %v956
        %v1029 = vunpack.c.h.b16 %v956
        %v1030 = vunpack.c.l.b16 %v957
        %v1031 = vunpack.c.l.b16 %v958
        %v1032 = vunpack.c.h.b16 %v958
        %v1033 = vunpack.c.l.b16 %v959
        %v1034 = vunpack.c.l.b16 %v960
        %v1035 = vunpack.c.h.b16 %v960
        %v1036 = vunpack.c.l.b16 %v961
        %v1037 = vunpack.c.l.b16 %v962
        %v1038 = vunpack.c.h.b16 %v962
        %v1039 = vunpack.c.l.b16 %v963
        %v1040 = vunpack.c.l.b16 %v964
        %v1041 = vunpack.c.h.b16 %v964
        %v1042 = vunpack.c.l.b16 %v965
        %v1043 = vunpack.c.l.b16 %v966
        %v1044 = vunpack.c.h.b16 %v966
        %v1045 = vunpack.c.l.b16 %v967
        %v1046 = vunpack.c.l.b16 %v968
        %v1047 = vunpack.c.h.b16 %v968
        %v1048 = vunpack.c.l.b16 %v969
        %v1049 = vunpack.c.l.b16 %v970
        %v1050 = vunpack.c.h.b16 %v970
        %v1051 = vunpack.c.l.b16 %v971
        %v1052 = vunpack.c.l.b16 %v972
        %v1053 = vunpack.c.h.b16 %v972
        %v1054 = vunpack.c.l.b16 %v973
        %v1055 = vunpack.c.l.b16 %v974
        %v1056 = vunpack.c.h.b16 %v974
        %v1057 = vunpack.c.l.b16 %v975
        %v1058 = vunpack.c.l.b16 %v976
        %v1059 = vunpack.c.h.b16 %v976
        %v1060 = vunpack.c.l.b16 %v977
        %v1061 = vunpack.c.l.b16 %v978
        %v1062 = vunpack.c.h.b16 %v978
        %v1063 = vunpack.c.l.b16 %v979
        %v1064 = vunpack.c.l.b16 %v980
        %v1065 = vunpack.c.h.b16 %v980
        %v1066 = vunpack.c.l.b16 %v981
        %v1067 = vunpack.c.l.b16 %v982
        %v1068 = vunpack.c.h.b16 %v982
        %v1069 = vunpack.c.l.b16 %v983
        %v1070 = vunpack.c.l.b16 %v984
        %v1071 = vunpack.c.h.b16 %v984
        %v1072 = vunpack.c.l.b16 %v985
        %v1073 = vunpack.c.l.b16 %v986
        %v1074 = vunpack.c.h.b16 %v986
        %v1075 = vunpack.c.l.b16 %v987
        %v1076 = vpack.c.b16 %v1031, %v1028
        %v1077 = vpack.c.b16 %v1032, %v1029
        %v1078 = vpack.c.b16 %v1033, %v1030
        %v1079 = vpack.c.b16 %v1037, %v1034
        %v1080 = vpack.c.b16 %v1038, %v1035
        %v1081 = vpack.c.b16 %v1039, %v1036
        %v1082 = vpack.c.b16 %v1043, %v1040
        %v1083 = vpack.c.b16 %v1044, %v1041
        %v1084 = vpack.c.b16 %v1045, %v1042
        %v1085 = vpack.c.b16 %v1049, %v1046
        %v1086 = vpack.c.b16 %v1050, %v1047
        %v1087 = vpack.c.b16 %v1051, %v1048
        %v1088 = vpack.c.b16 %v1055, %v1052
        %v1089 = vpack.c.b16 %v1056, %v1053
        %v1090 = vpack.c.b16 %v1057, %v1054
        %v1091 = vpack.c.b16 %v1061, %v1058
        %v1092 = vpack.c.b16 %v1062, %v1059
        %v1093 = vpack.c.b16 %v1063, %v1060
        %v1094 = vpack.c.b16 %v1067, %v1064
        %v1095 = vpack.c.b16 %v1068, %v1065
        %v1096 = vpack.c.b16 %v1069, %v1066
        %v1097 = vpack.c.b16 %v1073, %v1070
        %v1098 = vpack.c.b16 %v1074, %v1071
        %v1099 = vpack.c.b16 %v1075, %v1072
        %1124 = vmatpush.bf16.msra.mxu0 %v1097
        %1125 = vmatpush.bf16.msra.mxu0 %v1094
        %1126 = vmatpush.bf16.msra.mxu0 %v1091
        %1127 = vmatpush.bf16.msra.mxu0 %v1088
        %1128 = vmatpush.bf16.msra.mxu0 %v1085
        %1129 = vmatpush.bf16.msra.mxu0 %v1082
        %1130 = vmatpush.bf16.msra.mxu0 %v1079
        %1131 = vmatpush.bf16.msra.mxu0 %v1076
        %1132 = vmatmul.bf16.gmra.mxu0 %v955
        %v1133 = vpop.f32.mrf.mxu0
        %v1134 = vadd.f32 %v990, %v1133
        %v1135 = vpop.f32.mrf.mxu0
        %v1136 = vadd.f32 %v990, %v1135
        %1137 = vdwg.mxu0
        %1138 = vmatpush.bf16.msra.mxu0 %v1098
        %1139 = vmatpush.bf16.msra.mxu0 %v1095
        %1140 = vmatpush.bf16.msra.mxu0 %v1092
        %1141 = vmatpush.bf16.msra.mxu0 %v1089
        %1142 = vmatpush.bf16.msra.mxu0 %v1086
        %1143 = vmatpush.bf16.msra.mxu0 %v1083
        %1144 = vmatpush.bf16.msra.mxu0 %v1080
        %1145 = vmatpush.bf16.msra.mxu0 %v1077
        %1146 = vmatmul.bf16.gmra.mxu0 %v955
        %v1147 = vpop.f32.mrf.mxu0
        %v1148 = vadd.f32 %v991, %v1147
        %v1149 = vpop.f32.mrf.mxu0
        %v1150 = vadd.f32 %v991, %v1149
        %1151 = vdwg.mxu0
        %1152 = vmatpush.bf16.msra.mxu0 %v1099
        %1153 = vmatpush.bf16.msra.mxu0 %v1096
        %1154 = vmatpush.bf16.msra.mxu0 %v1093
        %1155 = vmatpush.bf16.msra.mxu0 %v1090
        %1156 = vmatpush.bf16.msra.mxu0 %v1087
        %1157 = vmatpush.bf16.msra.mxu0 %v1084
        %1158 = vmatpush.bf16.msra.mxu0 %v1081
        %1159 = vmatpush.bf16.msra.mxu0 %v1078
        %1160 = vmatmul.bf16.gmra.mxu0 %v955
        %v1161 = vpop.f32.mrf.mxu0
        %v1162 = vadd.f32 %v992, %v1161
        %v1163 = vpop.f32.mrf.mxu0
        %v1164 = vadd.f32 %v992, %v1163
        %1165 = vdwg.mxu0
        %vm1166 = vcmask 130048
        %v1168 = vsel %vm1166, %v1134, 0
        %v1171 = vsel %vm1166, %v1148, 0
        %1173 = vmatpush.xpose.msra.mxu0 0.0
        %1174 = vmatpush.xpose.msra.mxu0 0.0
        %1175 = vmatpush.xpose.msra.mxu0 0.0
        %1176 = vmatpush.xpose.msra.mxu0 0.0
        %1177 = vmatpush.xpose.msra.mxu0 0.0
        %1178 = vmatpush.xpose.msra.mxu0 0.0
        %1179 = vmatpush.xpose.msra.mxu0 0.0
        %1180 = vmatpush.xpose.msra.mxu0 0.0
        %1181 = vmatpush.xpose.msra.mxu0 0.0
        %1182 = vmatpush.xpose.msra.mxu0 0.0
        %1183 = vmatpush.xpose.msra.mxu0 0.0
        %1184 = vmatpush.xpose.msra.mxu0 0.0
        %1185 = vmatpush.xpose.msra.mxu0 0.0
        %1186 = vmatpush.xpose.msra.mxu0 0.0
        %1187 = vmatpush.xpose.msra.mxu0 0.0
        %1188 = vmatpush.xpose.msra.mxu0 %v1171
        %1189 = vmatmul.f32.gmra.mxu0 %v1168
        %v1190 = vpop.f32.mrf.mxu0
        %v1191 = vadd.f32 0.0, %v1190
        %1192 = vdwg.mxu0
        %v1194 = vsel %vm1166, %v1136, 0
        %v1197 = vsel %vm1166, %v1150, 0
        %1199 = vmatpush.xpose.msra.mxu0 0.0
        %1200 = vmatpush.xpose.msra.mxu0 0.0
        %1201 = vmatpush.xpose.msra.mxu0 0.0
        %1202 = vmatpush.xpose.msra.mxu0 0.0
        %1203 = vmatpush.xpose.msra.mxu0 0.0
        %1204 = vmatpush.xpose.msra.mxu0 0.0
        %1205 = vmatpush.xpose.msra.mxu0 0.0
        %1206 = vmatpush.xpose.msra.mxu0 0.0
        %1207 = vmatpush.xpose.msra.mxu0 0.0
        %1208 = vmatpush.xpose.msra.mxu0 0.0
        %1209 = vmatpush.xpose.msra.mxu0 0.0
        %1210 = vmatpush.xpose.msra.mxu0 0.0
        %1211 = vmatpush.xpose.msra.mxu0 0.0
        %1212 = vmatpush.xpose.msra.mxu0 0.0
        %1213 = vmatpush.xpose.msra.mxu0 0.0
        %1214 = vmatpush.xpose.msra.mxu0 %v1197
        %1215 = vmatmul.f32.gmra.mxu0 %v1194
        %v1216 = vpop.f32.mrf.mxu0
        %v1217 = vadd.f32 0.0, %v1216
        %1218 = vdwg.mxu0
        %vm1219 = vcmask 64512
        %v1220 = vsel %vm1219, %v1191, -inf
        %1221 = vmax.xlane.f32.xlu0 %v1220
        %v1222 = vpop.xlane.xlu0 %1221
        %v1223 = vsel %vm1219, %v1217, -inf
        %1224 = vmax.xlane.f32.xlu0 %v1223
        %v1225 = vpop.xlane.xlu0 %1224
        %v1226 = vsub.f32 %v1191, %v1222
        %v1227 = vsub.f32 %v1217, %v1225
        %v1228 = vmul.f32 %v1226, 1.442695
        %v1229 = vpow.pop %v1228
        %v1230 = vmul.f32 %v1227, 1.442695
        %v1231 = vpow.pop %v1230
        %v1232 = vsel %vm1219, %v1229, 0.0
        %1233 = vadd.xlane.f32.xlu0 %v1232
        %v1234 = vpop.xlane.xlu0 %1233
        %v1235 = vsel %vm1219, %v1231, 0.0
        %1236 = vadd.xlane.f32.xlu0 %v1235
        %v1237 = vpop.xlane.xlu0 %1236
        %v1238 = vrcp.pop %v1234
        %v1239 = vrcp.pop %v1237
        %v1240 = vmul.f32 %v1229, %v1238
        %v1241 = vmul.f32 %v1231, %v1239
        %v1243 = vsel %vm1219, %v1240, 0
        %1245 = vmatpush.msra.mxu0 0.0
        %1246 = vmatpush.msra.mxu0 0.0
        %1247 = vmatpush.msra.mxu0 0.0
        %1248 = vmatpush.msra.mxu0 0.0
        %1249 = vmatpush.msra.mxu0 0.0
        %1250 = vmatpush.msra.mxu0 0.0
        %1251 = vmatpush.msra.mxu0 0.0
        %1252 = vmatpush.msra.mxu0 0.0
        %1253 = vmatpush.msra.mxu0 0.0
        %1254 = vmatpush.msra.mxu0 0.0
        %1255 = vmatpush.msra.mxu0 0.0
        %1256 = vmatpush.msra.mxu0 0.0
        %1257 = vmatpush.msra.mxu0 0.0
        %1258 = vmatpush.msra.mxu0 0.0
        %1259 = vmatpush.msra.mxu0 0.0
        %1260 = vmatpush.msra.mxu0 %v1162
        %1261 = vmatmul.f32.gmra.mxu0 %v1243
        %v1262 = vpop.f32.mrf.mxu0
        %v1263 = vadd.f32 0.0, %v1262
        %1264 = vdwg.mxu0
        %v1266 = vsel %vm1219, %v1241, 0
        %1268 = vmatpush.msra.mxu0 0.0
        %1269 = vmatpush.msra.mxu0 0.0
        %1270 = vmatpush.msra.mxu0 0.0
        %1271 = vmatpush.msra.mxu0 0.0
        %1272 = vmatpush.msra.mxu0 0.0
        %1273 = vmatpush.msra.mxu0 0.0
        %1274 = vmatpush.msra.mxu0 0.0
        %1275 = vmatpush.msra.mxu0 0.0
        %1276 = vmatpush.msra.mxu0 0.0
        %1277 = vmatpush.msra.mxu0 0.0
        %1278 = vmatpush.msra.mxu0 0.0
        %1279 = vmatpush.msra.mxu0 0.0
        %1280 = vmatpush.msra.mxu0 0.0
        %1281 = vmatpush.msra.mxu0 0.0
        %1282 = vmatpush.msra.mxu0 0.0
        %1283 = vmatpush.msra.mxu0 %v1164
        %1284 = vmatmul.f32.gmra.mxu0 %v1266
        %v1285 = vpop.f32.mrf.mxu0
        %v1286 = vadd.f32 0.0, %v1285
        %1287 = vdwg.mxu0
        %1288 = vrot.lane.b32.xlu0 %v1134, 112
        %v1289 = vpop.permute.xlu0 %1288
        %1290 = vrot.lane.b32.xlu0 %v1148, 112
        %v1291 = vpop.permute.xlu0 %1290
        %v1292 = vsel %vm1166, %v1289, 0
        %v1294 = vsel %vm1166, %v1291, 0
        %1296 = vmatpush.xpose.msra.mxu0 0.0
        %1297 = vmatpush.xpose.msra.mxu0 0.0
        %1298 = vmatpush.xpose.msra.mxu0 0.0
        %1299 = vmatpush.xpose.msra.mxu0 0.0
        %1300 = vmatpush.xpose.msra.mxu0 0.0
        %1301 = vmatpush.xpose.msra.mxu0 0.0
        %1302 = vmatpush.xpose.msra.mxu0 0.0
        %1303 = vmatpush.xpose.msra.mxu0 0.0
        %1304 = vmatpush.xpose.msra.mxu0 0.0
        %1305 = vmatpush.xpose.msra.mxu0 0.0
        %1306 = vmatpush.xpose.msra.mxu0 0.0
        %1307 = vmatpush.xpose.msra.mxu0 0.0
        %1308 = vmatpush.xpose.msra.mxu0 0.0
        %1309 = vmatpush.xpose.msra.mxu0 0.0
        %1310 = vmatpush.xpose.msra.mxu0 0.0
        %1311 = vmatpush.xpose.msra.mxu0 %v1294
        %1312 = vmatmul.f32.gmra.mxu0 %v1292
        %v1313 = vpop.f32.mrf.mxu0
        %v1314 = vadd.f32 0.0, %v1313
        %1315 = vdwg.mxu0
        %1316 = vrot.lane.b32.xlu0 %v1136, 112
        %v1317 = vpop.permute.xlu0 %1316
        %1318 = vrot.lane.b32.xlu0 %v1150, 112
        %v1319 = vpop.permute.xlu0 %1318
        %v1320 = vsel %vm1166, %v1317, 0
        %v1322 = vsel %vm1166, %v1319, 0
        %1324 = vmatpush.xpose.msra.mxu0 0.0
        %1325 = vmatpush.xpose.msra.mxu0 0.0
        %1326 = vmatpush.xpose.msra.mxu0 0.0
        %1327 = vmatpush.xpose.msra.mxu0 0.0
        %1328 = vmatpush.xpose.msra.mxu0 0.0
        %1329 = vmatpush.xpose.msra.mxu0 0.0
        %1330 = vmatpush.xpose.msra.mxu0 0.0
        %1331 = vmatpush.xpose.msra.mxu0 0.0
        %1332 = vmatpush.xpose.msra.mxu0 0.0
        %1333 = vmatpush.xpose.msra.mxu0 0.0
        %1334 = vmatpush.xpose.msra.mxu0 0.0
        %1335 = vmatpush.xpose.msra.mxu0 0.0
        %1336 = vmatpush.xpose.msra.mxu0 0.0
        %1337 = vmatpush.xpose.msra.mxu0 0.0
        %1338 = vmatpush.xpose.msra.mxu0 0.0
        %1339 = vmatpush.xpose.msra.mxu0 %v1322
        %1340 = vmatmul.f32.gmra.mxu0 %v1320
        %v1341 = vpop.f32.mrf.mxu0
        %v1342 = vadd.f32 0.0, %v1341
        %1343 = vdwg.mxu0
        %v1344 = vsel %vm1219, %v1314, -inf
        %1345 = vmax.xlane.f32.xlu0 %v1344
        %v1346 = vpop.xlane.xlu0 %1345
        %v1347 = vsel %vm1219, %v1342, -inf
        %1348 = vmax.xlane.f32.xlu0 %v1347
        %v1349 = vpop.xlane.xlu0 %1348
        %v1350 = vsub.f32 %v1314, %v1346
        %v1351 = vsub.f32 %v1342, %v1349
        %v1352 = vmul.f32 %v1350, 1.442695
        %v1353 = vpow.pop %v1352
        %v1354 = vmul.f32 %v1351, 1.442695
        %v1355 = vpow.pop %v1354
        %v1356 = vsel %vm1219, %v1353, 0.0
        %1357 = vadd.xlane.f32.xlu0 %v1356
        %v1358 = vpop.xlane.xlu0 %1357
        %v1359 = vsel %vm1219, %v1355, 0.0
        %1360 = vadd.xlane.f32.xlu0 %v1359
        %v1361 = vpop.xlane.xlu0 %1360
        %v1362 = vrcp.pop %v1358
        %v1363 = vrcp.pop %v1361
        %v1364 = vmul.f32 %v1353, %v1362
        %v1365 = vmul.f32 %v1355, %v1363
        %1367 = vrot.lane.b32.xlu0 %v1162, 112
        %v1368 = vpop.permute.xlu0 %1367
        %v1371 = vsel %vm1219, %v1364, 0
        %1373 = vmatpush.msra.mxu0 0.0
        %1374 = vmatpush.msra.mxu0 0.0
        %1375 = vmatpush.msra.mxu0 0.0
        %1376 = vmatpush.msra.mxu0 0.0
        %1377 = vmatpush.msra.mxu0 0.0
        %1378 = vmatpush.msra.mxu0 0.0
        %1379 = vmatpush.msra.mxu0 0.0
        %1380 = vmatpush.msra.mxu0 0.0
        %1381 = vmatpush.msra.mxu0 0.0
        %1382 = vmatpush.msra.mxu0 0.0
        %1383 = vmatpush.msra.mxu0 0.0
        %1384 = vmatpush.msra.mxu0 0.0
        %1385 = vmatpush.msra.mxu0 0.0
        %1386 = vmatpush.msra.mxu0 0.0
        %1387 = vmatpush.msra.mxu0 0.0
        %1388 = vmatpush.msra.mxu0 %v1368
        %1389 = vmatmul.f32.gmra.mxu0 %v1371
        %v1390 = vpop.f32.mrf.mxu0
        %v1391 = vadd.f32 0.0, %v1390
        %1392 = vdwg.mxu0
        %1394 = vrot.lane.b32.xlu0 %v1164, 112
        %v1395 = vpop.permute.xlu0 %1394
        %v1398 = vsel %vm1219, %v1365, 0
        %1400 = vmatpush.msra.mxu0 0.0
        %1401 = vmatpush.msra.mxu0 0.0
        %1402 = vmatpush.msra.mxu0 0.0
        %1403 = vmatpush.msra.mxu0 0.0
        %1404 = vmatpush.msra.mxu0 0.0
        %1405 = vmatpush.msra.mxu0 0.0
        %1406 = vmatpush.msra.mxu0 0.0
        %1407 = vmatpush.msra.mxu0 0.0
        %1408 = vmatpush.msra.mxu0 0.0
        %1409 = vmatpush.msra.mxu0 0.0
        %1410 = vmatpush.msra.mxu0 0.0
        %1411 = vmatpush.msra.mxu0 0.0
        %1412 = vmatpush.msra.mxu0 0.0
        %1413 = vmatpush.msra.mxu0 0.0
        %1414 = vmatpush.msra.mxu0 0.0
        %1415 = vmatpush.msra.mxu0 %v1395
        %1416 = vmatmul.f32.gmra.mxu0 %v1398
        %v1417 = vpop.f32.mrf.mxu0
        %v1418 = vadd.f32 0.0, %v1417
        %1419 = vdwg.mxu0
        %1420 = vrot.lane.b32.xlu0 %v1134, 96
        %v1421 = vpop.permute.xlu0 %1420
        %1422 = vrot.lane.b32.xlu0 %v1148, 96
        %v1423 = vpop.permute.xlu0 %1422
        %v1424 = vsel %vm1166, %v1421, 0
        %v1426 = vsel %vm1166, %v1423, 0
        %1428 = vmatpush.xpose.msra.mxu0 0.0
        %1429 = vmatpush.xpose.msra.mxu0 0.0
        %1430 = vmatpush.xpose.msra.mxu0 0.0
        %1431 = vmatpush.xpose.msra.mxu0 0.0
        %1432 = vmatpush.xpose.msra.mxu0 0.0
        %1433 = vmatpush.xpose.msra.mxu0 0.0
        %1434 = vmatpush.xpose.msra.mxu0 0.0
        %1435 = vmatpush.xpose.msra.mxu0 0.0
        %1436 = vmatpush.xpose.msra.mxu0 0.0
        %1437 = vmatpush.xpose.msra.mxu0 0.0
        %1438 = vmatpush.xpose.msra.mxu0 0.0
        %1439 = vmatpush.xpose.msra.mxu0 0.0
        %1440 = vmatpush.xpose.msra.mxu0 0.0
        %1441 = vmatpush.xpose.msra.mxu0 0.0
        %1442 = vmatpush.xpose.msra.mxu0 0.0
        %1443 = vmatpush.xpose.msra.mxu0 %v1426
        %1444 = vmatmul.f32.gmra.mxu0 %v1424
        %v1445 = vpop.f32.mrf.mxu0
        %v1446 = vadd.f32 0.0, %v1445
        %1447 = vdwg.mxu0
        %1448 = vrot.lane.b32.xlu0 %v1136, 96
        %v1449 = vpop.permute.xlu0 %1448
        %1450 = vrot.lane.b32.xlu0 %v1150, 96
        %v1451 = vpop.permute.xlu0 %1450
        %v1452 = vsel %vm1166, %v1449, 0
        %v1454 = vsel %vm1166, %v1451, 0
        %1456 = vmatpush.xpose.msra.mxu0 0.0
        %1457 = vmatpush.xpose.msra.mxu0 0.0
        %1458 = vmatpush.xpose.msra.mxu0 0.0
        %1459 = vmatpush.xpose.msra.mxu0 0.0
        %1460 = vmatpush.xpose.msra.mxu0 0.0
        %1461 = vmatpush.xpose.msra.mxu0 0.0
        %1462 = vmatpush.xpose.msra.mxu0 0.0
        %1463 = vmatpush.xpose.msra.mxu0 0.0
        %1464 = vmatpush.xpose.msra.mxu0 0.0
        %1465 = vmatpush.xpose.msra.mxu0 0.0
        %1466 = vmatpush.xpose.msra.mxu0 0.0
        %1467 = vmatpush.xpose.msra.mxu0 0.0
        %1468 = vmatpush.xpose.msra.mxu0 0.0
        %1469 = vmatpush.xpose.msra.mxu0 0.0
        %1470 = vmatpush.xpose.msra.mxu0 0.0
        %1471 = vmatpush.xpose.msra.mxu0 %v1454
        %1472 = vmatmul.f32.gmra.mxu0 %v1452
        %v1473 = vpop.f32.mrf.mxu0
        %v1474 = vadd.f32 0.0, %v1473
        %1475 = vdwg.mxu0
        %v1476 = vsel %vm1219, %v1446, -inf
        %1477 = vmax.xlane.f32.xlu0 %v1476
        %v1478 = vpop.xlane.xlu0 %1477
        %v1479 = vsel %vm1219, %v1474, -inf
        %1480 = vmax.xlane.f32.xlu0 %v1479
        %v1481 = vpop.xlane.xlu0 %1480
        %v1482 = vsub.f32 %v1446, %v1478
        %v1483 = vsub.f32 %v1474, %v1481
        %v1484 = vmul.f32 %v1482, 1.442695
        %v1485 = vpow.pop %v1484
        %v1486 = vmul.f32 %v1483, 1.442695
        %v1487 = vpow.pop %v1486
        %v1488 = vsel %vm1219, %v1485, 0.0
        %1489 = vadd.xlane.f32.xlu0 %v1488
        %v1490 = vpop.xlane.xlu0 %1489
        %v1491 = vsel %vm1219, %v1487, 0.0
        %1492 = vadd.xlane.f32.xlu0 %v1491
        %v1493 = vpop.xlane.xlu0 %1492
        %v1494 = vrcp.pop %v1490
        %v1495 = vrcp.pop %v1493
        %v1496 = vmul.f32 %v1485, %v1494
        %v1497 = vmul.f32 %v1487, %v1495
        %1498 = vrot.lane.b32.xlu0 %v1162, 96
        %v1499 = vpop.permute.xlu0 %1498
        %v1502 = vsel %vm1219, %v1496, 0
        %1504 = vmatpush.msra.mxu0 0.0
        %1505 = vmatpush.msra.mxu0 0.0
        %1506 = vmatpush.msra.mxu0 0.0
        %1507 = vmatpush.msra.mxu0 0.0
        %1508 = vmatpush.msra.mxu0 0.0
        %1509 = vmatpush.msra.mxu0 0.0
        %1510 = vmatpush.msra.mxu0 0.0
        %1511 = vmatpush.msra.mxu0 0.0
        %1512 = vmatpush.msra.mxu0 0.0
        %1513 = vmatpush.msra.mxu0 0.0
        %1514 = vmatpush.msra.mxu0 0.0
        %1515 = vmatpush.msra.mxu0 0.0
        %1516 = vmatpush.msra.mxu0 0.0
        %1517 = vmatpush.msra.mxu0 0.0
        %1518 = vmatpush.msra.mxu0 0.0
        %1519 = vmatpush.msra.mxu0 %v1499
        %1520 = vmatmul.f32.gmra.mxu0 %v1502
        %v1521 = vpop.f32.mrf.mxu0
        %v1522 = vadd.f32 0.0, %v1521
        %1523 = vdwg.mxu0
        %1524 = vrot.lane.b32.xlu0 %v1164, 96
        %v1525 = vpop.permute.xlu0 %1524
        %v1528 = vsel %vm1219, %v1497, 0
        %1530 = vmatpush.msra.mxu0 0.0
        %1531 = vmatpush.msra.mxu0 0.0
        %1532 = vmatpush.msra.mxu0 0.0
        %1533 = vmatpush.msra.mxu0 0.0
        %1534 = vmatpush.msra.mxu0 0.0
        %1535 = vmatpush.msra.mxu0 0.0
        %1536 = vmatpush.msra.mxu0 0.0
        %1537 = vmatpush.msra.mxu0 0.0
        %1538 = vmatpush.msra.mxu0 0.0
        %1539 = vmatpush.msra.mxu0 0.0
        %1540 = vmatpush.msra.mxu0 0.0
        %1541 = vmatpush.msra.mxu0 0.0
        %1542 = vmatpush.msra.mxu0 0.0
        %1543 = vmatpush.msra.mxu0 0.0
        %1544 = vmatpush.msra.mxu0 0.0
        %1545 = vmatpush.msra.mxu0 %v1525
        %1546 = vmatmul.f32.gmra.mxu0 %v1528
        %v1547 = vpop.f32.mrf.mxu0
        %v1548 = vadd.f32 0.0, %v1547
        %1549 = vdwg.mxu0
        %1550 = vrot.lane.b32.xlu0 %v1134, 80
        %v1551 = vpop.permute.xlu0 %1550
        %1552 = vrot.lane.b32.xlu0 %v1148, 80
        %v1553 = vpop.permute.xlu0 %1552
        %v1554 = vsel %vm1166, %v1551, 0
        %v1556 = vsel %vm1166, %v1553, 0
        %1558 = vmatpush.xpose.msra.mxu0 0.0
        %1559 = vmatpush.xpose.msra.mxu0 0.0
        %1560 = vmatpush.xpose.msra.mxu0 0.0
        %1561 = vmatpush.xpose.msra.mxu0 0.0
        %1562 = vmatpush.xpose.msra.mxu0 0.0
        %1563 = vmatpush.xpose.msra.mxu0 0.0
        %1564 = vmatpush.xpose.msra.mxu0 0.0
        %1565 = vmatpush.xpose.msra.mxu0 0.0
        %1566 = vmatpush.xpose.msra.mxu0 0.0
        %1567 = vmatpush.xpose.msra.mxu0 0.0
        %1568 = vmatpush.xpose.msra.mxu0 0.0
        %1569 = vmatpush.xpose.msra.mxu0 0.0
        %1570 = vmatpush.xpose.msra.mxu0 0.0
        %1571 = vmatpush.xpose.msra.mxu0 0.0
        %1572 = vmatpush.xpose.msra.mxu0 0.0
        %1573 = vmatpush.xpose.msra.mxu0 %v1556
        %1574 = vmatmul.f32.gmra.mxu0 %v1554
        %v1575 = vpop.f32.mrf.mxu0
        %v1576 = vadd.f32 0.0, %v1575
        %1577 = vdwg.mxu0
        %1578 = vrot.lane.b32.xlu0 %v1136, 80
        %v1579 = vpop.permute.xlu0 %1578
        %1580 = vrot.lane.b32.xlu0 %v1150, 80
        %v1581 = vpop.permute.xlu0 %1580
        %v1582 = vsel %vm1166, %v1579, 0
        %v1584 = vsel %vm1166, %v1581, 0
        %1586 = vmatpush.xpose.msra.mxu0 0.0
        %1587 = vmatpush.xpose.msra.mxu0 0.0
        %1588 = vmatpush.xpose.msra.mxu0 0.0
        %1589 = vmatpush.xpose.msra.mxu0 0.0
        %1590 = vmatpush.xpose.msra.mxu0 0.0
        %1591 = vmatpush.xpose.msra.mxu0 0.0
        %1592 = vmatpush.xpose.msra.mxu0 0.0
        %1593 = vmatpush.xpose.msra.mxu0 0.0
        %1594 = vmatpush.xpose.msra.mxu0 0.0
        %1595 = vmatpush.xpose.msra.mxu0 0.0
        %1596 = vmatpush.xpose.msra.mxu0 0.0
        %1597 = vmatpush.xpose.msra.mxu0 0.0
        %1598 = vmatpush.xpose.msra.mxu0 0.0
        %1599 = vmatpush.xpose.msra.mxu0 0.0
        %1600 = vmatpush.xpose.msra.mxu0 0.0
        %1601 = vmatpush.xpose.msra.mxu0 %v1584
        %1602 = vmatmul.f32.gmra.mxu0 %v1582
        %v1603 = vpop.f32.mrf.mxu0
        %v1604 = vadd.f32 0.0, %v1603
        %1605 = vdwg.mxu0
        %v1606 = vsel %vm1219, %v1576, -inf
        %1607 = vmax.xlane.f32.xlu0 %v1606
        %v1608 = vpop.xlane.xlu0 %1607
        %v1609 = vsel %vm1219, %v1604, -inf
        %1610 = vmax.xlane.f32.xlu0 %v1609
        %v1611 = vpop.xlane.xlu0 %1610
        %v1612 = vsub.f32 %v1576, %v1608
        %v1613 = vsub.f32 %v1604, %v1611
        %v1614 = vmul.f32 %v1612, 1.442695
        %v1615 = vpow.pop %v1614
        %v1616 = vmul.f32 %v1613, 1.442695
        %v1617 = vpow.pop %v1616
        %v1618 = vsel %vm1219, %v1615, 0.0
        %1619 = vadd.xlane.f32.xlu0 %v1618
        %v1620 = vpop.xlane.xlu0 %1619
        %v1621 = vsel %vm1219, %v1617, 0.0
        %1622 = vadd.xlane.f32.xlu0 %v1621
        %v1623 = vpop.xlane.xlu0 %1622
        %v1624 = vrcp.pop %v1620
        %v1625 = vrcp.pop %v1623
        %v1626 = vmul.f32 %v1615, %v1624
        %v1627 = vmul.f32 %v1617, %v1625
        %1628 = vrot.lane.b32.xlu0 %v1162, 80
        %v1629 = vpop.permute.xlu0 %1628
        %v1632 = vsel %vm1219, %v1626, 0
        %1634 = vmatpush.msra.mxu0 0.0
        %1635 = vmatpush.msra.mxu0 0.0
        %1636 = vmatpush.msra.mxu0 0.0
        %1637 = vmatpush.msra.mxu0 0.0
        %1638 = vmatpush.msra.mxu0 0.0
        %1639 = vmatpush.msra.mxu0 0.0
        %1640 = vmatpush.msra.mxu0 0.0
        %1641 = vmatpush.msra.mxu0 0.0
        %1642 = vmatpush.msra.mxu0 0.0
        %1643 = vmatpush.msra.mxu0 0.0
        %1644 = vmatpush.msra.mxu0 0.0
        %1645 = vmatpush.msra.mxu0 0.0
        %1646 = vmatpush.msra.mxu0 0.0
        %1647 = vmatpush.msra.mxu0 0.0
        %1648 = vmatpush.msra.mxu0 0.0
        %1649 = vmatpush.msra.mxu0 %v1629
        %1650 = vmatmul.f32.gmra.mxu0 %v1632
        %v1651 = vpop.f32.mrf.mxu0
        %v1652 = vadd.f32 0.0, %v1651
        %1653 = vdwg.mxu0
        %1654 = vrot.lane.b32.xlu0 %v1164, 80
        %v1655 = vpop.permute.xlu0 %1654
        %v1658 = vsel %vm1219, %v1627, 0
        %1660 = vmatpush.msra.mxu0 0.0
        %1661 = vmatpush.msra.mxu0 0.0
        %1662 = vmatpush.msra.mxu0 0.0
        %1663 = vmatpush.msra.mxu0 0.0
        %1664 = vmatpush.msra.mxu0 0.0
        %1665 = vmatpush.msra.mxu0 0.0
        %1666 = vmatpush.msra.mxu0 0.0
        %1667 = vmatpush.msra.mxu0 0.0
        %1668 = vmatpush.msra.mxu0 0.0
        %1669 = vmatpush.msra.mxu0 0.0
        %1670 = vmatpush.msra.mxu0 0.0
        %1671 = vmatpush.msra.mxu0 0.0
        %1672 = vmatpush.msra.mxu0 0.0
        %1673 = vmatpush.msra.mxu0 0.0
        %1674 = vmatpush.msra.mxu0 0.0
        %1675 = vmatpush.msra.mxu0 %v1655
        %1676 = vmatmul.f32.gmra.mxu0 %v1658
        %v1677 = vpop.f32.mrf.mxu0
        %v1678 = vadd.f32 0.0, %v1677
        %1679 = vdwg.mxu0
        %1680 = vrot.lane.b32.xlu0 %v1134, 64
        %v1681 = vpop.permute.xlu0 %1680
        %1682 = vrot.lane.b32.xlu0 %v1148, 64
        %v1683 = vpop.permute.xlu0 %1682
        %v1684 = vsel %vm1166, %v1681, 0
        %v1686 = vsel %vm1166, %v1683, 0
        %1688 = vmatpush.xpose.msra.mxu0 0.0
        %1689 = vmatpush.xpose.msra.mxu0 0.0
        %1690 = vmatpush.xpose.msra.mxu0 0.0
        %1691 = vmatpush.xpose.msra.mxu0 0.0
        %1692 = vmatpush.xpose.msra.mxu0 0.0
        %1693 = vmatpush.xpose.msra.mxu0 0.0
        %1694 = vmatpush.xpose.msra.mxu0 0.0
        %1695 = vmatpush.xpose.msra.mxu0 0.0
        %1696 = vmatpush.xpose.msra.mxu0 0.0
        %1697 = vmatpush.xpose.msra.mxu0 0.0
        %1698 = vmatpush.xpose.msra.mxu0 0.0
        %1699 = vmatpush.xpose.msra.mxu0 0.0
        %1700 = vmatpush.xpose.msra.mxu0 0.0
        %1701 = vmatpush.xpose.msra.mxu0 0.0
        %1702 = vmatpush.xpose.msra.mxu0 0.0
        %1703 = vmatpush.xpose.msra.mxu0 %v1686
        %1704 = vmatmul.f32.gmra.mxu0 %v1684
        %v1705 = vpop.f32.mrf.mxu0
        %v1706 = vadd.f32 0.0, %v1705
        %1707 = vdwg.mxu0
        %1708 = vrot.lane.b32.xlu0 %v1136, 64
        %v1709 = vpop.permute.xlu0 %1708
        %1710 = vrot.lane.b32.xlu0 %v1150, 64
        %v1711 = vpop.permute.xlu0 %1710
        %v1712 = vsel %vm1166, %v1709, 0
        %v1714 = vsel %vm1166, %v1711, 0
        %1716 = vmatpush.xpose.msra.mxu0 0.0
        %1717 = vmatpush.xpose.msra.mxu0 0.0
        %1718 = vmatpush.xpose.msra.mxu0 0.0
        %1719 = vmatpush.xpose.msra.mxu0 0.0
        %1720 = vmatpush.xpose.msra.mxu0 0.0
        %1721 = vmatpush.xpose.msra.mxu0 0.0
        %1722 = vmatpush.xpose.msra.mxu0 0.0
        %1723 = vmatpush.xpose.msra.mxu0 0.0
        %1724 = vmatpush.xpose.msra.mxu0 0.0
        %1725 = vmatpush.xpose.msra.mxu0 0.0
        %1726 = vmatpush.xpose.msra.mxu0 0.0
        %1727 = vmatpush.xpose.msra.mxu0 0.0
        %1728 = vmatpush.xpose.msra.mxu0 0.0
        %1729 = vmatpush.xpose.msra.mxu0 0.0
        %1730 = vmatpush.xpose.msra.mxu0 0.0
        %1731 = vmatpush.xpose.msra.mxu0 %v1714
        %1732 = vmatmul.f32.gmra.mxu0 %v1712
        %v1733 = vpop.f32.mrf.mxu0
        %v1734 = vadd.f32 0.0, %v1733
        %1735 = vdwg.mxu0
        %v1736 = vsel %vm1219, %v1706, -inf
        %1737 = vmax.xlane.f32.xlu0 %v1736
        %v1738 = vpop.xlane.xlu0 %1737
        %v1739 = vsel %vm1219, %v1734, -inf
        %1740 = vmax.xlane.f32.xlu0 %v1739
        %v1741 = vpop.xlane.xlu0 %1740
        %v1742 = vsub.f32 %v1706, %v1738
        %v1743 = vsub.f32 %v1734, %v1741
        %v1744 = vmul.f32 %v1742, 1.442695
        %v1745 = vpow.pop %v1744
        %v1746 = vmul.f32 %v1743, 1.442695
        %v1747 = vpow.pop %v1746
        %v1748 = vsel %vm1219, %v1745, 0.0
        %1749 = vadd.xlane.f32.xlu0 %v1748
        %v1750 = vpop.xlane.xlu0 %1749
        %v1751 = vsel %vm1219, %v1747, 0.0
        %1752 = vadd.xlane.f32.xlu0 %v1751
        %v1753 = vpop.xlane.xlu0 %1752
        %v1754 = vrcp.pop %v1750
        %v1755 = vrcp.pop %v1753
        %v1756 = vmul.f32 %v1745, %v1754
        %v1757 = vmul.f32 %v1747, %v1755
        %1758 = vrot.lane.b32.xlu0 %v1162, 64
        %v1759 = vpop.permute.xlu0 %1758
        %v1762 = vsel %vm1219, %v1756, 0
        %1764 = vmatpush.msra.mxu0 0.0
        %1765 = vmatpush.msra.mxu0 0.0
        %1766 = vmatpush.msra.mxu0 0.0
        %1767 = vmatpush.msra.mxu0 0.0
        %1768 = vmatpush.msra.mxu0 0.0
        %1769 = vmatpush.msra.mxu0 0.0
        %1770 = vmatpush.msra.mxu0 0.0
        %1771 = vmatpush.msra.mxu0 0.0
        %1772 = vmatpush.msra.mxu0 0.0
        %1773 = vmatpush.msra.mxu0 0.0
        %1774 = vmatpush.msra.mxu0 0.0
        %1775 = vmatpush.msra.mxu0 0.0
        %1776 = vmatpush.msra.mxu0 0.0
        %1777 = vmatpush.msra.mxu0 0.0
        %1778 = vmatpush.msra.mxu0 0.0
        %1779 = vmatpush.msra.mxu0 %v1759
        %1780 = vmatmul.f32.gmra.mxu0 %v1762
        %v1781 = vpop.f32.mrf.mxu0
        %v1782 = vadd.f32 0.0, %v1781
        %1783 = vdwg.mxu0
        %1784 = vrot.lane.b32.xlu0 %v1164, 64
        %v1785 = vpop.permute.xlu0 %1784
        %v1788 = vsel %vm1219, %v1757, 0
        %1790 = vmatpush.msra.mxu0 0.0
        %1791 = vmatpush.msra.mxu0 0.0
        %1792 = vmatpush.msra.mxu0 0.0
        %1793 = vmatpush.msra.mxu0 0.0
        %1794 = vmatpush.msra.mxu0 0.0
        %1795 = vmatpush.msra.mxu0 0.0
        %1796 = vmatpush.msra.mxu0 0.0
        %1797 = vmatpush.msra.mxu0 0.0
        %1798 = vmatpush.msra.mxu0 0.0
        %1799 = vmatpush.msra.mxu0 0.0
        %1800 = vmatpush.msra.mxu0 0.0
        %1801 = vmatpush.msra.mxu0 0.0
        %1802 = vmatpush.msra.mxu0 0.0
        %1803 = vmatpush.msra.mxu0 0.0
        %1804 = vmatpush.msra.mxu0 0.0
        %1805 = vmatpush.msra.mxu0 %v1785
        %1806 = vmatmul.f32.gmra.mxu0 %v1788
        %v1807 = vpop.f32.mrf.mxu0
        %v1808 = vadd.f32 0.0, %v1807
        %1809 = vdwg.mxu0
        %1810 = vrot.lane.b32.xlu0 %v1134, 48
        %v1811 = vpop.permute.xlu0 %1810
        %1812 = vrot.lane.b32.xlu0 %v1148, 48
        %v1813 = vpop.permute.xlu0 %1812
        %v1814 = vsel %vm1166, %v1811, 0
        %v1816 = vsel %vm1166, %v1813, 0
        %1818 = vmatpush.xpose.msra.mxu0 0.0
        %1819 = vmatpush.xpose.msra.mxu0 0.0
        %1820 = vmatpush.xpose.msra.mxu0 0.0
        %1821 = vmatpush.xpose.msra.mxu0 0.0
        %1822 = vmatpush.xpose.msra.mxu0 0.0
        %1823 = vmatpush.xpose.msra.mxu0 0.0
        %1824 = vmatpush.xpose.msra.mxu0 0.0
        %1825 = vmatpush.xpose.msra.mxu0 0.0
        %1826 = vmatpush.xpose.msra.mxu0 0.0
        %1827 = vmatpush.xpose.msra.mxu0 0.0
        %1828 = vmatpush.xpose.msra.mxu0 0.0
        %1829 = vmatpush.xpose.msra.mxu0 0.0
        %1830 = vmatpush.xpose.msra.mxu0 0.0
        %1831 = vmatpush.xpose.msra.mxu0 0.0
        %1832 = vmatpush.xpose.msra.mxu0 0.0
        %1833 = vmatpush.xpose.msra.mxu0 %v1816
        %1834 = vmatmul.f32.gmra.mxu0 %v1814
        %v1835 = vpop.f32.mrf.mxu0
        %v1836 = vadd.f32 0.0, %v1835
        %1837 = vdwg.mxu0
        %1838 = vrot.lane.b32.xlu0 %v1136, 48
        %v1839 = vpop.permute.xlu0 %1838
        %1840 = vrot.lane.b32.xlu0 %v1150, 48
        %v1841 = vpop.permute.xlu0 %1840
        %v1842 = vsel %vm1166, %v1839, 0
        %v1844 = vsel %vm1166, %v1841, 0
        %1846 = vmatpush.xpose.msra.mxu0 0.0
        %1847 = vmatpush.xpose.msra.mxu0 0.0
        %1848 = vmatpush.xpose.msra.mxu0 0.0
        %1849 = vmatpush.xpose.msra.mxu0 0.0
        %1850 = vmatpush.xpose.msra.mxu0 0.0
        %1851 = vmatpush.xpose.msra.mxu0 0.0
        %1852 = vmatpush.xpose.msra.mxu0 0.0
        %1853 = vmatpush.xpose.msra.mxu0 0.0
        %1854 = vmatpush.xpose.msra.mxu0 0.0
        %1855 = vmatpush.xpose.msra.mxu0 0.0
        %1856 = vmatpush.xpose.msra.mxu0 0.0
        %1857 = vmatpush.xpose.msra.mxu0 0.0
        %1858 = vmatpush.xpose.msra.mxu0 0.0
        %1859 = vmatpush.xpose.msra.mxu0 0.0
        %1860 = vmatpush.xpose.msra.mxu0 0.0
        %1861 = vmatpush.xpose.msra.mxu0 %v1844
        %1862 = vmatmul.f32.gmra.mxu0 %v1842
        %v1863 = vpop.f32.mrf.mxu0
        %v1864 = vadd.f32 0.0, %v1863
        %1865 = vdwg.mxu0
        %v1866 = vsel %vm1219, %v1836, -inf
        %1867 = vmax.xlane.f32.xlu0 %v1866
        %v1868 = vpop.xlane.xlu0 %1867
        %v1869 = vsel %vm1219, %v1864, -inf
        %1870 = vmax.xlane.f32.xlu0 %v1869
        %v1871 = vpop.xlane.xlu0 %1870
        %v1872 = vsub.f32 %v1836, %v1868
        %v1873 = vsub.f32 %v1864, %v1871
        %v1874 = vmul.f32 %v1872, 1.442695
        %v1875 = vpow.pop %v1874
        %v1876 = vmul.f32 %v1873, 1.442695
        %v1877 = vpow.pop %v1876
        %v1878 = vsel %vm1219, %v1875, 0.0
        %1879 = vadd.xlane.f32.xlu0 %v1878
        %v1880 = vpop.xlane.xlu0 %1879
        %v1881 = vsel %vm1219, %v1877, 0.0
        %1882 = vadd.xlane.f32.xlu0 %v1881
        %v1883 = vpop.xlane.xlu0 %1882
        %v1884 = vrcp.pop %v1880
        %v1885 = vrcp.pop %v1883
        %v1886 = vmul.f32 %v1875, %v1884
        %v1887 = vmul.f32 %v1877, %v1885
        %1888 = vrot.lane.b32.xlu0 %v1162, 48
        %v1889 = vpop.permute.xlu0 %1888
        %v1892 = vsel %vm1219, %v1886, 0
        %1894 = vmatpush.msra.mxu0 0.0
        %1895 = vmatpush.msra.mxu0 0.0
        %1896 = vmatpush.msra.mxu0 0.0
        %1897 = vmatpush.msra.mxu0 0.0
        %1898 = vmatpush.msra.mxu0 0.0
        %1899 = vmatpush.msra.mxu0 0.0
        %1900 = vmatpush.msra.mxu0 0.0
        %1901 = vmatpush.msra.mxu0 0.0
        %1902 = vmatpush.msra.mxu0 0.0
        %1903 = vmatpush.msra.mxu0 0.0
        %1904 = vmatpush.msra.mxu0 0.0
        %1905 = vmatpush.msra.mxu0 0.0
        %1906 = vmatpush.msra.mxu0 0.0
        %1907 = vmatpush.msra.mxu0 0.0
        %1908 = vmatpush.msra.mxu0 0.0
        %1909 = vmatpush.msra.mxu0 %v1889
        %1910 = vmatmul.f32.gmra.mxu0 %v1892
        %v1911 = vpop.f32.mrf.mxu0
        %v1912 = vadd.f32 0.0, %v1911
        %1913 = vdwg.mxu0
        %1914 = vrot.lane.b32.xlu0 %v1164, 48
        %v1915 = vpop.permute.xlu0 %1914
        %v1918 = vsel %vm1219, %v1887, 0
        %1920 = vmatpush.msra.mxu0 0.0
        %1921 = vmatpush.msra.mxu0 0.0
        %1922 = vmatpush.msra.mxu0 0.0
        %1923 = vmatpush.msra.mxu0 0.0
        %1924 = vmatpush.msra.mxu0 0.0
        %1925 = vmatpush.msra.mxu0 0.0
        %1926 = vmatpush.msra.mxu0 0.0
        %1927 = vmatpush.msra.mxu0 0.0
        %1928 = vmatpush.msra.mxu0 0.0
        %1929 = vmatpush.msra.mxu0 0.0
        %1930 = vmatpush.msra.mxu0 0.0
        %1931 = vmatpush.msra.mxu0 0.0
        %1932 = vmatpush.msra.mxu0 0.0
        %1933 = vmatpush.msra.mxu0 0.0
        %1934 = vmatpush.msra.mxu0 0.0
        %1935 = vmatpush.msra.mxu0 %v1915
        %1936 = vmatmul.f32.gmra.mxu0 %v1918
        %v1937 = vpop.f32.mrf.mxu0
        %v1938 = vadd.f32 0.0, %v1937
        %1939 = vdwg.mxu0
        %1940 = vrot.lane.b32.xlu0 %v1134, 32
        %v1941 = vpop.permute.xlu0 %1940
        %1942 = vrot.lane.b32.xlu0 %v1148, 32
        %v1943 = vpop.permute.xlu0 %1942
        %v1944 = vsel %vm1166, %v1941, 0
        %v1946 = vsel %vm1166, %v1943, 0
        %1948 = vmatpush.xpose.msra.mxu0 0.0
        %1949 = vmatpush.xpose.msra.mxu0 0.0
        %1950 = vmatpush.xpose.msra.mxu0 0.0
        %1951 = vmatpush.xpose.msra.mxu0 0.0
        %1952 = vmatpush.xpose.msra.mxu0 0.0
        %1953 = vmatpush.xpose.msra.mxu0 0.0
        %1954 = vmatpush.xpose.msra.mxu0 0.0
        %1955 = vmatpush.xpose.msra.mxu0 0.0
        %1956 = vmatpush.xpose.msra.mxu0 0.0
        %1957 = vmatpush.xpose.msra.mxu0 0.0
        %1958 = vmatpush.xpose.msra.mxu0 0.0
        %1959 = vmatpush.xpose.msra.mxu0 0.0
        %1960 = vmatpush.xpose.msra.mxu0 0.0
        %1961 = vmatpush.xpose.msra.mxu0 0.0
        %1962 = vmatpush.xpose.msra.mxu0 0.0
        %1963 = vmatpush.xpose.msra.mxu0 %v1946
        %1964 = vmatmul.f32.gmra.mxu0 %v1944
        %v1965 = vpop.f32.mrf.mxu0
        %v1966 = vadd.f32 0.0, %v1965
        %1967 = vdwg.mxu0
        %1968 = vrot.lane.b32.xlu0 %v1136, 32
        %v1969 = vpop.permute.xlu0 %1968
        %1970 = vrot.lane.b32.xlu0 %v1150, 32
        %v1971 = vpop.permute.xlu0 %1970
        %v1972 = vsel %vm1166, %v1969, 0
        %v1974 = vsel %vm1166, %v1971, 0
        %1976 = vmatpush.xpose.msra.mxu0 0.0
        %1977 = vmatpush.xpose.msra.mxu0 0.0
        %1978 = vmatpush.xpose.msra.mxu0 0.0
        %1979 = vmatpush.xpose.msra.mxu0 0.0
        %1980 = vmatpush.xpose.msra.mxu0 0.0
        %1981 = vmatpush.xpose.msra.mxu0 0.0
        %1982 = vmatpush.xpose.msra.mxu0 0.0
        %1983 = vmatpush.xpose.msra.mxu0 0.0
        %1984 = vmatpush.xpose.msra.mxu0 0.0
        %1985 = vmatpush.xpose.msra.mxu0 0.0
        %1986 = vmatpush.xpose.msra.mxu0 0.0
        %1987 = vmatpush.xpose.msra.mxu0 0.0
        %1988 = vmatpush.xpose.msra.mxu0 0.0
        %1989 = vmatpush.xpose.msra.mxu0 0.0
        %1990 = vmatpush.xpose.msra.mxu0 0.0
        %1991 = vmatpush.xpose.msra.mxu0 %v1974
        %1992 = vmatmul.f32.gmra.mxu0 %v1972
        %v1993 = vpop.f32.mrf.mxu0
        %v1994 = vadd.f32 0.0, %v1993
        %1995 = vdwg.mxu0
        %v1996 = vsel %vm1219, %v1966, -inf
        %1997 = vmax.xlane.f32.xlu0 %v1996
        %v1998 = vpop.xlane.xlu0 %1997
        %v1999 = vsel %vm1219, %v1994, -inf
        %2000 = vmax.xlane.f32.xlu0 %v1999
        %v2001 = vpop.xlane.xlu0 %2000
        %v2002 = vsub.f32 %v1966, %v1998
        %v2003 = vsub.f32 %v1994, %v2001
        %v2004 = vmul.f32 %v2002, 1.442695
        %v2005 = vpow.pop %v2004
        %v2006 = vmul.f32 %v2003, 1.442695
        %v2007 = vpow.pop %v2006
        %v2008 = vsel %vm1219, %v2005, 0.0
        %2009 = vadd.xlane.f32.xlu0 %v2008
        %v2010 = vpop.xlane.xlu0 %2009
        %v2011 = vsel %vm1219, %v2007, 0.0
        %2012 = vadd.xlane.f32.xlu0 %v2011
        %v2013 = vpop.xlane.xlu0 %2012
        %v2014 = vrcp.pop %v2010
        %v2015 = vrcp.pop %v2013
        %v2016 = vmul.f32 %v2005, %v2014
        %v2017 = vmul.f32 %v2007, %v2015
        %2018 = vrot.lane.b32.xlu0 %v1162, 32
        %v2019 = vpop.permute.xlu0 %2018
        %v2022 = vsel %vm1219, %v2016, 0
        %2024 = vmatpush.msra.mxu0 0.0
        %2025 = vmatpush.msra.mxu0 0.0
        %2026 = vmatpush.msra.mxu0 0.0
        %2027 = vmatpush.msra.mxu0 0.0
        %2028 = vmatpush.msra.mxu0 0.0
        %2029 = vmatpush.msra.mxu0 0.0
        %2030 = vmatpush.msra.mxu0 0.0
        %2031 = vmatpush.msra.mxu0 0.0
        %2032 = vmatpush.msra.mxu0 0.0
        %2033 = vmatpush.msra.mxu0 0.0
        %2034 = vmatpush.msra.mxu0 0.0
        %2035 = vmatpush.msra.mxu0 0.0
        %2036 = vmatpush.msra.mxu0 0.0
        %2037 = vmatpush.msra.mxu0 0.0
        %2038 = vmatpush.msra.mxu0 0.0
        %2039 = vmatpush.msra.mxu0 %v2019
        %2040 = vmatmul.f32.gmra.mxu0 %v2022
        %v2041 = vpop.f32.mrf.mxu0
        %v2042 = vadd.f32 0.0, %v2041
        %2043 = vdwg.mxu0
        %2044 = vrot.lane.b32.xlu0 %v1164, 32
        %v2045 = vpop.permute.xlu0 %2044
        %v2048 = vsel %vm1219, %v2017, 0
        %2050 = vmatpush.msra.mxu0 0.0
        %2051 = vmatpush.msra.mxu0 0.0
        %2052 = vmatpush.msra.mxu0 0.0
        %2053 = vmatpush.msra.mxu0 0.0
        %2054 = vmatpush.msra.mxu0 0.0
        %2055 = vmatpush.msra.mxu0 0.0
        %2056 = vmatpush.msra.mxu0 0.0
        %2057 = vmatpush.msra.mxu0 0.0
        %2058 = vmatpush.msra.mxu0 0.0
        %2059 = vmatpush.msra.mxu0 0.0
        %2060 = vmatpush.msra.mxu0 0.0
        %2061 = vmatpush.msra.mxu0 0.0
        %2062 = vmatpush.msra.mxu0 0.0
        %2063 = vmatpush.msra.mxu0 0.0
        %2064 = vmatpush.msra.mxu0 0.0
        %2065 = vmatpush.msra.mxu0 %v2045
        %2066 = vmatmul.f32.gmra.mxu0 %v2048
        %v2067 = vpop.f32.mrf.mxu0
        %v2068 = vadd.f32 0.0, %v2067
        %2069 = vdwg.mxu0
        %2070 = vrot.lane.b32.xlu0 %v1134, 16
        %v2071 = vpop.permute.xlu0 %2070
        %2072 = vrot.lane.b32.xlu0 %v1148, 16
        %v2073 = vpop.permute.xlu0 %2072
        %v2074 = vsel %vm1166, %v2071, 0
        %v2076 = vsel %vm1166, %v2073, 0
        %2078 = vmatpush.xpose.msra.mxu0 0.0
        %2079 = vmatpush.xpose.msra.mxu0 0.0
        %2080 = vmatpush.xpose.msra.mxu0 0.0
        %2081 = vmatpush.xpose.msra.mxu0 0.0
        %2082 = vmatpush.xpose.msra.mxu0 0.0
        %2083 = vmatpush.xpose.msra.mxu0 0.0
        %2084 = vmatpush.xpose.msra.mxu0 0.0
        %2085 = vmatpush.xpose.msra.mxu0 0.0
        %2086 = vmatpush.xpose.msra.mxu0 0.0
        %2087 = vmatpush.xpose.msra.mxu0 0.0
        %2088 = vmatpush.xpose.msra.mxu0 0.0
        %2089 = vmatpush.xpose.msra.mxu0 0.0
        %2090 = vmatpush.xpose.msra.mxu0 0.0
        %2091 = vmatpush.xpose.msra.mxu0 0.0
        %2092 = vmatpush.xpose.msra.mxu0 0.0
        %2093 = vmatpush.xpose.msra.mxu0 %v2076
        %2094 = vmatmul.f32.gmra.mxu0 %v2074
        %v2095 = vpop.f32.mrf.mxu0
        %v2096 = vadd.f32 0.0, %v2095
        %2097 = vdwg.mxu0
        %2098 = vrot.lane.b32.xlu0 %v1136, 16
        %v2099 = vpop.permute.xlu0 %2098
        %2100 = vrot.lane.b32.xlu0 %v1150, 16
        %v2101 = vpop.permute.xlu0 %2100
        %v2102 = vsel %vm1166, %v2099, 0
        %v2104 = vsel %vm1166, %v2101, 0
        %2106 = vmatpush.xpose.msra.mxu0 0.0
        %2107 = vmatpush.xpose.msra.mxu0 0.0
        %2108 = vmatpush.xpose.msra.mxu0 0.0
        %2109 = vmatpush.xpose.msra.mxu0 0.0
        %2110 = vmatpush.xpose.msra.mxu0 0.0
        %2111 = vmatpush.xpose.msra.mxu0 0.0
        %2112 = vmatpush.xpose.msra.mxu0 0.0
        %2113 = vmatpush.xpose.msra.mxu0 0.0
        %2114 = vmatpush.xpose.msra.mxu0 0.0
        %2115 = vmatpush.xpose.msra.mxu0 0.0
        %2116 = vmatpush.xpose.msra.mxu0 0.0
        %2117 = vmatpush.xpose.msra.mxu0 0.0
        %2118 = vmatpush.xpose.msra.mxu0 0.0
        %2119 = vmatpush.xpose.msra.mxu0 0.0
        %2120 = vmatpush.xpose.msra.mxu0 0.0
        %2121 = vmatpush.xpose.msra.mxu0 %v2104
        %2122 = vmatmul.f32.gmra.mxu0 %v2102
        %v2123 = vpop.f32.mrf.mxu0
        %v2124 = vadd.f32 0.0, %v2123
        %2125 = vdwg.mxu0
        %v2126 = vsel %vm1219, %v2096, -inf
        %2127 = vmax.xlane.f32.xlu0 %v2126
        %v2128 = vpop.xlane.xlu0 %2127
        %v2129 = vsel %vm1219, %v2124, -inf
        %2130 = vmax.xlane.f32.xlu0 %v2129
        %v2131 = vpop.xlane.xlu0 %2130
        %v2132 = vsub.f32 %v2096, %v2128
        %v2133 = vsub.f32 %v2124, %v2131
        %v2134 = vmul.f32 %v2132, 1.442695
        %v2135 = vpow.pop %v2134
        %v2136 = vmul.f32 %v2133, 1.442695
        %v2137 = vpow.pop %v2136
        %v2138 = vsel %vm1219, %v2135, 0.0
        %2139 = vadd.xlane.f32.xlu0 %v2138
        %v2140 = vpop.xlane.xlu0 %2139
        %v2141 = vsel %vm1219, %v2137, 0.0
        %2142 = vadd.xlane.f32.xlu0 %v2141
        %v2143 = vpop.xlane.xlu0 %2142
        %v2144 = vrcp.pop %v2140
        %v2145 = vrcp.pop %v2143
        %v2146 = vmul.f32 %v2135, %v2144
        %v2147 = vmul.f32 %v2137, %v2145
        %2148 = vrot.lane.b32.xlu0 %v1162, 16
        %v2149 = vpop.permute.xlu0 %2148
        %v2152 = vsel %vm1219, %v2146, 0
        %2154 = vmatpush.msra.mxu0 0.0
        %2155 = vmatpush.msra.mxu0 0.0
        %2156 = vmatpush.msra.mxu0 0.0
        %2157 = vmatpush.msra.mxu0 0.0
        %2158 = vmatpush.msra.mxu0 0.0
        %2159 = vmatpush.msra.mxu0 0.0
        %2160 = vmatpush.msra.mxu0 0.0
        %2161 = vmatpush.msra.mxu0 0.0
        %2162 = vmatpush.msra.mxu0 0.0
        %2163 = vmatpush.msra.mxu0 0.0
        %2164 = vmatpush.msra.mxu0 0.0
        %2165 = vmatpush.msra.mxu0 0.0
        %2166 = vmatpush.msra.mxu0 0.0
        %2167 = vmatpush.msra.mxu0 0.0
        %2168 = vmatpush.msra.mxu0 0.0
        %2169 = vmatpush.msra.mxu0 %v2149
        %2170 = vmatmul.f32.gmra.mxu0 %v2152
        %v2171 = vpop.f32.mrf.mxu0
        %v2172 = vadd.f32 0.0, %v2171
        %2173 = vdwg.mxu0
        %2174 = vrot.lane.b32.xlu0 %v1164, 16
        %v2175 = vpop.permute.xlu0 %2174
        %v2178 = vsel %vm1219, %v2147, 0
        %2180 = vmatpush.msra.mxu0 0.0
        %2181 = vmatpush.msra.mxu0 0.0
        %2182 = vmatpush.msra.mxu0 0.0
        %2183 = vmatpush.msra.mxu0 0.0
        %2184 = vmatpush.msra.mxu0 0.0
        %2185 = vmatpush.msra.mxu0 0.0
        %2186 = vmatpush.msra.mxu0 0.0
        %2187 = vmatpush.msra.mxu0 0.0
        %2188 = vmatpush.msra.mxu0 0.0
        %2189 = vmatpush.msra.mxu0 0.0
        %2190 = vmatpush.msra.mxu0 0.0
        %2191 = vmatpush.msra.mxu0 0.0
        %2192 = vmatpush.msra.mxu0 0.0
        %2193 = vmatpush.msra.mxu0 0.0
        %2194 = vmatpush.msra.mxu0 0.0
        %2195 = vmatpush.msra.mxu0 %v2175
        %2196 = vmatmul.f32.gmra.mxu0 %v2178
        %v2197 = vpop.f32.mrf.mxu0
        %v2198 = vadd.f32 0.0, %v2197
        %2199 = vdwg.mxu0
        %2202 = vrot.lane.b32.xlu0 %v1391, 16
        %v2203 = vpop.permute.xlu0 %2202
        %2204 = vrot.lane.b32.xlu0 %v1418, 16
        %v2205 = vpop.permute.xlu0 %2204
        %2210 = vrot.lane.b32.xlu0 %v1522, 32
        %v2211 = vpop.permute.xlu0 %2210
        %2212 = vrot.lane.b32.xlu0 %v1548, 32
        %v2213 = vpop.permute.xlu0 %2212
        %2218 = vrot.lane.b32.xlu0 %v1652, 48
        %v2219 = vpop.permute.xlu0 %2218
        %2220 = vrot.lane.b32.xlu0 %v1678, 48
        %v2221 = vpop.permute.xlu0 %2220
        %2226 = vrot.lane.b32.xlu0 %v1782, 64
        %v2227 = vpop.permute.xlu0 %2226
        %2228 = vrot.lane.b32.xlu0 %v1808, 64
        %v2229 = vpop.permute.xlu0 %2228
        %2234 = vrot.lane.b32.xlu0 %v1912, 80
        %v2235 = vpop.permute.xlu0 %2234
        %2236 = vrot.lane.b32.xlu0 %v1938, 80
        %v2237 = vpop.permute.xlu0 %2236
        %2242 = vrot.lane.b32.xlu0 %v2042, 96
        %v2243 = vpop.permute.xlu0 %2242
        %2244 = vrot.lane.b32.xlu0 %v2068, 96
        %v2245 = vpop.permute.xlu0 %2244
        %2250 = vrot.lane.b32.xlu0 %v2172, 112
        %v2251 = vpop.permute.xlu0 %2250
        %2252 = vrot.lane.b32.xlu0 %v2198, 112
        %v2253 = vpop.permute.xlu0 %2252
        %v2256 = vsel %vm1166, %v1263, %v2203
        %v2257 = vsel %vm1166, %v1286, %v2205
        %vm2258 = vcmask 261120
        %v2259 = vsel %vm2258, %v2256, %v2211
        %v2260 = vsel %vm2258, %v2257, %v2213
        %vm2261 = vcmask 392192
        %v2262 = vsel %vm2261, %v2259, %v2219
        %v2263 = vsel %vm2261, %v2260, %v2221
        %vm2264 = vcmask 523264
        %v2265 = vsel %vm2264, %v2262, %v2227
        %v2266 = vsel %vm2264, %v2263, %v2229
        %vm2267 = vcmask 654336
        %v2268 = vsel %vm2267, %v2265, %v2235
        %v2269 = vsel %vm2267, %v2266, %v2237
        %vm2270 = vcmask 785408
        %v2271 = vsel %vm2270, %v2268, %v2243
        %v2272 = vsel %vm2270, %v2269, %v2245
        %vm2273 = vcmask 916480
        %v2274 = vsel %vm2273, %v2271, %v2251
        %v2275 = vsel %vm2273, %v2272, %v2253
        %v2276 = vpack.c.bf16 %v2275, %v2274
        %v2277 = vld [vmem:[%s707] sm:$0xf]
        %v2278 = vld [vmem:[%s707 + $0x4] sm:$0xf]
        %v2279 = vld [vmem:[%s707 + $0x8] sm:$0xf]
        %v2280 = vld [vmem:[%s707 + $0xc] sm:$0xf]
        %v2281 = vld [vmem:[%s707 + $0x10] sm:$0xf]
        %v2282 = vld [vmem:[%s707 + $0x14] sm:$0xf]
        %v2283 = vld [vmem:[%s707 + $0x18] sm:$0xf]
        %v2284 = vld [vmem:[%s707 + $0x1c] sm:$0xf]
        %v2285 = vld [vmem:[%s707 + $0x20] sm:$0xf]
        %v2286 = vld [vmem:[%s707 + $0x24] sm:$0xf]
        %v2287 = vld [vmem:[%s707 + $0x28] sm:$0xf]
        %v2288 = vld [vmem:[%s707 + $0x2c] sm:$0xf]
        %v2289 = vld [vmem:[%s707 + $0x30] sm:$0xf]
        %v2290 = vld [vmem:[%s707 + $0x34] sm:$0xf]
        %v2291 = vld [vmem:[%s707 + $0x38] sm:$0xf]
        %v2292 = vld [vmem:[%s707 + $0x3c] sm:$0xf]
        %v2293 = vld [vmem:[%s836] sm:$0x1]
        %v2295 = vperm.slane %v2293, 0
        %v2313 = vunpack.c.l.b16 %v2277
        %v2314 = vunpack.c.l.b16 %v2278
        %v2315 = vunpack.c.l.b16 %v2279
        %v2316 = vunpack.c.l.b16 %v2280
        %v2317 = vunpack.c.l.b16 %v2281
        %v2318 = vunpack.c.l.b16 %v2282
        %v2319 = vunpack.c.l.b16 %v2283
        %v2320 = vunpack.c.l.b16 %v2284
        %v2321 = vunpack.c.l.b16 %v2285
        %v2322 = vunpack.c.l.b16 %v2286
        %v2323 = vunpack.c.l.b16 %v2287
        %v2324 = vunpack.c.l.b16 %v2288
        %v2325 = vunpack.c.l.b16 %v2289
        %v2326 = vunpack.c.l.b16 %v2290
        %v2327 = vunpack.c.l.b16 %v2291
        %v2328 = vunpack.c.l.b16 %v2292
        %v2329 = vpack.c.b16 %v2314, %v2313
        %v2330 = vpack.c.b16 %v2316, %v2315
        %v2331 = vpack.c.b16 %v2318, %v2317
        %v2332 = vpack.c.b16 %v2320, %v2319
        %v2333 = vpack.c.b16 %v2322, %v2321
        %v2334 = vpack.c.b16 %v2324, %v2323
        %v2335 = vpack.c.b16 %v2326, %v2325
        %v2336 = vpack.c.b16 %v2328, %v2327
        %2345 = vmatpush.bf16.msra.mxu0 %v2336
        %2346 = vmatpush.bf16.msra.mxu0 %v2335
        %2347 = vmatpush.bf16.msra.mxu0 %v2334
        %2348 = vmatpush.bf16.msra.mxu0 %v2333
        %2349 = vmatpush.bf16.msra.mxu0 %v2332
        %2350 = vmatpush.bf16.msra.mxu0 %v2331
        %2351 = vmatpush.bf16.msra.mxu0 %v2330
        %2352 = vmatpush.bf16.msra.mxu0 %v2329
        %2353 = vmatmul.bf16.gmra.mxu0 %v2276
        %v2354 = vpop.f32.mrf.mxu0
        %v2355 = vadd.f32 %v2295, %v2354
        %v2356 = vpop.f32.mrf.mxu0
        %v2357 = vadd.f32 %v2295, %v2356
        %2358 = vdwg.mxu0
        %v2359 = vadd.f32 %v953, %v2355
        %v2360 = vadd.f32 %v954, %v2357
        %v2361 = vld [vmem:[%s839] sm:$0x1]
        %v2362 = vld [vmem:[%s842] sm:$0x1]
        %2363 = vadd.xlane.f32.xlu0 %v2359
        %v2364 = vpop.xlane.xlu0 %2363
        %2365 = vadd.xlane.f32.xlu0 %v2360
        %v2366 = vpop.xlane.xlu0 %2365
        %v2367 = vrcp.pop 128.0
        %v2368 = vmul.f32 128.0, %v2367
        %v2369 = vsub.f32 1.0, %v2368
        %v2370 = vmul.f32 %v2367, %v2369
        %v2371 = vadd.f32 %v2367, %v2370
        %vm2372 = vweird.f32 %v2367
        %v2373 = vsel %vm2372, %v2367, %v2371
        %v2374 = vmul.f32 %v2364, %v2373
        %v2375 = vmul.f32 %v2366, %v2373
        %v2376 = vsub.f32 %v2359, %v2374
        %v2377 = vsub.f32 %v2360, %v2375
        %v2378 = vmul.f32 %v2376, %v2376
        %v2379 = vmul.f32 %v2377, %v2377
        %2380 = vadd.xlane.f32.xlu0 %v2378
        %v2381 = vpop.xlane.xlu0 %2380
        %2382 = vadd.xlane.f32.xlu0 %v2379
        %v2383 = vpop.xlane.xlu0 %2382
        %v2384 = vmul.f32 %v2381, %v2373
        %v2385 = vmul.f32 %v2383, %v2373
        %v2386 = vadd.f32 %v2384, 1e-06
        %v2387 = vadd.f32 %v2385, 1e-06
        %v2388 = vrsqrt.pop %v2386
        %v2389 = vmul.f32 %v2388, %v2386
        %v2390 = vmul.f32 %v2389, %v2388
        %v2391 = vmul.f32 0.5, %v2390
        %v2392 = vsub.f32 1.5, %v2391
        %v2393 = vmul.f32 %v2388, %v2392
        %vm2394 = vweird.f32 %v2386
        %vm2395 = vweird.f32 %v2388
        %vm2396 = vmor %vm2394, %vm2395
        %v2397 = vsel %vm2396, %v2388, %v2393
        %v2398 = vrsqrt.pop %v2387
        %v2399 = vmul.f32 %v2398, %v2387
        %v2400 = vmul.f32 %v2399, %v2398
        %v2401 = vmul.f32 0.5, %v2400
        %v2402 = vsub.f32 1.5, %v2401
        %v2403 = vmul.f32 %v2398, %v2402
        %vm2404 = vweird.f32 %v2387
        %vm2405 = vweird.f32 %v2398
        %vm2406 = vmor %vm2404, %vm2405
        %v2407 = vsel %vm2406, %v2398, %v2403
        %v2408 = vmul.f32 %v2376, %v2397
        %v2409 = vmul.f32 %v2377, %v2407
        %v2411 = vperm.slane %v2361, 0
        %v2413 = vmul.f32 %v2408, %v2411
        %v2414 = vmul.f32 %v2409, %v2411
        %v2416 = vperm.slane %v2362, 0
        %v2418 = vadd.f32 %v2413, %v2416
        %v2419 = vadd.f32 %v2414, %v2416
        %v2420 = vpack.c.bf16 %v2419, %v2418
        %v2421 = vld [vmem:[%s717] sm:$0xff]
        %v2422 = vld [vmem:[%s717 + $0x8] sm:$0xff]
        %v2423 = vld [vmem:[%s717 + $0x10] sm:$0xff]
        %v2424 = vld [vmem:[%s717 + $0x18] sm:$0xff]
        %v2425 = vld [vmem:[%s717 + $0x20] sm:$0xff]
        %v2426 = vld [vmem:[%s717 + $0x28] sm:$0xff]
        %v2427 = vld [vmem:[%s717 + $0x30] sm:$0xff]
        %v2428 = vld [vmem:[%s717 + $0x38] sm:$0xff]
        %v2429 = vld [vmem:[%s717 + $0x40] sm:$0xff]
        %v2430 = vld [vmem:[%s717 + $0x48] sm:$0xff]
        %v2431 = vld [vmem:[%s717 + $0x50] sm:$0xff]
        %v2432 = vld [vmem:[%s717 + $0x58] sm:$0xff]
        %v2433 = vld [vmem:[%s717 + $0x60] sm:$0xff]
        %v2434 = vld [vmem:[%s717 + $0x68] sm:$0xff]
        %v2435 = vld [vmem:[%s717 + $0x70] sm:$0xff]
        %v2436 = vld [vmem:[%s717 + $0x78] sm:$0xff]
        %v2437 = vld [vmem:[%s852] sm:$0x3]
        %v2439 = vperm.slane %v2437, 0
        %v2440 = vperm.slane %v2437, 1
        %v2459 = vunpack.c.l.b16 %v2421
        %v2460 = vunpack.c.h.b16 %v2421
        %v2461 = vunpack.c.l.b16 %v2422
        %v2462 = vunpack.c.h.b16 %v2422
        %v2463 = vunpack.c.l.b16 %v2423
        %v2464 = vunpack.c.h.b16 %v2423
        %v2465 = vunpack.c.l.b16 %v2424
        %v2466 = vunpack.c.h.b16 %v2424
        %v2467 = vunpack.c.l.b16 %v2425
        %v2468 = vunpack.c.h.b16 %v2425
        %v2469 = vunpack.c.l.b16 %v2426
        %v2470 = vunpack.c.h.b16 %v2426
        %v2471 = vunpack.c.l.b16 %v2427
        %v2472 = vunpack.c.h.b16 %v2427
        %v2473 = vunpack.c.l.b16 %v2428
        %v2474 = vunpack.c.h.b16 %v2428
        %v2475 = vunpack.c.l.b16 %v2429
        %v2476 = vunpack.c.h.b16 %v2429
        %v2477 = vunpack.c.l.b16 %v2430
        %v2478 = vunpack.c.h.b16 %v2430
        %v2479 = vunpack.c.l.b16 %v2431
        %v2480 = vunpack.c.h.b16 %v2431
        %v2481 = vunpack.c.l.b16 %v2432
        %v2482 = vunpack.c.h.b16 %v2432
        %v2483 = vunpack.c.l.b16 %v2433
        %v2484 = vunpack.c.h.b16 %v2433
        %v2485 = vunpack.c.l.b16 %v2434
        %v2486 = vunpack.c.h.b16 %v2434
        %v2487 = vunpack.c.l.b16 %v2435
        %v2488 = vunpack.c.h.b16 %v2435
        %v2489 = vunpack.c.l.b16 %v2436
        %v2490 = vunpack.c.h.b16 %v2436
        %v2491 = vpack.c.b16 %v2461, %v2459
        %v2492 = vpack.c.b16 %v2462, %v2460
        %v2493 = vpack.c.b16 %v2465, %v2463
        %v2494 = vpack.c.b16 %v2466, %v2464
        %v2495 = vpack.c.b16 %v2469, %v2467
        %v2496 = vpack.c.b16 %v2470, %v2468
        %v2497 = vpack.c.b16 %v2473, %v2471
        %v2498 = vpack.c.b16 %v2474, %v2472
        %v2499 = vpack.c.b16 %v2477, %v2475
        %v2500 = vpack.c.b16 %v2478, %v2476
        %v2501 = vpack.c.b16 %v2481, %v2479
        %v2502 = vpack.c.b16 %v2482, %v2480
        %v2503 = vpack.c.b16 %v2485, %v2483
        %v2504 = vpack.c.b16 %v2486, %v2484
        %v2505 = vpack.c.b16 %v2489, %v2487
        %v2506 = vpack.c.b16 %v2490, %v2488
        %2523 = vmatpush.bf16.msra.mxu0 %v2505
        %2524 = vmatpush.bf16.msra.mxu0 %v2503
        %2525 = vmatpush.bf16.msra.mxu0 %v2501
        %2526 = vmatpush.bf16.msra.mxu0 %v2499
        %2527 = vmatpush.bf16.msra.mxu0 %v2497
        %2528 = vmatpush.bf16.msra.mxu0 %v2495
        %2529 = vmatpush.bf16.msra.mxu0 %v2493
        %2530 = vmatpush.bf16.msra.mxu0 %v2491
        %2531 = vmatmul.bf16.gmra.mxu0 %v2420
        %v2532 = vpop.f32.mrf.mxu0
        %v2533 = vadd.f32 %v2439, %v2532
        %v2534 = vpop.f32.mrf.mxu0
        %v2535 = vadd.f32 %v2439, %v2534
        %2536 = vdwg.mxu0
        %2537 = vmatpush.bf16.msra.mxu0 %v2506
        %2538 = vmatpush.bf16.msra.mxu0 %v2504
        %2539 = vmatpush.bf16.msra.mxu0 %v2502
        %2540 = vmatpush.bf16.msra.mxu0 %v2500
        %2541 = vmatpush.bf16.msra.mxu0 %v2498
        %2542 = vmatpush.bf16.msra.mxu0 %v2496
        %2543 = vmatpush.bf16.msra.mxu0 %v2494
        %2544 = vmatpush.bf16.msra.mxu0 %v2492
        %2545 = vmatmul.bf16.gmra.mxu0 %v2420
        %v2546 = vpop.f32.mrf.mxu0
        %v2547 = vadd.f32 %v2440, %v2546
        %v2548 = vpop.f32.mrf.mxu0
        %v2549 = vadd.f32 %v2440, %v2548
        %2550 = vdwg.mxu0
        %v2551 = vmax.f32 %v2533, 0.0
        %v2552 = vmax.f32 %v2547, 0.0
        %v2553 = vmax.f32 %v2535, 0.0
        %v2554 = vmax.f32 %v2549, 0.0
        %v2555 = vpack.c.bf16 %v2553, %v2551
        %v2556 = vpack.c.bf16 %v2554, %v2552
        %v2557 = vld [vmem:[%s727] sm:$0xf]
        %v2558 = vld [vmem:[%s727 + $0x4] sm:$0xf]
        %v2559 = vld [vmem:[%s727 + $0x8] sm:$0xf]
        %v2560 = vld [vmem:[%s727 + $0xc] sm:$0xf]
        %v2561 = vld [vmem:[%s727 + $0x10] sm:$0xf]
        %v2562 = vld [vmem:[%s727 + $0x14] sm:$0xf]
        %v2563 = vld [vmem:[%s727 + $0x18] sm:$0xf]
        %v2564 = vld [vmem:[%s727 + $0x1c] sm:$0xf]
        %v2565 = vld [vmem:[%s727 + $0x20] sm:$0xf]
        %v2566 = vld [vmem:[%s727 + $0x24] sm:$0xf]
        %v2567 = vld [vmem:[%s727 + $0x28] sm:$0xf]
        %v2568 = vld [vmem:[%s727 + $0x2c] sm:$0xf]
        %v2569 = vld [vmem:[%s727 + $0x30] sm:$0xf]
        %v2570 = vld [vmem:[%s727 + $0x34] sm:$0xf]
        %v2571 = vld [vmem:[%s727 + $0x38] sm:$0xf]
        %v2572 = vld [vmem:[%s727 + $0x3c] sm:$0xf]
        %v2573 = vld [vmem:[%s727 + $0x40] sm:$0xf]
        %v2574 = vld [vmem:[%s727 + $0x44] sm:$0xf]
        %v2575 = vld [vmem:[%s727 + $0x48] sm:$0xf]
        %v2576 = vld [vmem:[%s727 + $0x4c] sm:$0xf]
        %v2577 = vld [vmem:[%s727 + $0x50] sm:$0xf]
        %v2578 = vld [vmem:[%s727 + $0x54] sm:$0xf]
        %v2579 = vld [vmem:[%s727 + $0x58] sm:$0xf]
        %v2580 = vld [vmem:[%s727 + $0x5c] sm:$0xf]
        %v2581 = vld [vmem:[%s727 + $0x60] sm:$0xf]
        %v2582 = vld [vmem:[%s727 + $0x64] sm:$0xf]
        %v2583 = vld [vmem:[%s727 + $0x68] sm:$0xf]
        %v2584 = vld [vmem:[%s727 + $0x6c] sm:$0xf]
        %v2585 = vld [vmem:[%s727 + $0x70] sm:$0xf]
        %v2586 = vld [vmem:[%s727 + $0x74] sm:$0xf]
        %v2587 = vld [vmem:[%s727 + $0x78] sm:$0xf]
        %v2588 = vld [vmem:[%s727 + $0x7c] sm:$0xf]
        %v2589 = vld [vmem:[%s855] sm:$0x1]
        %v2591 = vperm.slane %v2589, 0
        %v2625 = vunpack.c.l.b16 %v2557
        %v2626 = vunpack.c.l.b16 %v2558
        %v2627 = vunpack.c.l.b16 %v2559
        %v2628 = vunpack.c.l.b16 %v2560
        %v2629 = vunpack.c.l.b16 %v2561
        %v2630 = vunpack.c.l.b16 %v2562
        %v2631 = vunpack.c.l.b16 %v2563
        %v2632 = vunpack.c.l.b16 %v2564
        %v2633 = vunpack.c.l.b16 %v2565
        %v2634 = vunpack.c.l.b16 %v2566
        %v2635 = vunpack.c.l.b16 %v2567
        %v2636 = vunpack.c.l.b16 %v2568
        %v2637 = vunpack.c.l.b16 %v2569
        %v2638 = vunpack.c.l.b16 %v2570
        %v2639 = vunpack.c.l.b16 %v2571
        %v2640 = vunpack.c.l.b16 %v2572
        %v2641 = vunpack.c.l.b16 %v2573
        %v2642 = vunpack.c.l.b16 %v2574
        %v2643 = vunpack.c.l.b16 %v2575
        %v2644 = vunpack.c.l.b16 %v2576
        %v2645 = vunpack.c.l.b16 %v2577
        %v2646 = vunpack.c.l.b16 %v2578
        %v2647 = vunpack.c.l.b16 %v2579
        %v2648 = vunpack.c.l.b16 %v2580
        %v2649 = vunpack.c.l.b16 %v2581
        %v2650 = vunpack.c.l.b16 %v2582
        %v2651 = vunpack.c.l.b16 %v2583
        %v2652 = vunpack.c.l.b16 %v2584
        %v2653 = vunpack.c.l.b16 %v2585
        %v2654 = vunpack.c.l.b16 %v2586
        %v2655 = vunpack.c.l.b16 %v2587
        %v2656 = vunpack.c.l.b16 %v2588
        %v2657 = vpack.c.b16 %v2626, %v2625
        %v2658 = vpack.c.b16 %v2628, %v2627
        %v2659 = vpack.c.b16 %v2630, %v2629
        %v2660 = vpack.c.b16 %v2632, %v2631
        %v2661 = vpack.c.b16 %v2634, %v2633
        %v2662 = vpack.c.b16 %v2636, %v2635
        %v2663 = vpack.c.b16 %v2638, %v2637
        %v2664 = vpack.c.b16 %v2640, %v2639
        %v2665 = vpack.c.b16 %v2642, %v2641
        %v2666 = vpack.c.b16 %v2644, %v2643
        %v2667 = vpack.c.b16 %v2646, %v2645
        %v2668 = vpack.c.b16 %v2648, %v2647
        %v2669 = vpack.c.b16 %v2650, %v2649
        %v2670 = vpack.c.b16 %v2652, %v2651
        %v2671 = vpack.c.b16 %v2654, %v2653
        %v2672 = vpack.c.b16 %v2656, %v2655
        %2689 = vmatpush.bf16.msra.mxu0 %v2664
        %2690 = vmatpush.bf16.msra.mxu0 %v2663
        %2691 = vmatpush.bf16.msra.mxu0 %v2662
        %2692 = vmatpush.bf16.msra.mxu0 %v2661
        %2693 = vmatpush.bf16.msra.mxu0 %v2660
        %2694 = vmatpush.bf16.msra.mxu0 %v2659
        %2695 = vmatpush.bf16.msra.mxu0 %v2658
        %2696 = vmatpush.bf16.msra.mxu0 %v2657
        %2697 = vmatmul.bf16.gmra.mxu0 %v2555
        %v2698 = vpop.f32.mrf.mxu0
        %v2699 = vadd.f32 %v2591, %v2698
        %v2700 = vpop.f32.mrf.mxu0
        %v2701 = vadd.f32 %v2591, %v2700
        %2702 = vdwg.mxu0
        %2703 = vmatpush.bf16.msra.mxu0 %v2672
        %2704 = vmatpush.bf16.msra.mxu0 %v2671
        %2705 = vmatpush.bf16.msra.mxu0 %v2670
        %2706 = vmatpush.bf16.msra.mxu0 %v2669
        %2707 = vmatpush.bf16.msra.mxu0 %v2668
        %2708 = vmatpush.bf16.msra.mxu0 %v2667
        %2709 = vmatpush.bf16.msra.mxu0 %v2666
        %2710 = vmatpush.bf16.msra.mxu0 %v2665
        %2711 = vmatmul.bf16.gmra.mxu0 %v2556
        %v2712 = vpop.f32.mrf.mxu0
        %v2713 = vadd.f32 %v2699, %v2712
        %v2714 = vpop.f32.mrf.mxu0
        %v2715 = vadd.f32 %v2701, %v2714
        %2716 = vdwg.mxu0
        %v2717 = vadd.f32 %v2418, %v2713
        %v2718 = vadd.f32 %v2419, %v2715
        %v2719 = vld [vmem:[%s845] sm:$0x1]
        %v2720 = vld [vmem:[%s848] sm:$0x1]
        %2721 = vadd.xlane.f32.xlu0 %v2717
        %v2722 = vpop.xlane.xlu0 %2721
        %2723 = vadd.xlane.f32.xlu0 %v2718
        %v2724 = vpop.xlane.xlu0 %2723
        %v2725 = vmul.f32 %v2722, %v2373
        %v2726 = vmul.f32 %v2724, %v2373
        %v2727 = vsub.f32 %v2717, %v2725
        %v2728 = vsub.f32 %v2718, %v2726
        %v2729 = vmul.f32 %v2727, %v2727
        %v2730 = vmul.f32 %v2728, %v2728
        %2731 = vadd.xlane.f32.xlu0 %v2729
        %v2732 = vpop.xlane.xlu0 %2731
        %2733 = vadd.xlane.f32.xlu0 %v2730
        %v2734 = vpop.xlane.xlu0 %2733
        %v2735 = vmul.f32 %v2732, %v2373
        %v2736 = vmul.f32 %v2734, %v2373
        %v2737 = vadd.f32 %v2735, 1e-06
        %v2738 = vadd.f32 %v2736, 1e-06
        %v2739 = vrsqrt.pop %v2737
        %v2740 = vmul.f32 %v2739, %v2737
        %v2741 = vmul.f32 %v2740, %v2739
        %v2742 = vmul.f32 0.5, %v2741
        %v2743 = vsub.f32 1.5, %v2742
        %v2744 = vmul.f32 %v2739, %v2743
        %vm2745 = vweird.f32 %v2737
        %vm2746 = vweird.f32 %v2739
        %vm2747 = vmor %vm2745, %vm2746
        %v2748 = vsel %vm2747, %v2739, %v2744
        %v2749 = vrsqrt.pop %v2738
        %v2750 = vmul.f32 %v2749, %v2738
        %v2751 = vmul.f32 %v2750, %v2749
        %v2752 = vmul.f32 0.5, %v2751
        %v2753 = vsub.f32 1.5, %v2752
        %v2754 = vmul.f32 %v2749, %v2753
        %vm2755 = vweird.f32 %v2738
        %vm2756 = vweird.f32 %v2749
        %vm2757 = vmor %vm2755, %vm2756
        %v2758 = vsel %vm2757, %v2749, %v2754
        %v2759 = vmul.f32 %v2727, %v2748
        %v2760 = vmul.f32 %v2728, %v2758
        %v2762 = vperm.slane %v2719, 0
        %v2764 = vmul.f32 %v2759, %v2762
        %v2765 = vmul.f32 %v2760, %v2762
        %v2767 = vperm.slane %v2720, 0
        %v2769 = vadd.f32 %v2764, %v2767
        %v2770 = vadd.f32 %v2765, %v2767
        %2771 = vst [vmem:[#allocation2] sm:$0xff] %v2769
        %2772 = vst [vmem:[#allocation2 + $0x8] sm:$0xff] %v2770
        %p2773 = scmp.eq.s32.totalorder %s42, 1
        // Predicated region
        $region113: #{tpu_custom_call.1} parent=87 // pred_check
          %p2774 = pneg %p2773
        $region114: #{tpu_custom_call.1} parent=87 // pred_check_branch
          %2776 = sbr.rel (%p2774) target = $region116
        $region115: #{tpu_custom_call.1} parent=87 // pred_region
          %v2777 = vld [vmem:[%s15] sm:$0x1]
          %v2779 = vperm.slane %v2777, 0
          %v2781 = vmul.f32 %v2769, %v2779
          %v2782 = vmul.f32 %v2770, %v2779
          %v2785 = vrot.slane %v2782, 7
          %vm2788 = vcmask 1047559
          %v2789 = vsel %vm2788, %v2781, 0.0
          %2790 = vadd.xlane.f32.xlu0 %v2789
          %v2791 = vpop.xlane.xlu0 %2790
          %vm2792 = vcmask 1040384
          %v2793 = vsel %vm2792, %v2785, 0.0
          %2794 = vadd.xlane.f32.xlu0 %v2793
          %v2795 = vpop.xlane.xlu0 %2794
          %v2796 = vld [vmem:[#allocation3] sm:$0x1]
          %v2798 = vperm.slane %v2796, 0
          %v2800 = vadd.f32 %v2791, %v2798
          %v2801 = vadd.f32 %v2795, %v2798
          %vm2802 = vcmask 7175
          %2803 = vst.msk [vmem:[%s859 - $0x7] sm:$0x80] %vm2802, %v2800
          %vm2804 = vcmask 0
          %2805 = vst.msk [vmem:[%s859 + $0x1] sm:$0x1] %vm2804, %v2801
        $region116: #{tpu_custom_call.1} parent=87 // pred_fallthru
          _
        %p2806 = scmp.lt.s32.totalorder %s41, 0
        %s2807 = scalar_select %p2806, %s41, 0
        %s2808 = smul.addr %s2807, 2
        %s2809 = scalar_lea.vmem %s17, %s2808
        // Predicated region
        $region117: #{tpu_custom_call.1} parent=87 // pred_check
          %p2810 = pneg %p489
        $region118: #{tpu_custom_call.1} parent=87 // pred_check_branch
          %2812 = sbr.rel (%p2810) target = $region120
        $region119: #{tpu_custom_call.1} parent=87 // pred_region
          _
        $region120: #{tpu_custom_call.1} parent=87 // pred_fallthru
          _
        // Predicated region
        $region121: #{tpu_custom_call.1} parent=87 // pred_check
          %p2813 = pneg %p489
        $region122: #{tpu_custom_call.1} parent=87 // pred_check_branch
          %2815 = sbr.rel (%p2813) target = $region124
        $region123: #{tpu_custom_call.1} parent=87 // pred_region
          %p2816 = scmp.lt.s32.totalorder %s41, 0
          %s2817 = scalar_select %p2816, %s41, 0
          %s2818 = smul.addr %s2817, 2
          %s2819 = scalar_lea.vmem %s17, %s2818
        $region124: #{tpu_custom_call.1} parent=87 // pred_fallthru
          _
      $region88: #{tpu_custom_call.1} parent=5 // pred_fallthru
        _
      %p2820 = scmp.le.s32.totalorder 2, %s32
      // Predicated region
      $region125: #{tpu_custom_call.1} parent=5 // pred_check
        %p2821 = pneg %p2820
      $region126: #{tpu_custom_call.1} parent=5 // pred_check_branch
        %2823 = sbr.rel (%p2821) target = $region128
      $region127: #{tpu_custom_call.1} parent=5 // pred_region
        %s2824 = ssub.s32 %s32, 2
      $region128: #{tpu_custom_call.1} parent=5 // pred_fallthru
        _
    $region6: #{tpu_custom_call.1} parent=1 // loop_footer
      %s36 = sadd.s32 1, %s32
    $region7: #{tpu_custom_call.1} parent=1 // loop_footer_branch
      %31 = sbr.rel target = $region3
    $region8: #{tpu_custom_call.1} parent=1 // loop_exit
      _
    %2825 = vsyncpa [#allocation5], 1
    %s2826 = scalar_lea.sflag [#allocation5], 1
    %2827 = vsyncpa %s2826, 1
    %2828 = vsyncpa [#allocation7], 1
    %s2829 = scalar_lea.sflag [#allocation7], 1
    %2830 = vsyncpa %s2829, 1
    %2831 = vsyncpa [#allocation10], 1
    %s2832 = scalar_lea.sflag [#allocation10], 1
    %2833 = vsyncpa %s2832, 1

</llo_original>
